<compile_context>
chip_gen: v7x
topology: tpu7x:2x2x1
jax: 0.10.0
libtpu: 0.0.40
codegen_flags: <defaults>
</compile_context>

<pallas_src>
import functools

import jax
import jax.numpy as jnp
from jax.experimental import pallas as pl
from jax.experimental.pallas import tpu as pltpu


def _round_up(x, m):
    return ((x + m - 1) // m) * m


def _vmem_limit_bytes():
    cap = 128 * 1024 * 1024
    try:
        cap = int(getattr(pltpu.get_tpu_info(), "vmem_capacity_bytes", cap))
    except Exception:
        pass
    if cap <= 64 * 1024 * 1024:          # v7x-class: leave headroom under 64 MiB
        return 48 * 1024 * 1024
    return 100 * 1024 * 1024             # v5e/v6e: 128 MiB physical


def _block_kernel(*refs, H, W, HO, WO, CINP, C1P, C2P, S, has_downsample):
    """One batch element per grid step. All channel dims are 128-multiples.

    Inputs:
      x_ref  : (H, W, CINP)   f32  NHWC input tile, channels zero-padded to CINP
      w1_ref : (9*CINP, C1P)  bf16 conv1 weights, BN1 scale folded, taps flattened
      b1_ref : (1, C1P)       f32  folded BN1 bias
      w2_ref : (9*C1P, C2P)   bf16 conv2 weights, BN2 scale folded
      b2_ref : (1, C2P)       f32  folded BN2 bias
      wd_ref : (CINP, C2P)    bf16 1x1 downsample weights, BN folded   [optional]
      bd_ref : (1, C2P)       f32  folded downsample-BN bias           [optional]
    Output:
      o_ref  : (HO*WO, C2P)   f32  lane-dense 2-D slab
    Scratch (bf16):
      S==1: xpad (H+2, W+2, CINP), h1pad (HO+2, WO+2, C1P)
      S==2: xe (H+2, WO+1, CINP), xo (H+2, WO, CINP), h1pad (HO+2, WO+2, C1P)
    """
    f32 = jnp.float32
    bf16 = jnp.bfloat16

    n_in = 7 if has_downsample else 5
    if has_downsample:
        x_ref, w1_ref, b1_ref, w2_ref, b2_ref, wd_ref, bd_ref = refs[:n_in]
    else:
        x_ref, w1_ref, b1_ref, w2_ref, b2_ref = refs[:n_in]
        wd_ref = bd_ref = None
    o_ref = refs[n_in]
    scratch = refs[n_in + 1:]

    # ---------------- stage conv1 im2col source in bf16 VMEM scratch ----------------
    if S == 1:
        xpad_ref, h1pad_ref = scratch
        # zero-halo'd input; interior copy is also the f32 -> bf16 cast.
        xpad_ref[0:1, :, :] = jnp.zeros((1, W + 2, CINP), bf16)
        xpad_ref[H + 1:H + 2, :, :] = jnp.zeros((1, W + 2, CINP), bf16)
        xpad_ref[1:H + 1, 0:1, :] = jnp.zeros((H, 1, CINP), bf16)
        xpad_ref[1:H + 1, W + 1:W + 2, :] = jnp.zeros((H, 1, CINP), bf16)
        xpad_ref[1:H + 1, 1:W + 1, :] = x_ref[...].astype(bf16)

        def tap1(dy, dx):
            return xpad_ref[dy:dy + HO, dx:dx + WO, :]            # (HO, WO, CINP) bf16
    else:
        # Column-phase split of the padded input (xe[r,j]=xpad[r,2j], xo[r,j]=xpad[r,2j+1])
        # so taps / identity are unit-stride along the sublane (W) axis; only these two
        # fills use a strided (f32) read.
        xe_ref, xo_ref, h1pad_ref = scratch
        xe_ref[0:1, :, :] = jnp.zeros((1, WO + 1, CINP), bf16)
        xe_ref[H + 1:H + 2, :, :] = jnp.zeros((1, WO + 1, CINP), bf16)
        xe_ref[1:H + 1, 0:1, :] = jnp.zeros((H, 1, CINP), bf16)    # left zero halo
        xe_ref[1:H + 1, 1:WO + 1, :] = x_ref[:, pl.ds(1, WO, stride=2), :].astype(bf16)
        xo_ref[0:1, :, :] = jnp.zeros((1, WO, CINP), bf16)
        xo_ref[H + 1:H + 2, :, :] = jnp.zeros((1, WO, CINP), bf16)
        xo_ref[1:H + 1, :, :] = x_ref[:, pl.ds(0, WO, stride=2), :].astype(bf16)

        def _rows_every_other(buf_ref, r0, c0):
            # rows r0, r0+2, ..., r0+2*(HO-1); unit-stride reads, leading-axis select.
            v = buf_ref[r0:r0 + 2 * HO, c0:c0 + WO, :]            # (2*HO, WO, CINP)
            return v.reshape(HO, 2, WO, CINP)[:, 0]

        def tap1(dy, dx):
            buf = xe_ref if dx % 2 == 0 else xo_ref
            return _rows_every_other(buf, dy, dx // 2)

    # ---- conv1: 3x3 stride S as a single im2col matmul, K = 9*CINP (bf16 slab) ----
    p1 = jnp.concatenate([tap1(dy, dx) for dy in range(3) for dx in range(3)],
                         axis=-1).reshape(HO * WO, 9 * CINP)
    h1 = jnp.maximum(
        jnp.dot(p1, w1_ref[...], preferred_element_type=f32) + b1_ref[...], 0.0)

    # ---- stage zero-padded h1 (bf16) for conv2 ----
    h1pad_ref[0:1, :, :] = jnp.zeros((1, WO + 2, C1P), bf16)
    h1pad_ref[HO + 1:HO + 2, :, :] = jnp.zeros((1, WO + 2, C1P), bf16)
    h1pad_ref[1:HO + 1, 0:1, :] = jnp.zeros((HO, 1, C1P), bf16)
    h1pad_ref[1:HO + 1, WO + 1:WO + 2, :] = jnp.zeros((HO, 1, C1P), bf16)
    h1pad_ref[1:HO + 1, 1:WO + 1, :] = h1.astype(bf16).reshape(HO, WO, C1P)

    # ---- conv2: 3x3 stride 1 as a single im2col matmul, K = 9*C1P ----
    p2 = jnp.concatenate(
        [h1pad_ref[dy:dy + HO, dx:dx + WO, :] for dy in range(3) for dx in range(3)],
        axis=-1).reshape(HO * WO, 9 * C1P)
    h2 = jnp.dot(p2, w2_ref[...], preferred_element_type=f32) + b2_ref[...]

    # ---- shortcut: exact f32 identity, or 1x1-conv(stride S) + folded BN ----
    if not has_downsample:
        # CINP == C2P here; padded lanes of both h2 and idn are exactly zero.
        idn = x_ref[...].reshape(HO * WO, C2P)                    # f32, exact residual
    else:
        if S == 1:
            idn_src = x_ref[...].astype(bf16)                     # (H, W, CINP)
        else:
            idn_src = _rows_every_other(xo_ref, 1, 0)             # x[2i, 2j], bf16
        idn = jnp.dot(idn_src.reshape(HO * WO, CINP), wd_ref[...],
                      preferred_element_type=f32) + bd_ref[...]

    # residual add + ReLU; (HO*WO, C2P) is a lane-dense, unmasked store
    o_ref[...] = jnp.maximum(h2 + idn, 0.0)


def block_forward(x_nchw, params, *, stride):
    """PyTorch-equivalent Block.forward (inference-mode BN). Input/output NCHW."""
    x = jnp.transpose(x_nchw, (0, 2, 3, 1)).astype(jnp.float32)   # NCHW -> NHWC
    N, H, W, CIN = x.shape
    C1 = params['w1'].shape[-1]
    C2 = params['w2'].shape[-1]
    S = stride
    assert S in (1, 2), "only stride 1 or 2 supported (as in ResNet blocks)"
    if S == 2:
        assert H % 2 == 0 and W % 2 == 0, "stride-2 path assumes even spatial dims"
    HO = (H - 1) // S + 1                                         # pad=1, k=3
    WO = (W - 1) // S + 1
    CINP = _round_up(CIN, 128)                                    # lane-dense channels
    C1P = _round_up(C1, 128)
    C2P = _round_up(C2, 128)
    has_downsample = (S != 1) or (CIN != C2)

    # lane-align input channels
    if CINP > CIN:
        x = jnp.pad(x, ((0, 0), (0, 0), (0, 0), (0, CINP - CIN)))

    # ---- fold BN scales into conv weights, pad channels, flatten 3x3 taps ----
    w1f = params['w1'] * params['s1'].reshape(1, 1, 1, C1)        # (3,3,CIN,C1)
    w1f = jnp.pad(w1f, ((0, 0), (0, 0), (0, CINP - CIN), (0, C1P - C1)))
    w1f = w1f.reshape(9 * CINP, C1P).astype(jnp.bfloat16)
    b1f = jnp.pad(params['b1'], ((0, 0), (0, C1P - C1)))

    w2f = params['w2'] * params['s2'].reshape(1, 1, 1, C2)        # (3,3,C1,C2)
    w2f = jnp.pad(w2f, ((0, 0), (0, 0), (0, C1P - C1), (0, C2P - C2)))
    w2f = w2f.reshape(9 * C1P, C2P).astype(jnp.bfloat16)
    b2f = jnp.pad(params['b2'], ((0, 0), (0, C2P - C2)))

    in_specs = [
        pl.BlockSpec((None, H, W, CINP), lambda n: (n, 0, 0, 0)),
        pl.BlockSpec((9 * CINP, C1P), lambda n: (0, 0)),
        pl.BlockSpec((1, C1P), lambda n: (0, 0)),
        pl.BlockSpec((9 * C1P, C2P), lambda n: (0, 0)),
        pl.BlockSpec((1, C2P), lambda n: (0, 0)),
    ]
    args = [x, w1f, b1f, w2f, b2f]
    if has_downsample:
        wdf = jnp.pad(params['wd'] * params['sd'],
                      ((0, CINP - CIN), (0, C2P - C2))).astype(jnp.bfloat16)
        bdf = jnp.pad(params['bd'], ((0, 0), (0, C2P - C2)))
        in_specs += [pl.BlockSpec((CINP, C2P), lambda n: (0, 0)),
                     pl.BlockSpec((1, C2P), lambda n: (0, 0))]
        args += [wdf, bdf]

    if S == 1:
        scratch_shapes = [pltpu.VMEM((H + 2, W + 2, CINP), jnp.bfloat16),
                          pltpu.VMEM((HO + 2, WO + 2, C1P), jnp.bfloat16)]
    else:
        scratch_shapes = [pltpu.VMEM((H + 2, WO + 1, CINP), jnp.bfloat16),
                          pltpu.VMEM((H + 2, WO, CINP), jnp.bfloat16),
                          pltpu.VMEM((HO + 2, WO + 2, C1P), jnp.bfloat16)]

    kernel = functools.partial(
        _block_kernel, H=H, W=W, HO=HO, WO=WO, CINP=CINP,
        C1P=C1P, C2P=C2P, S=S, has_downsample=has_downsample)

    grid_spec = pltpu.PrefetchScalarGridSpec(
        num_scalar_prefetch=0,
        grid=(N,),
        in_specs=in_specs,
        out_specs=pl.BlockSpec((None, HO * WO, C2P), lambda n: (n, 0, 0)),
        scratch_shapes=scratch_shapes,
    )
    out = pl.pallas_call(
        kernel,
        out_shape=jax.ShapeDtypeStruct((N, HO * WO, C2P), jnp.float32),
        grid_spec=grid_spec,
        compiler_params=pltpu.CompilerParams(
            dimension_semantics=("parallel",),
            vmem_limit_bytes=_vmem_limit_bytes()),
    )(*args)

    out = out.reshape(N, HO, WO, C2P)[:, :, :, :C2]               # drop lane padding
    return jnp.transpose(out, (0, 3, 1, 2))                       # NHWC -> NCHW


# ----------------------- deterministic parameter construction -----------------------

def _fold_bn(gamma, beta, mean, var, eps=1e-5):
    scale = gamma / jnp.sqrt(var + eps)
    return scale.reshape(1, -1), (beta - mean * scale).reshape(1, -1)


def init_block_params(key, in_channels, out_channels, stride, expansion):
    c1 = out_channels
    c2 = out_channels * expansion
    ks = jax.random.split(key, 6)

    def conv_w(k, shape):
        return 0.1 * jax.random.normal(k, shape, jnp.float32)

    def bn(k, c):
        k1, k2, k3, k4 = jax.random.split(k, 4)
        gamma = jax.random.uniform(k1, (c,), jnp.float32, 0.8, 1.2)
        beta = 0.1 * jax.random.normal(k2, (c,), jnp.float32)
        mean = 0.1 * jax.random.normal(k3, (c,), jnp.float32)
        var = jax.random.uniform(k4, (c,), jnp.float32, 0.5, 1.5)
        return _fold_bn(gamma, beta, mean, var)

    w1 = conv_w(ks[0], (3, 3, in_channels, c1))          # HWIO
    s1, b1 = bn(ks[1], c1)
    w2 = conv_w(ks[2], (3, 3, c1, c2))                   # HWIO
    s2, b2 = bn(ks[3], c2)
    if stride != 1 or in_channels != c2:                 # downsample = 1x1 conv(stride) + BN
        wd = conv_w(ks[4], (in_channels, c2))
        sd, bd = bn(ks[5], c2)
    else:                                                # plain identity shortcut
        wd = jnp.eye(in_channels, dtype=jnp.float32)     # used only by the reference
        sd = jnp.ones((1, c2), jnp.float32)
        bd = jnp.zeros((1, c2), jnp.float32)
    return dict(w1=w1, s1=s1, b1=b1, w2=w2, s2=s2, b2=b2, wd=wd, sd=sd, bd=bd)


# ----------------------------- pure-JAX reference (for check) -----------------------------

def ref_forward(x_nchw, p, *, stride):
    x = jnp.transpose(x_nchw, (0, 2, 3, 1)).astype(jnp.float32)
    dn = ('NHWC', 'HWIO', 'NHWC')
    y = jax.lax.conv_general_dilated(x, p['w1'], (stride, stride), ((1, 1), (1, 1)),
                                     dimension_numbers=dn)
    y = jnp.maximum(y * p['s1'] + p['b1'], 0.0)
    y = jax.lax.conv_general_dilated(y, p['w2'], (1, 1), ((1, 1), (1, 1)),
                                     dimension_numbers=dn)
    y = y * p['s2'] + p['b2']
    ident = jax.lax.conv_general_dilated(x, p['wd'][None, None], (stride, stride), 'VALID',
                                         dimension_numbers=dn)
    ident = ident * p['sd'] + p['bd']
    return jnp.transpose(jnp.maximum(y + ident, 0.0), (0, 3, 1, 2))


if __name__ == "__main__":
    key = jax.random.PRNGKey(0)
    kx1, kp1, kx2, kp2 = jax.random.split(key, 4)

    # --- case 1: downsample path (stride 2, channel change) ---
    in_c, out_c, stride, expansion = 4, 8, 2, 1
    x1 = jax.random.normal(kx1, (2, in_c, 16, 16), jnp.float32)        # NCHW, like PyTorch
    p1 = init_block_params(kp1, in_c, out_c, stride, expansion)
    out1 = jax.block_until_ready(block_forward(x1, p1, stride=stride))
    assert out1.shape == (2, out_c * expansion, 8, 8), out1.shape
    ref1 = jax.block_until_ready(ref_forward(x1, p1, stride=stride))
    err1 = float(jnp.max(jnp.abs(out1 - ref1)))
    if err1 > 5e-2:
        raise AssertionError(f"downsample case mismatch vs reference, max abs err = {err1}")

    # --- case 2: identity shortcut (stride 1, same channels) ---
    in_c, out_c, stride, expansion = 8, 8, 1, 1
    x2 = jax.random.normal(kx2, (2, in_c, 16, 16), jnp.float32)
    p2 = init_block_params(kp2, in_c, out_c, stride, expansion)
    out2 = jax.block_until_ready(block_forward(x2, p2, stride=stride))
    assert out2.shape == (2, out_c * expansion, 16, 16), out2.shape
    ref2 = jax.block_until_ready(ref_forward(x2, p2, stride=stride))
    err2 = float(jnp.max(jnp.abs(out2 - ref2)))
    if err2 > 5e-2:
        raise AssertionError(f"identity case mismatch vs reference, max abs err = {err2}")

    print("KERNEL_OK")
</pallas_src>

<mosaic_0001>
module attributes {stable_mosaic.version = 11 : i64} {
  func.func @_block_kernel(%arg0: i32, %arg1: memref<1x16x16x128xf32, #tpu.memory_space<vmem>>, %arg2: memref<1152x128xbf16, #tpu.memory_space<vmem>>, %arg3: memref<1x128xf32, #tpu.memory_space<vmem>>, %arg4: memref<1152x128xbf16, #tpu.memory_space<vmem>>, %arg5: memref<1x128xf32, #tpu.memory_space<vmem>>, %arg6: memref<128x128xbf16, #tpu.memory_space<vmem>>, %arg7: memref<1x128xf32, #tpu.memory_space<vmem>>, %arg8: memref<1x64x128xf32, #tpu.memory_space<vmem>>, %arg9: memref<18x9x128xbf16, #tpu.memory_space<vmem>>, %arg10: memref<18x8x128xbf16, #tpu.memory_space<vmem>>, %arg11: memref<10x10x128xbf16, #tpu.memory_space<vmem>>) attributes {dimension_semantics = [#tpu.dimension_semantics<parallel>], iteration_bounds = array<i64: 2>, scalar_prefetch = 0 : i64, scratch_operands = 3 : i64, tpu.core_type = #tpu.core_type<tc>, window_params = [{transform_indices = @transform_0, window_bounds = array<i64: 1, 16, 16, 128>}, {pipeline_mode = #tpu.pipeline_mode<synchronous>, transform_indices = @transform_1, window_bounds = array<i64: 1152, 128>}, {pipeline_mode = #tpu.pipeline_mode<synchronous>, transform_indices = @transform_2, window_bounds = array<i64: 1, 128>}, {pipeline_mode = #tpu.pipeline_mode<synchronous>, transform_indices = @transform_3, window_bounds = array<i64: 1152, 128>}, {pipeline_mode = #tpu.pipeline_mode<synchronous>, transform_indices = @transform_4, window_bounds = array<i64: 1, 128>}, {pipeline_mode = #tpu.pipeline_mode<synchronous>, transform_indices = @transform_5, window_bounds = array<i64: 128, 128>}, {pipeline_mode = #tpu.pipeline_mode<synchronous>, transform_indices = @transform_6, window_bounds = array<i64: 1, 128>}, {transform_indices = @transform_7, window_bounds = array<i64: 1, 64, 128>}]} {
    %cst = arith.constant 0.000000e+00 : bf16
    %0 = vector.broadcast %cst : bf16 to vector<1x9x128xbf16>
    %c0 = arith.constant 0 : index
    %c0_0 = arith.constant 0 : index
    %c0_1 = arith.constant 0 : index
    %1 = vector.load %arg9[%c0, %c0_0, %c0_1] : memref<18x9x128xbf16, #tpu.memory_space<vmem>>, vector<1x9x128xbf16>
    tpu.vector_store %arg9[%c0, %c0_0, %c0_1], %0 {strides = array<i32>} : memref<18x9x128xbf16, #tpu.memory_space<vmem>>, vector<1x9x128xbf16>,
    %cst_2 = arith.constant 0.000000e+00 : bf16
    %2 = vector.broadcast %cst_2 : bf16 to vector<1x9x128xbf16>
    %c17 = arith.constant 17 : index
    %c0_3 = arith.constant 0 : index
    %c0_4 = arith.constant 0 : index
    %3 = vector.load %arg9[%c17, %c0_3, %c0_4] : memref<18x9x128xbf16, #tpu.memory_space<vmem>>, vector<1x9x128xbf16>
    tpu.vector_store %arg9[%c17, %c0_3, %c0_4], %2 {strides = array<i32>} : memref<18x9x128xbf16, #tpu.memory_space<vmem>>, vector<1x9x128xbf16>,
    %cst_5 = arith.constant 0.000000e+00 : bf16
    %4 = vector.broadcast %cst_5 : bf16 to vector<16x1x128xbf16>
    %c1 = arith.constant 1 : index
    %c0_6 = arith.constant 0 : index
    %c0_7 = arith.constant 0 : index
    %5 = vector.load %arg9[%c1, %c0_6, %c0_7] : memref<18x9x128xbf16, #tpu.memory_space<vmem>>, vector<16x1x128xbf16>
    tpu.vector_store %arg9[%c1, %c0_6, %c0_7], %4 {strides = array<i32>} : memref<18x9x128xbf16, #tpu.memory_space<vmem>>, vector<16x1x128xbf16>,
    %c0_8 = arith.constant 0 : index
    %c0_9 = arith.constant 0 : index
    %c1_10 = arith.constant 1 : index
    %c0_11 = arith.constant 0 : index
    %6 = tpu.strided_load %arg1[%c0_8, %c0_9, %c1_10, %c0_11] {strides = array<i32: 1, 1, 2, 1>} : memref<1x16x16x128xf32, #tpu.memory_space<vmem>>, vector<1x16x8x128xf32>
    %7 = vector.shape_cast %6 : vector<1x16x8x128xf32> to vector<16x8x128xf32>
    %8 = arith.truncf %7 : vector<16x8x128xf32> to vector<16x8x128xbf16>
    %c1_12 = arith.constant 1 : index
    %c1_13 = arith.constant 1 : index
    %c0_14 = arith.constant 0 : index
    %9 = vector.load %arg9[%c1_12, %c1_13, %c0_14] : memref<18x9x128xbf16, #tpu.memory_space<vmem>>, vector<16x8x128xbf16>
    tpu.vector_store %arg9[%c1_12, %c1_13, %c0_14], %8 {strides = array<i32>} : memref<18x9x128xbf16, #tpu.memory_space<vmem>>, vector<16x8x128xbf16>,
    %cst_15 = arith.constant 0.000000e+00 : bf16
    %10 = vector.broadcast %cst_15 : bf16 to vector<1x8x128xbf16>
    %c0_16 = arith.constant 0 : index
    %c0_17 = arith.constant 0 : index
    %c0_18 = arith.constant 0 : index
    %11 = vector.load %arg10[%c0_16, %c0_17, %c0_18] : memref<18x8x128xbf16, #tpu.memory_space<vmem>>, vector<1x8x128xbf16>
    tpu.vector_store %arg10[%c0_16, %c0_17, %c0_18], %10 {strides = array<i32>} : memref<18x8x128xbf16, #tpu.memory_space<vmem>>, vector<1x8x128xbf16>,
    %cst_19 = arith.constant 0.000000e+00 : bf16
    %12 = vector.broadcast %cst_19 : bf16 to vector<1x8x128xbf16>
    %c17_20 = arith.constant 17 : index
    %c0_21 = arith.constant 0 : index
    %c0_22 = arith.constant 0 : index
    %13 = vector.load %arg10[%c17_20, %c0_21, %c0_22] : memref<18x8x128xbf16, #tpu.memory_space<vmem>>, vector<1x8x128xbf16>
    tpu.vector_store %arg10[%c17_20, %c0_21, %c0_22], %12 {strides = array<i32>} : memref<18x8x128xbf16, #tpu.memory_space<vmem>>, vector<1x8x128xbf16>,
    %c0_23 = arith.constant 0 : index
    %c0_24 = arith.constant 0 : index
    %c0_25 = arith.constant 0 : index
    %c0_26 = arith.constant 0 : index
    %14 = tpu.strided_load %arg1[%c0_23, %c0_24, %c0_25, %c0_26] {strides = array<i32: 1, 1, 2, 1>} : memref<1x16x16x128xf32, #tpu.memory_space<vmem>>, vector<1x16x8x128xf32>
    %15 = vector.shape_cast %14 : vector<1x16x8x128xf32> to vector<16x8x128xf32>
    %16 = arith.truncf %15 : vector<16x8x128xf32> to vector<16x8x128xbf16>
    %c1_27 = arith.constant 1 : index
    %c0_28 = arith.constant 0 : index
    %c0_29 = arith.constant 0 : index
    %17 = vector.load %arg10[%c1_27, %c0_28, %c0_29] : memref<18x8x128xbf16, #tpu.memory_space<vmem>>, vector<16x8x128xbf16>
    tpu.vector_store %arg10[%c1_27, %c0_28, %c0_29], %16 {strides = array<i32>} : memref<18x8x128xbf16, #tpu.memory_space<vmem>>, vector<16x8x128xbf16>,
    %c0_30 = arith.constant 0 : index
    %c0_31 = arith.constant 0 : index
    %c0_32 = arith.constant 0 : index
    %18 = vector.load %arg9[%c0_30, %c0_31, %c0_32] : memref<18x9x128xbf16, #tpu.memory_space<vmem>>, vector<16x8x128xbf16>
    %19 = vector.shape_cast %18 : vector<16x8x128xbf16> to vector<8x2x8x128xbf16>
    %20 = vector.extract_strided_slice %19 {offsets = [0, 0, 0, 0], sizes = [8, 1, 8, 128], strides = [1, 1, 1, 1]} : vector<8x2x8x128xbf16> to vector<8x1x8x128xbf16>
    %21 = vector.shape_cast %20 : vector<8x1x8x128xbf16> to vector<8x8x128xbf16>
    %c0_33 = arith.constant 0 : index
    %c0_34 = arith.constant 0 : index
    %c0_35 = arith.constant 0 : index
    %22 = vector.load %arg10[%c0_33, %c0_34, %c0_35] : memref<18x8x128xbf16, #tpu.memory_space<vmem>>, vector<16x8x128xbf16>
    %23 = vector.shape_cast %22 : vector<16x8x128xbf16> to vector<8x2x8x128xbf16>
    %24 = vector.extract_strided_slice %23 {offsets = [0, 0, 0, 0], sizes = [8, 1, 8, 128], strides = [1, 1, 1, 1]} : vector<8x2x8x128xbf16> to vector<8x1x8x128xbf16>
    %25 = vector.shape_cast %24 : vector<8x1x8x128xbf16> to vector<8x8x128xbf16>
    %c0_36 = arith.constant 0 : index
    %c1_37 = arith.constant 1 : index
    %c0_38 = arith.constant 0 : index
    %26 = vector.load %arg9[%c0_36, %c1_37, %c0_38] : memref<18x9x128xbf16, #tpu.memory_space<vmem>>, vector<16x8x128xbf16>
    %27 = vector.shape_cast %26 : vector<16x8x128xbf16> to vector<8x2x8x128xbf16>
    %28 = vector.extract_strided_slice %27 {offsets = [0, 0, 0, 0], sizes = [8, 1, 8, 128], strides = [1, 1, 1, 1]} : vector<8x2x8x128xbf16> to vector<8x1x8x128xbf16>
    %29 = vector.shape_cast %28 : vector<8x1x8x128xbf16> to vector<8x8x128xbf16>
    %c1_39 = arith.constant 1 : index
    %c0_40 = arith.constant 0 : index
    %c0_41 = arith.constant 0 : index
    %30 = vector.load %arg9[%c1_39, %c0_40, %c0_41] : memref<18x9x128xbf16, #tpu.memory_space<vmem>>, vector<16x8x128xbf16>
    %31 = vector.shape_cast %30 : vector<16x8x128xbf16> to vector<8x2x8x128xbf16>
    %32 = vector.extract_strided_slice %31 {offsets = [0, 0, 0, 0], sizes = [8, 1, 8, 128], strides = [1, 1, 1, 1]} : vector<8x2x8x128xbf16> to vector<8x1x8x128xbf16>
    %33 = vector.shape_cast %32 : vector<8x1x8x128xbf16> to vector<8x8x128xbf16>
    %c1_42 = arith.constant 1 : index
    %c0_43 = arith.constant 0 : index
    %c0_44 = arith.constant 0 : index
    %34 = vector.load %arg10[%c1_42, %c0_43, %c0_44] : memref<18x8x128xbf16, #tpu.memory_space<vmem>>, vector<16x8x128xbf16>
    %35 = vector.shape_cast %34 : vector<16x8x128xbf16> to vector<8x2x8x128xbf16>
    %36 = vector.extract_strided_slice %35 {offsets = [0, 0, 0, 0], sizes = [8, 1, 8, 128], strides = [1, 1, 1, 1]} : vector<8x2x8x128xbf16> to vector<8x1x8x128xbf16>
    %37 = vector.shape_cast %36 : vector<8x1x8x128xbf16> to vector<8x8x128xbf16>
    %c1_45 = arith.constant 1 : index
    %c1_46 = arith.constant 1 : index
    %c0_47 = arith.constant 0 : index
    %38 = vector.load %arg9[%c1_45, %c1_46, %c0_47] : memref<18x9x128xbf16, #tpu.memory_space<vmem>>, vector<16x8x128xbf16>
    %39 = vector.shape_cast %38 : vector<16x8x128xbf16> to vector<8x2x8x128xbf16>
    %40 = vector.extract_strided_slice %39 {offsets = [0, 0, 0, 0], sizes = [8, 1, 8, 128], strides = [1, 1, 1, 1]} : vector<8x2x8x128xbf16> to vector<8x1x8x128xbf16>
    %41 = vector.shape_cast %40 : vector<8x1x8x128xbf16> to vector<8x8x128xbf16>
    %c2 = arith.constant 2 : index
    %c0_48 = arith.constant 0 : index
    %c0_49 = arith.constant 0 : index
    %42 = vector.load %arg9[%c2, %c0_48, %c0_49] : memref<18x9x128xbf16, #tpu.memory_space<vmem>>, vector<16x8x128xbf16>
    %43 = vector.shape_cast %42 : vector<16x8x128xbf16> to vector<8x2x8x128xbf16>
    %44 = vector.extract_strided_slice %43 {offsets = [0, 0, 0, 0], sizes = [8, 1, 8, 128], strides = [1, 1, 1, 1]} : vector<8x2x8x128xbf16> to vector<8x1x8x128xbf16>
    %45 = vector.shape_cast %44 : vector<8x1x8x128xbf16> to vector<8x8x128xbf16>
    %c2_50 = arith.constant 2 : index
    %c0_51 = arith.constant 0 : index
    %c0_52 = arith.constant 0 : index
    %46 = vector.load %arg10[%c2_50, %c0_51, %c0_52] : memref<18x8x128xbf16, #tpu.memory_space<vmem>>, vector<16x8x128xbf16>
    %47 = vector.shape_cast %46 : vector<16x8x128xbf16> to vector<8x2x8x128xbf16>
    %48 = vector.extract_strided_slice %47 {offsets = [0, 0, 0, 0], sizes = [8, 1, 8, 128], strides = [1, 1, 1, 1]} : vector<8x2x8x128xbf16> to vector<8x1x8x128xbf16>
    %49 = vector.shape_cast %48 : vector<8x1x8x128xbf16> to vector<8x8x128xbf16>
    %c2_53 = arith.constant 2 : index
    %c1_54 = arith.constant 1 : index
    %c0_55 = arith.constant 0 : index
    %50 = vector.load %arg9[%c2_53, %c1_54, %c0_55] : memref<18x9x128xbf16, #tpu.memory_space<vmem>>, vector<16x8x128xbf16>
    %51 = vector.shape_cast %50 : vector<16x8x128xbf16> to vector<8x2x8x128xbf16>
    %52 = vector.extract_strided_slice %51 {offsets = [0, 0, 0, 0], sizes = [8, 1, 8, 128], strides = [1, 1, 1, 1]} : vector<8x2x8x128xbf16> to vector<8x1x8x128xbf16>
    %53 = vector.shape_cast %52 : vector<8x1x8x128xbf16> to vector<8x8x128xbf16>
    %54 = tpu.concatenate %21, %25, %29, %33, %37, %41, %45, %49, %53 in 2 : vector<8x8x128xbf16>, vector<8x8x128xbf16>, vector<8x8x128xbf16>, vector<8x8x128xbf16>, vector<8x8x128xbf16>, vector<8x8x128xbf16>, vector<8x8x128xbf16>, vector<8x8x128xbf16>, vector<8x8x128xbf16> -> vector<8x8x1152xbf16>
    %55 = vector.shape_cast %54 : vector<8x8x1152xbf16> to vector<64x1152xbf16>
    %c0_56 = arith.constant 0 : index
    %c0_57 = arith.constant 0 : index
    %56 = vector.load %arg2[%c0_56, %c0_57] : memref<1152x128xbf16, #tpu.memory_space<vmem>>, vector<1152x128xbf16>
    %cst_58 = arith.constant dense<0.000000e+00> : vector<64x128xf32>
    %57 = tpu.matmul %55, %56, %cst_58 {dimension_numbers = #tpu.dot_dimension_numbers<[1], [0], [0], [1], [0, 0, 1, 1], [], []>} : vector<64x1152xbf16>, vector<1152x128xbf16>, vector<64x128xf32> -> vector<64x128xf32>
    %c0_59 = arith.constant 0 : index
    %c0_60 = arith.constant 0 : index
    %58 = vector.load %arg3[%c0_59, %c0_60] : memref<1x128xf32, #tpu.memory_space<vmem>>, vector<1x128xf32>
    %59 = vector.broadcast %58 : vector<1x128xf32> to vector<64x128xf32>
    %60 = arith.addf %57, %59 : vector<64x128xf32>
    %cst_61 = arith.constant 0.000000e+00 : f32
    %61 = vector.broadcast %cst_61 : f32 to vector<64x128xf32>
    %62 = arith.maximumf %60, %61 : vector<64x128xf32>
    %cst_62 = arith.constant 0.000000e+00 : bf16
    %63 = vector.broadcast %cst_62 : bf16 to vector<1x10x128xbf16>
    %c0_63 = arith.constant 0 : index
    %c0_64 = arith.constant 0 : index
    %c0_65 = arith.constant 0 : index
    %64 = vector.load %arg11[%c0_63, %c0_64, %c0_65] : memref<10x10x128xbf16, #tpu.memory_space<vmem>>, vector<1x10x128xbf16>
    tpu.vector_store %arg11[%c0_63, %c0_64, %c0_65], %63 {strides = array<i32>} : memref<10x10x128xbf16, #tpu.memory_space<vmem>>, vector<1x10x128xbf16>,
    %cst_66 = arith.constant 0.000000e+00 : bf16
    %65 = vector.broadcast %cst_66 : bf16 to vector<1x10x128xbf16>
    %c9 = arith.constant 9 : index
    %c0_67 = arith.constant 0 : index
    %c0_68 = arith.constant 0 : index
    %66 = vector.load %arg11[%c9, %c0_67, %c0_68] : memref<10x10x128xbf16, #tpu.memory_space<vmem>>, vector<1x10x128xbf16>
    tpu.vector_store %arg11[%c9, %c0_67, %c0_68], %65 {strides = array<i32>} : memref<10x10x128xbf16, #tpu.memory_space<vmem>>, vector<1x10x128xbf16>,
    %cst_69 = arith.constant 0.000000e+00 : bf16
    %67 = vector.broadcast %cst_69 : bf16 to vector<8x1x128xbf16>
    %c1_70 = arith.constant 1 : index
    %c0_71 = arith.constant 0 : index
    %c0_72 = arith.constant 0 : index
    %68 = vector.load %arg11[%c1_70, %c0_71, %c0_72] : memref<10x10x128xbf16, #tpu.memory_space<vmem>>, vector<8x1x128xbf16>
    tpu.vector_store %arg11[%c1_70, %c0_71, %c0_72], %67 {strides = array<i32>} : memref<10x10x128xbf16, #tpu.memory_space<vmem>>, vector<8x1x128xbf16>,
    %cst_73 = arith.constant 0.000000e+00 : bf16
    %69 = vector.broadcast %cst_73 : bf16 to vector<8x1x128xbf16>
    %c1_74 = arith.constant 1 : index
    %c9_75 = arith.constant 9 : index
    %c0_76 = arith.constant 0 : index
    %70 = vector.load %arg11[%c1_74, %c9_75, %c0_76] : memref<10x10x128xbf16, #tpu.memory_space<vmem>>, vector<8x1x128xbf16>
    tpu.vector_store %arg11[%c1_74, %c9_75, %c0_76], %69 {strides = array<i32>} : memref<10x10x128xbf16, #tpu.memory_space<vmem>>, vector<8x1x128xbf16>,
    %71 = arith.truncf %62 : vector<64x128xf32> to vector<64x128xbf16>
    %72 = vector.shape_cast %71 : vector<64x128xbf16> to vector<8x8x128xbf16>
    %c1_77 = arith.constant 1 : index
    %c1_78 = arith.constant 1 : index
    %c0_79 = arith.constant 0 : index
    %73 = vector.load %arg11[%c1_77, %c1_78, %c0_79] : memref<10x10x128xbf16, #tpu.memory_space<vmem>>, vector<8x8x128xbf16>
    tpu.vector_store %arg11[%c1_77, %c1_78, %c0_79], %72 {strides = array<i32>} : memref<10x10x128xbf16, #tpu.memory_space<vmem>>, vector<8x8x128xbf16>,
    %c0_80 = arith.constant 0 : index
    %c0_81 = arith.constant 0 : index
    %c0_82 = arith.constant 0 : index
    %74 = vector.load %arg11[%c0_80, %c0_81, %c0_82] : memref<10x10x128xbf16, #tpu.memory_space<vmem>>, vector<8x8x128xbf16>
    %c0_83 = arith.constant 0 : index
    %c1_84 = arith.constant 1 : index
    %c0_85 = arith.constant 0 : index
    %75 = vector.load %arg11[%c0_83, %c1_84, %c0_85] : memref<10x10x128xbf16, #tpu.memory_space<vmem>>, vector<8x8x128xbf16>
    %c0_86 = arith.constant 0 : index
    %c2_87 = arith.constant 2 : index
    %c0_88 = arith.constant 0 : index
    %76 = vector.load %arg11[%c0_86, %c2_87, %c0_88] : memref<10x10x128xbf16, #tpu.memory_space<vmem>>, vector<8x8x128xbf16>
    %c1_89 = arith.constant 1 : index
    %c0_90 = arith.constant 0 : index
    %c0_91 = arith.constant 0 : index
    %77 = vector.load %arg11[%c1_89, %c0_90, %c0_91] : memref<10x10x128xbf16, #tpu.memory_space<vmem>>, vector<8x8x128xbf16>
    %c1_92 = arith.constant 1 : index
    %c1_93 = arith.constant 1 : index
    %c0_94 = arith.constant 0 : index
    %78 = vector.load %arg11[%c1_92, %c1_93, %c0_94] : memref<10x10x128xbf16, #tpu.memory_space<vmem>>, vector<8x8x128xbf16>
    %c1_95 = arith.constant 1 : index
    %c2_96 = arith.constant 2 : index
    %c0_97 = arith.constant 0 : index
    %79 = vector.load %arg11[%c1_95, %c2_96, %c0_97] : memref<10x10x128xbf16, #tpu.memory_space<vmem>>, vector<8x8x128xbf16>
    %c2_98 = arith.constant 2 : index
    %c0_99 = arith.constant 0 : index
    %c0_100 = arith.constant 0 : index
    %80 = vector.load %arg11[%c2_98, %c0_99, %c0_100] : memref<10x10x128xbf16, #tpu.memory_space<vmem>>, vector<8x8x128xbf16>
    %c2_101 = arith.constant 2 : index
    %c1_102 = arith.constant 1 : index
    %c0_103 = arith.constant 0 : index
    %81 = vector.load %arg11[%c2_101, %c1_102, %c0_103] : memref<10x10x128xbf16, #tpu.memory_space<vmem>>, vector<8x8x128xbf16>
    %c2_104 = arith.constant 2 : index
    %c2_105 = arith.constant 2 : index
    %c0_106 = arith.constant 0 : index
    %82 = vector.load %arg11[%c2_104, %c2_105, %c0_106] : memref<10x10x128xbf16, #tpu.memory_space<vmem>>, vector<8x8x128xbf16>
    %83 = tpu.concatenate %74, %75, %76, %77, %78, %79, %80, %81, %82 in 2 : vector<8x8x128xbf16>, vector<8x8x128xbf16>, vector<8x8x128xbf16>, vector<8x8x128xbf16>, vector<8x8x128xbf16>, vector<8x8x128xbf16>, vector<8x8x128xbf16>, vector<8x8x128xbf16>, vector<8x8x128xbf16> -> vector<8x8x1152xbf16>
    %84 = vector.shape_cast %83 : vector<8x8x1152xbf16> to vector<64x1152xbf16>
    %c0_107 = arith.constant 0 : index
    %c0_108 = arith.constant 0 : index
    %85 = vector.load %arg4[%c0_107, %c0_108] : memref<1152x128xbf16, #tpu.memory_space<vmem>>, vector<1152x128xbf16>
    %cst_109 = arith.constant dense<0.000000e+00> : vector<64x128xf32>
    %86 = tpu.matmul %84, %85, %cst_109 {dimension_numbers = #tpu.dot_dimension_numbers<[1], [0], [0], [1], [0, 0, 1, 1], [], []>} : vector<64x1152xbf16>, vector<1152x128xbf16>, vector<64x128xf32> -> vector<64x128xf32>
    %c0_110 = arith.constant 0 : index
    %c0_111 = arith.constant 0 : index
    %87 = vector.load %arg5[%c0_110, %c0_111] : memref<1x128xf32, #tpu.memory_space<vmem>>, vector<1x128xf32>
    %88 = vector.broadcast %87 : vector<1x128xf32> to vector<64x128xf32>
    %89 = arith.addf %86, %88 : vector<64x128xf32>
    %c1_112 = arith.constant 1 : index
    %c0_113 = arith.constant 0 : index
    %c0_114 = arith.constant 0 : index
    %90 = vector.load %arg10[%c1_112, %c0_113, %c0_114] : memref<18x8x128xbf16, #tpu.memory_space<vmem>>, vector<16x8x128xbf16>
    %91 = vector.shape_cast %90 : vector<16x8x128xbf16> to vector<8x2x8x128xbf16>
    %92 = vector.extract_strided_slice %91 {offsets = [0, 0, 0, 0], sizes = [8, 1, 8, 128], strides = [1, 1, 1, 1]} : vector<8x2x8x128xbf16> to vector<8x1x8x128xbf16>
    %93 = vector.shape_cast %92 : vector<8x1x8x128xbf16> to vector<8x8x128xbf16>
    %94 = vector.shape_cast %93 : vector<8x8x128xbf16> to vector<64x128xbf16>
    %c0_115 = arith.constant 0 : index
    %c0_116 = arith.constant 0 : index
    %95 = vector.load %arg6[%c0_115, %c0_116] : memref<128x128xbf16, #tpu.memory_space<vmem>>, vector<128x128xbf16>
    %cst_117 = arith.constant dense<0.000000e+00> : vector<64x128xf32>
    %96 = tpu.matmul %94, %95, %cst_117 {dimension_numbers = #tpu.dot_dimension_numbers<[1], [0], [0], [1], [0, 0, 1, 1], [], []>} : vector<64x128xbf16>, vector<128x128xbf16>, vector<64x128xf32> -> vector<64x128xf32>
    %c0_118 = arith.constant 0 : index
    %c0_119 = arith.constant 0 : index
    %97 = vector.load %arg7[%c0_118, %c0_119] : memref<1x128xf32, #tpu.memory_space<vmem>>, vector<1x128xf32>
    %98 = vector.broadcast %97 : vector<1x128xf32> to vector<64x128xf32>
    %99 = arith.addf %96, %98 : vector<64x128xf32>
    %100 = arith.addf %89, %99 : vector<64x128xf32>
    %cst_120 = arith.constant 0.000000e+00 : f32
    %101 = vector.broadcast %cst_120 : f32 to vector<64x128xf32>
    %102 = arith.maximumf %100, %101 : vector<64x128xf32>
    %c0_121 = arith.constant 0 : index
    %c0_122 = arith.constant 0 : index
    %c0_123 = arith.constant 0 : index
    %103 = vector.load %arg8[%c0_121, %c0_122, %c0_123] : memref<1x64x128xf32, #tpu.memory_space<vmem>>, vector<1x64x128xf32>
    %104 = vector.shape_cast %103 : vector<1x64x128xf32> to vector<64x128xf32>
    %105 = vector.shape_cast %102 : vector<64x128xf32> to vector<1x64x128xf32>
    tpu.vector_store %arg8[%c0_121, %c0_122, %c0_123], %105 {strides = array<i32>} : memref<1x64x128xf32, #tpu.memory_space<vmem>>, vector<1x64x128xf32>,
    return
  }
  func.func @transform_0(%arg0: i32) -> (i32, i32, i32, i32) {
    %c0_i32 = arith.constant 0 : i32
    %c0_i32_0 = arith.constant 0 : i32
    %c0_i32_1 = arith.constant 0 : i32
    %c0_i32_2 = arith.constant 0 : i32
    return %arg0, %c0_i32, %c0_i32_0, %c0_i32_1 : i32, i32, i32, i32
  }
  func.func @transform_1(%arg0: i32) -> (i32, i32) {
    %c0_i32 = arith.constant 0 : i32
    %c0_i32_0 = arith.constant 0 : i32
    %c0_i32_1 = arith.constant 0 : i32
    return %c0_i32, %c0_i32_0 : i32, i32
  }
  func.func @transform_2(%arg0: i32) -> (i32, i32) {
    %c0_i32 = arith.constant 0 : i32
    %c0_i32_0 = arith.constant 0 : i32
    %c0_i32_1 = arith.constant 0 : i32
    return %c0_i32, %c0_i32_0 : i32, i32
  }
  func.func @transform_3(%arg0: i32) -> (i32, i32) {
    %c0_i32 = arith.constant 0 : i32
    %c0_i32_0 = arith.constant 0 : i32
    %c0_i32_1 = arith.constant 0 : i32
    return %c0_i32, %c0_i32_0 : i32, i32
  }
  func.func @transform_4(%arg0: i32) -> (i32, i32) {
    %c0_i32 = arith.constant 0 : i32
    %c0_i32_0 = arith.constant 0 : i32
    %c0_i32_1 = arith.constant 0 : i32
    return %c0_i32, %c0_i32_0 : i32, i32
  }
  func.func @transform_5(%arg0: i32) -> (i32, i32) {
    %c0_i32 = arith.constant 0 : i32
    %c0_i32_0 = arith.constant 0 : i32
    %c0_i32_1 = arith.constant 0 : i32
    return %c0_i32, %c0_i32_0 : i32, i32
  }
  func.func @transform_6(%arg0: i32) -> (i32, i32) {
    %c0_i32 = arith.constant 0 : i32
    %c0_i32_0 = arith.constant 0 : i32
    %c0_i32_1 = arith.constant 0 : i32
    return %c0_i32, %c0_i32_0 : i32, i32
  }
  func.func @transform_7(%arg0: i32) -> (i32, i32, i32) {
    %c0_i32 = arith.constant 0 : i32
    %c0_i32_0 = arith.constant 0 : i32
    %c0_i32_1 = arith.constant 0 : i32
    return %arg0, %c0_i32, %c0_i32_0 : i32, i32, i32
  }
}

</mosaic_0001>

<llo_original>
// kernel: tpu_custom_call.1
$region0: #{tpu_custom_call.1}
  #allocation0 [shape = 'u32[]', space=smem, size = 0x4, offset = 0x4, fixed_abs, tag = 'smem constant byte address 0x4 - core index']
  #allocation1 [shape = 'u32[144,128]{1,0:T(1,128)}', space=vmem, size = 0x12000, scoped, tag = 'internal scratch']
  #allocation2 [shape = 'bf16[18,9,128]{2,1,0:T(8,128)(2,1)}', space=vmem, size = 0x12000, scoped, tag = 'scratch operand']
  #allocation3 [shape = 'bf16[18,8,128]{2,1,0:T(8,128)(2,1)}', space=vmem, size = 0x9000, scoped, tag = 'scratch operand']
  #allocation4 [shape = 'bf16[10,10,128]{2,1,0:T(8,128)(2,1)}', space=vmem, size = 0xa000, scoped, tag = 'scratch operand']
  %s0 = inlined_call_operand.hbm [shape: f32[2,16,16,128], index: 0, kind: input, shape index: {}]
  %s1 = inlined_call_operand.hbm [shape: bf16[1152,128], index: 1, kind: input, shape index: {}]
  %s2 = inlined_call_operand.hbm [shape: f32[1,128], index: 2, kind: input, shape index: {}]
  %s3 = inlined_call_operand.hbm [shape: bf16[1152,128], index: 3, kind: input, shape index: {}]
  %s4 = inlined_call_operand.hbm [shape: f32[1,128], index: 4, kind: input, shape index: {}]
  %s5 = inlined_call_operand.hbm [shape: bf16[128,128], index: 5, kind: input, shape index: {}]
  %s6 = inlined_call_operand.hbm [shape: f32[1,128], index: 6, kind: input, shape index: {}]
  %s7 = inlined_call_operand.hbm [shape: f32[2,64,128], index: 7, kind: output, shape index: {}]
  %s8 = sld [smem:[#allocation0]]
  $region89: #{tpu_custom_call.1} parent=0
    _
  %s10 = ssub.s32 1, %s8
  %s11 = scalar_select 0, %s10, %s8
  $region1: #{tpu_custom_call.1} parent=0
    #allocation5 [shape = 'u8[262144]{0}', space=vmem, size = 0x40000, scoped, tag = 'input window, operand 0']
    #allocation6 [shape = 's32[2]{0}', space=sflag, size = 0x8, scoped, tag = 'scoped memory for tpu_custom_call.1']
    #allocation7 [shape = 's32[2]{0}', space=sflag, size = 0x8, scoped, tag = 'scoped memory for tpu_custom_call.1']
    #allocation8 [shape = 'u8[294912]{0}', space=vmem, size = 0x48000, scoped, tag = 'input window, operand 1, single buffered']
    #allocation9 [shape = 's32[1]{0}', space=sflag, size = 0x4, scoped, tag = 'scoped memory for tpu_custom_call.1']
    #allocation10 [shape = 'u8[512]{0}', space=vmem, size = 0x400, scoped, tag = 'input window, operand 2, single buffered']
    #allocation11 [shape = 'u8[294912]{0}', space=vmem, size = 0x48000, scoped, tag = 'input window, operand 3, single buffered']
    #allocation12 [shape = 's32[1]{0}', space=sflag, size = 0x4, scoped, tag = 'scoped memory for tpu_custom_call.1']
    #allocation13 [shape = 'u8[512]{0}', space=vmem, size = 0x400, scoped, tag = 'input window, operand 4, single buffered']
    #allocation14 [shape = 'u8[32768]{0}', space=vmem, size = 0x8000, scoped, tag = 'input window, operand 5, single buffered']
    #allocation15 [shape = 's32[1]{0}', space=sflag, size = 0x4, scoped, tag = 'scoped memory for tpu_custom_call.1']
    #allocation16 [shape = 'u8[512]{0}', space=vmem, size = 0x400, scoped, tag = 'input window, operand 6, single buffered']
    #allocation17 [shape = 'u8[65536]{0}', space=vmem, size = 0x10000, scoped, tag = 'output window, operand 0']
    %12 = vsyncpa [#allocation6], 0
    %s13 = scalar_lea.sflag [#allocation6], 1
    %14 = vsyncpa %s13, 0
    %15 = vsyncpa [#allocation9], 0
    %16 = vsyncpa [#allocation12], 0
    %17 = vsyncpa [#allocation15], 0
    %18 = vsyncpa [#allocation7], 0
    %s19 = scalar_lea.sflag [#allocation7], 1
    %20 = vsyncpa %s19, 0
    loop: start=0, step=1, limit=4
    $region2: #{tpu_custom_call.1} parent=1 // loop_pre_header
      _
    $region3: #{tpu_custom_call.1} parent=1 // loop_header
      %s22 = sphi 0, %s26
      %p23 = scmp.ge.s32.totalorder %s22, 4
      %s32 = sphi 0, %s34
      %s35 = sphi 0, %s32
      %s36 = sphi 0, %s35
      %s52 = sphi 0, %s36
      %s56 = sphi 0, %s56
      %s58 = sphi 0, %s56
      %s59 = sphi 0, %s58
      %s73 = sphi 0, %s59
      %s77 = sphi 0, %s77
      %s79 = sphi 0, %s77
      %s80 = sphi 0, %s79
      %s94 = sphi 0, %s80
      %s98 = sphi 0, %s98
      %s100 = sphi 0, %s98
      %s101 = sphi 0, %s100
      %s115 = sphi 0, %s101
      %s119 = sphi 0, %s119
      %s121 = sphi 0, %s119
      %s122 = sphi 0, %s121
      %s136 = sphi 0, %s122
      %s140 = sphi 0, %s140
      %s142 = sphi 0, %s140
      %s143 = sphi 0, %s142
      %s157 = sphi 0, %s143
      %s161 = sphi 0, %s161
      %s163 = sphi 0, %s161
      %s164 = sphi 0, %s163
      %s178 = sphi 0, %s164
      %s184 = sphi 0, %s186
      %s187 = sphi 0, %s184
      %s188 = sphi 0, %s187
      %s204 = sphi 0, %s188
    $region4: #{tpu_custom_call.1} parent=1 // loop_header_branch
      %25 = sbr.rel (%p23) target = $region8
    $region5: #{tpu_custom_call.1} parent=1 // loop_body
      %s27 = ssub.s32 %s22, 1
      %s28 = ssub.s32 %s22, 2
      %s29 = sadd.s32 %s22, 1
      %s30 = ssub.s32 %s22, %s29
      %p31 = scmp.eq.s32.totalorder %s30, 0
      %s33 = sadd.s32 %s32, 1
      %s34 = scalar_select %p31, %s32, %s33
      %p37 = pneg %p31
      %p38 = scmp.eq.s32.totalorder %s22, 1
      %p39 = por %p37, %p38
      %p40 = scmp.ne.s32.totalorder %s32, %s35
      %p41 = scmp.eq.s32.totalorder %s22, 0
      %p42 = por %p40, %p41
      %p43 = scmp.ne.s32.totalorder %s32, %s35
      %p44 = scmp.eq.s32.totalorder %s27, 1
      %p45 = por %p43, %p44
      %p46 = scmp.ne.s32.totalorder %s35, %s36
      %p47 = scmp.eq.s32.totalorder %s27, 0
      %p48 = por %p46, %p47
      %p49 = scmp.ne.s32.totalorder %s35, %s36
      %p50 = scmp.eq.s32.totalorder %s28, 1
      %p51 = por %p49, %p50
      %p53 = scmp.ne.s32.totalorder %s36, %s52
      %p54 = scmp.eq.s32.totalorder %s28, 0
      %p55 = por %p53, %p54
      %s57 = sadd.s32 %s56, 1
      %p60 = scmp.eq.s32.totalorder %s22, 1
      %p61 = scmp.ne.s32.totalorder %s56, %s58
      %p62 = scmp.eq.s32.totalorder %s22, 0
      %p63 = por %p61, %p62
      %p64 = scmp.ne.s32.totalorder %s56, %s58
      %p65 = scmp.eq.s32.totalorder %s27, 1
      %p66 = por %p64, %p65
      %p67 = scmp.ne.s32.totalorder %s58, %s59
      %p68 = scmp.eq.s32.totalorder %s27, 0
      %p69 = por %p67, %p68
      %p70 = scmp.ne.s32.totalorder %s58, %s59
      %p71 = scmp.eq.s32.totalorder %s28, 1
      %p72 = por %p70, %p71
      %p74 = scmp.ne.s32.totalorder %s59, %s73
      %p75 = scmp.eq.s32.totalorder %s28, 0
      %p76 = por %p74, %p75
      %s78 = sadd.s32 %s77, 1
      %p81 = scmp.eq.s32.totalorder %s22, 1
      %p82 = scmp.ne.s32.totalorder %s77, %s79
      %p83 = scmp.eq.s32.totalorder %s22, 0
      %p84 = por %p82, %p83
      %p85 = scmp.ne.s32.totalorder %s77, %s79
      %p86 = scmp.eq.s32.totalorder %s27, 1
      %p87 = por %p85, %p86
      %p88 = scmp.ne.s32.totalorder %s79, %s80
      %p89 = scmp.eq.s32.totalorder %s27, 0
      %p90 = por %p88, %p89
      %p91 = scmp.ne.s32.totalorder %s79, %s80
      %p92 = scmp.eq.s32.totalorder %s28, 1
      %p93 = por %p91, %p92
      %p95 = scmp.ne.s32.totalorder %s80, %s94
      %p96 = scmp.eq.s32.totalorder %s28, 0
      %p97 = por %p95, %p96
      %s99 = sadd.s32 %s98, 1
      %p102 = scmp.eq.s32.totalorder %s22, 1
      %p103 = scmp.ne.s32.totalorder %s98, %s100
      %p104 = scmp.eq.s32.totalorder %s22, 0
      %p105 = por %p103, %p104
      %p106 = scmp.ne.s32.totalorder %s98, %s100
      %p107 = scmp.eq.s32.totalorder %s27, 1
      %p108 = por %p106, %p107
      %p109 = scmp.ne.s32.totalorder %s100, %s101
      %p110 = scmp.eq.s32.totalorder %s27, 0
      %p111 = por %p109, %p110
      %p112 = scmp.ne.s32.totalorder %s100, %s101
      %p113 = scmp.eq.s32.totalorder %s28, 1
      %p114 = por %p112, %p113
      %p116 = scmp.ne.s32.totalorder %s101, %s115
      %p117 = scmp.eq.s32.totalorder %s28, 0
      %p118 = por %p116, %p117
      %s120 = sadd.s32 %s119, 1
      %p123 = scmp.eq.s32.totalorder %s22, 1
      %p124 = scmp.ne.s32.totalorder %s119, %s121
      %p125 = scmp.eq.s32.totalorder %s22, 0
      %p126 = por %p124, %p125
      %p127 = scmp.ne.s32.totalorder %s119, %s121
      %p128 = scmp.eq.s32.totalorder %s27, 1
      %p129 = por %p127, %p128
      %p130 = scmp.ne.s32.totalorder %s121, %s122
      %p131 = scmp.eq.s32.totalorder %s27, 0
      %p132 = por %p130, %p131
      %p133 = scmp.ne.s32.totalorder %s121, %s122
      %p134 = scmp.eq.s32.totalorder %s28, 1
      %p135 = por %p133, %p134
      %p137 = scmp.ne.s32.totalorder %s122, %s136
      %p138 = scmp.eq.s32.totalorder %s28, 0
      %p139 = por %p137, %p138
      %s141 = sadd.s32 %s140, 1
      %p144 = scmp.eq.s32.totalorder %s22, 1
      %p145 = scmp.ne.s32.totalorder %s140, %s142
      %p146 = scmp.eq.s32.totalorder %s22, 0
      %p147 = por %p145, %p146
      %p148 = scmp.ne.s32.totalorder %s140, %s142
      %p149 = scmp.eq.s32.totalorder %s27, 1
      %p150 = por %p148, %p149
      %p151 = scmp.ne.s32.totalorder %s142, %s143
      %p152 = scmp.eq.s32.totalorder %s27, 0
      %p153 = por %p151, %p152
      %p154 = scmp.ne.s32.totalorder %s142, %s143
      %p155 = scmp.eq.s32.totalorder %s28, 1
      %p156 = por %p154, %p155
      %p158 = scmp.ne.s32.totalorder %s143, %s157
      %p159 = scmp.eq.s32.totalorder %s28, 0
      %p160 = por %p158, %p159
      %s162 = sadd.s32 %s161, 1
      %p165 = scmp.eq.s32.totalorder %s22, 1
      %p166 = scmp.ne.s32.totalorder %s161, %s163
      %p167 = scmp.eq.s32.totalorder %s22, 0
      %p168 = por %p166, %p167
      %p169 = scmp.ne.s32.totalorder %s161, %s163
      %p170 = scmp.eq.s32.totalorder %s27, 1
      %p171 = por %p169, %p170
      %p172 = scmp.ne.s32.totalorder %s163, %s164
      %p173 = scmp.eq.s32.totalorder %s27, 0
      %p174 = por %p172, %p173
      %p175 = scmp.ne.s32.totalorder %s163, %s164
      %p176 = scmp.eq.s32.totalorder %s28, 1
      %p177 = por %p175, %p176
      %p179 = scmp.ne.s32.totalorder %s164, %s178
      %p180 = scmp.eq.s32.totalorder %s28, 0
      %p181 = por %p179, %p180
      %s182 = ssub.s32 %s22, %s29
      %p183 = scmp.eq.s32.totalorder %s182, 0
      %s185 = sadd.s32 %s184, 1
      %s186 = scalar_select %p183, %s184, %s185
      %p189 = pneg %p183
      %p190 = scmp.eq.s32.totalorder %s22, 1
      %p191 = por %p189, %p190
      %p192 = scmp.ne.s32.totalorder %s184, %s187
      %p193 = scmp.eq.s32.totalorder %s22, 0
      %p194 = por %p192, %p193
      %p195 = scmp.ne.s32.totalorder %s184, %s187
      %p196 = scmp.eq.s32.totalorder %s27, 1
      %p197 = por %p195, %p196
      %p198 = scmp.ne.s32.totalorder %s187, %s188
      %p199 = scmp.eq.s32.totalorder %s27, 0
      %p200 = por %p198, %p199
      %p201 = scmp.ne.s32.totalorder %s187, %s188
      %p202 = scmp.eq.s32.totalorder %s28, 1
      %p203 = por %p201, %p202
      %p205 = scmp.ne.s32.totalorder %s188, %s204
      %p206 = scmp.eq.s32.totalorder %s28, 0
      %p207 = por %p205, %p206
      %p208 = scmp.le.s32.totalorder 1, %s22
      %p209 = scmp.lt.s32.totalorder %s22, 3
      %p210 = pnand %p208, %p209
      %p211 = pneg %p210
      // Predicated region
      $region9: #{tpu_custom_call.1} parent=5 // pred_check
        _
      $region10: #{tpu_custom_call.1} parent=5 // pred_check_branch
        %213 = sbr.rel (%p210) target = $region12
      $region11: #{tpu_custom_call.1} parent=5 // pred_region
        %s214 = ssub.s32 %s22, 1
        // Predicated region
        $region13: #{tpu_custom_call.1} parent=11 // pred_check
          %p215 = pneg %p69
        $region14: #{tpu_custom_call.1} parent=11 // pred_check_branch
          %217 = sbr.rel (%p215) target = $region16
        $region15: #{tpu_custom_call.1} parent=11 // pred_region
          %s219 = ssub.s32 9216, 9216
          %220 = vsyncadd [#allocation9], %s219
          %s221 = sshll.u32 [#allocation8], 4
          %s222 = int_to_ptr.vmem [resolvable:$true] %s221
          %227 = dma.hbm_to_vmem [thread:$0]  %s1, 9216, %s222, [#allocation9], 64, 64, 4
        $region16: #{tpu_custom_call.1} parent=11 // pred_fallthru
          _
        // Predicated region
        $region17: #{tpu_custom_call.1} parent=11 // pred_check
          %p228 = pneg %p90
        $region18: #{tpu_custom_call.1} parent=11 // pred_check_branch
          %230 = sbr.rel (%p228) target = $region20
        $region19: #{tpu_custom_call.1} parent=11 // pred_region
          %s232 = ssub.s32 16, 16
          %233 = vsyncadd [#allocation9], %s232
          %s235 = sshll.u32 [#allocation10], 4
          %s236 = int_to_ptr.vmem [resolvable:$true] %s235
          %238 = dma.hbm_to_vmem [thread:$0]  %s2, 16, %s236, [#allocation9]
        $region20: #{tpu_custom_call.1} parent=11 // pred_fallthru
          _
        // Predicated region
        $region21: #{tpu_custom_call.1} parent=11 // pred_check
          %p239 = pneg %p111
        $region22: #{tpu_custom_call.1} parent=11 // pred_check_branch
          %241 = sbr.rel (%p239) target = $region24
        $region23: #{tpu_custom_call.1} parent=11 // pred_region
          %s243 = ssub.s32 9216, 9216
          %244 = vsyncadd [#allocation12], %s243
          %s245 = sshll.u32 [#allocation11], 4
          %s246 = int_to_ptr.vmem [resolvable:$true] %s245
          %251 = dma.hbm_to_vmem [thread:$0]  %s3, 9216, %s246, [#allocation12], 64, 64, 4
        $region24: #{tpu_custom_call.1} parent=11 // pred_fallthru
          _
        // Predicated region
        $region25: #{tpu_custom_call.1} parent=11 // pred_check
          %p252 = pneg %p132
        $region26: #{tpu_custom_call.1} parent=11 // pred_check_branch
          %254 = sbr.rel (%p252) target = $region28
        $region27: #{tpu_custom_call.1} parent=11 // pred_region
          %s256 = ssub.s32 16, 16
          %257 = vsyncadd [#allocation12], %s256
          %s259 = sshll.u32 [#allocation13], 4
          %s260 = int_to_ptr.vmem [resolvable:$true] %s259
          %262 = dma.hbm_to_vmem [thread:$0]  %s4, 16, %s260, [#allocation12]
        $region28: #{tpu_custom_call.1} parent=11 // pred_fallthru
          _
        // Predicated region
        $region29: #{tpu_custom_call.1} parent=11 // pred_check
          %p263 = pneg %p153
        $region30: #{tpu_custom_call.1} parent=11 // pred_check_branch
          %265 = sbr.rel (%p263) target = $region32
        $region31: #{tpu_custom_call.1} parent=11 // pred_region
          %s267 = ssub.s32 1024, 1024
          %268 = vsyncadd [#allocation15], %s267
          %s269 = sshll.u32 [#allocation14], 4
          %s270 = int_to_ptr.vmem [resolvable:$true] %s269
          %275 = dma.hbm_to_vmem [thread:$0]  %s5, 1024, %s270, [#allocation15], 64, 64, 4
        $region32: #{tpu_custom_call.1} parent=11 // pred_fallthru
          _
        // Predicated region
        $region33: #{tpu_custom_call.1} parent=11 // pred_check
          %p276 = pneg %p174
        $region34: #{tpu_custom_call.1} parent=11 // pred_check_branch
          %278 = sbr.rel (%p276) target = $region36
        $region35: #{tpu_custom_call.1} parent=11 // pred_region
          %s280 = ssub.s32 16, 16
          %281 = vsyncadd [#allocation15], %s280
          %s283 = sshll.u32 [#allocation16], 4
          %s284 = int_to_ptr.vmem [resolvable:$true] %s283
          %286 = dma.hbm_to_vmem [thread:$0]  %s6, 16, %s284, [#allocation15]
        $region36: #{tpu_custom_call.1} parent=11 // pred_fallthru
          _
      $region12: #{tpu_custom_call.1} parent=5 // pred_fallthru
        _
      %p287 = scmp.lt.s32.totalorder %s22, 2
      // Predicated region
      $region37: #{tpu_custom_call.1} parent=5 // pred_check
        %p288 = pneg %p287
      $region38: #{tpu_custom_call.1} parent=5 // pred_check_branch
        %290 = sbr.rel (%p288) target = $region40
      $region39: #{tpu_custom_call.1} parent=5 // pred_region
        // Predicated region
        $region41: #{tpu_custom_call.1} parent=39 // pred_check
          %p291 = pneg %p42
        $region42: #{tpu_custom_call.1} parent=39 // pred_check_branch
          %293 = sbr.rel (%p291) target = $region44
        $region43: #{tpu_custom_call.1} parent=39 // pred_region
          %s294 = sand.u32 %s32, 1
          %s295 = scalar_lea.sflag [#allocation6], %s294
          %s296 = sand.u32 %s32, 1
          %s297 = smul.addr %s296, 256
          %s298 = scalar_lea.vmem [#allocation5], %s297
          %s300 = ssub.s32 4096, 4096
          %301 = vsyncadd %s295, %s300
          %s302 = smul.addr %s22, 32
          %s303 = smul.addr %s302, 128
          %s304 = scalar_lea.hbm %s0, %s303
          %s305 = sshll.u32 %s298, 4
          %s306 = int_to_ptr.vmem [resolvable:$true] %s305
          %311 = dma.hbm_to_vmem [thread:$0]  %s304, 4096, %s306, %s295, 128, 128, 8
        $region44: #{tpu_custom_call.1} parent=39 // pred_fallthru
          _
      $region40: #{tpu_custom_call.1} parent=5 // pred_fallthru
        _
      %p312 = scmp.le.s32.totalorder 1, %s22
      %p313 = scmp.lt.s32.totalorder %s22, 3
      %p314 = pnand %p312, %p313
      %p315 = pneg %p314
      // Predicated region
      $region45: #{tpu_custom_call.1} parent=5 // pred_check
        _
      $region46: #{tpu_custom_call.1} parent=5 // pred_check_branch
        %317 = sbr.rel (%p314) target = $region48
      $region47: #{tpu_custom_call.1} parent=5 // pred_region
        %s318 = ssub.s32 %s22, 1
        %s319 = sand.u32 %s35, 1
        %s320 = scalar_lea.sflag [#allocation6], %s319
        %s321 = sand.u32 %s35, 1
        %s322 = smul.addr %s321, 256
        %s323 = scalar_lea.vmem [#allocation5], %s322
        // Predicated region
        $region49: #{tpu_custom_call.1} parent=47 // pred_check
          %p324 = pneg %p48
        $region50: #{tpu_custom_call.1} parent=47 // pred_check_branch
          %326 = sbr.rel (%p324) target = $region52
        $region51: #{tpu_custom_call.1} parent=47 // pred_region
          %327 = dma.done %s320, 4096
        $region52: #{tpu_custom_call.1} parent=47 // pred_fallthru
          _
        // Predicated region
        $region53: #{tpu_custom_call.1} parent=47 // pred_check
          %p328 = pneg %p69
        $region54: #{tpu_custom_call.1} parent=47 // pred_check_branch
          %330 = sbr.rel (%p328) target = $region56
        $region55: #{tpu_custom_call.1} parent=47 // pred_region
          %331 = dma.done [#allocation9], 9216
        $region56: #{tpu_custom_call.1} parent=47 // pred_fallthru
          _
        // Predicated region
        $region57: #{tpu_custom_call.1} parent=47 // pred_check
          %p332 = pneg %p90
        $region58: #{tpu_custom_call.1} parent=47 // pred_check_branch
          %334 = sbr.rel (%p332) target = $region60
        $region59: #{tpu_custom_call.1} parent=47 // pred_region
          %335 = dma.done [#allocation9], 16
        $region60: #{tpu_custom_call.1} parent=47 // pred_fallthru
          _
        // Predicated region
        $region61: #{tpu_custom_call.1} parent=47 // pred_check
          %p336 = pneg %p111
        $region62: #{tpu_custom_call.1} parent=47 // pred_check_branch
          %338 = sbr.rel (%p336) target = $region64
        $region63: #{tpu_custom_call.1} parent=47 // pred_region
          %339 = dma.done [#allocation12], 9216
        $region64: #{tpu_custom_call.1} parent=47 // pred_fallthru
          _
        // Predicated region
        $region65: #{tpu_custom_call.1} parent=47 // pred_check
          %p340 = pneg %p132
        $region66: #{tpu_custom_call.1} parent=47 // pred_check_branch
          %342 = sbr.rel (%p340) target = $region68
        $region67: #{tpu_custom_call.1} parent=47 // pred_region
          %343 = dma.done [#allocation12], 16
        $region68: #{tpu_custom_call.1} parent=47 // pred_fallthru
          _
        // Predicated region
        $region69: #{tpu_custom_call.1} parent=47 // pred_check
          %p344 = pneg %p153
        $region70: #{tpu_custom_call.1} parent=47 // pred_check_branch
          %346 = sbr.rel (%p344) target = $region72
        $region71: #{tpu_custom_call.1} parent=47 // pred_region
          %347 = dma.done [#allocation15], 1024
        $region72: #{tpu_custom_call.1} parent=47 // pred_fallthru
          _
        // Predicated region
        $region73: #{tpu_custom_call.1} parent=47 // pred_check
          %p348 = pneg %p174
        $region74: #{tpu_custom_call.1} parent=47 // pred_check_branch
          %350 = sbr.rel (%p348) target = $region76
        $region75: #{tpu_custom_call.1} parent=47 // pred_region
          %351 = dma.done [#allocation15], 16
        $region76: #{tpu_custom_call.1} parent=47 // pred_fallthru
          _
        %s352 = sand.u32 %s35, 1
        %s353 = scalar_lea.sflag [#allocation6], %s352
        %s354 = sand.u32 %s35, 1
        %s355 = smul.addr %s354, 256
        %s356 = scalar_lea.vmem [#allocation5], %s355
        %p357 = pneg %p48
        %p358 = pneg %p45
        %p359 = pneg %p69
        %p360 = pneg %p66
        %p361 = pneg %p90
        %p362 = pneg %p87
        %p363 = pneg %p111
        %p364 = pneg %p108
        %p365 = pneg %p132
        %p366 = pneg %p129
        %p367 = pneg %p153
        %p368 = pneg %p150
        %p369 = pneg %p174
        %p370 = pneg %p171
        %p371 = pneg %p200
        %p372 = pneg %p197
        %s373 = sand.u32 %s187, 1
        %s374 = scalar_lea.sflag [#allocation7], %s373
        %s375 = sand.u32 %s187, 1
        %s376 = smul.addr %s375, 64
        %s377 = scalar_lea.vmem [#allocation17], %s376
        %379 = vst [vmem:[#allocation2] sm:$0xf] 0
        %vm380 = vcmask 1040384
        %vm381 = vsmask.f32 256
        %vm382 = vmand %vm380, %vm381
        %v383 = vld [vmem:[#allocation2 + $0x4] sm:$0x1]
        %v384 = vsel %vm382, 0, %v383
        %385 = vst [vmem:[#allocation2 + $0x4] sm:$0x1] %v384
        %s386 = scalar_lea.vmem [#allocation2], 136
        %387 = vst [vmem:[%s386] sm:$0xf] 0
        %v388 = vld [vmem:[%s386 + $0x4] sm:$0x1]
        %v389 = vsel %vm382, 0, %v388
        %390 = vst [vmem:[%s386 + $0x4] sm:$0x1] %v389
        %s391 = scalar_lea.vmem [#allocation2], 8
        %v392 = vld [vmem:[%s391] sm:$0x1]
        %v393 = vsel %vm382, 0, %v392
        %394 = vst [vmem:[%s391] sm:$0x1] %v393
        %v395 = vld [vmem:[%s391 + $0x8] sm:$0x1]
        %v396 = vsel %vm382, 0, %v395
        %397 = vst [vmem:[%s391 + $0x8] sm:$0x1] %v396
        %v398 = vld [vmem:[%s391 + $0x10] sm:$0x1]
        %v399 = vsel %vm382, 0, %v398
        %400 = vst [vmem:[%s391 + $0x10] sm:$0x1] %v399
        %v401 = vld [vmem:[%s391 + $0x18] sm:$0x1]
        %v402 = vsel %vm382, 0, %v401
        %403 = vst [vmem:[%s391 + $0x18] sm:$0x1] %v402
        %v404 = vld [vmem:[%s391 + $0x20] sm:$0x1]
        %v405 = vsel %vm382, 0, %v404
        %406 = vst [vmem:[%s391 + $0x20] sm:$0x1] %v405
        %v407 = vld [vmem:[%s391 + $0x28] sm:$0x1]
        %v408 = vsel %vm382, 0, %v407
        %409 = vst [vmem:[%s391 + $0x28] sm:$0x1] %v408
        %v410 = vld [vmem:[%s391 + $0x30] sm:$0x1]
        %v411 = vsel %vm382, 0, %v410
        %412 = vst [vmem:[%s391 + $0x30] sm:$0x1] %v411
        %v413 = vld [vmem:[%s391 + $0x38] sm:$0x1]
        %v414 = vsel %vm382, 0, %v413
        %415 = vst [vmem:[%s391 + $0x38] sm:$0x1] %v414
        %v416 = vld [vmem:[%s391 + $0x40] sm:$0x1]
        %v417 = vsel %vm382, 0, %v416
        %418 = vst [vmem:[%s391 + $0x40] sm:$0x1] %v417
        %v419 = vld [vmem:[%s391 + $0x48] sm:$0x1]
        %v420 = vsel %vm382, 0, %v419
        %421 = vst [vmem:[%s391 + $0x48] sm:$0x1] %v420
        %v422 = vld [vmem:[%s391 + $0x50] sm:$0x1]
        %v423 = vsel %vm382, 0, %v422
        %424 = vst [vmem:[%s391 + $0x50] sm:$0x1] %v423
        %v425 = vld [vmem:[%s391 + $0x58] sm:$0x1]
        %v426 = vsel %vm382, 0, %v425
        %427 = vst [vmem:[%s391 + $0x58] sm:$0x1] %v426
        %v428 = vld [vmem:[%s391 + $0x60] sm:$0x1]
        %v429 = vsel %vm382, 0, %v428
        %430 = vst [vmem:[%s391 + $0x60] sm:$0x1] %v429
        %v431 = vld [vmem:[%s391 + $0x68] sm:$0x1]
        %v432 = vsel %vm382, 0, %v431
        %433 = vst [vmem:[%s391 + $0x68] sm:$0x1] %v432
        %v434 = vld [vmem:[%s391 + $0x70] sm:$0x1]
        %v435 = vsel %vm382, 0, %v434
        %436 = vst [vmem:[%s391 + $0x70] sm:$0x1] %v435
        %v437 = vld [vmem:[%s391 + $0x78] sm:$0x1]
        %v438 = vsel %vm382, 0, %v437
        %439 = vst [vmem:[%s391 + $0x78] sm:$0x1] %v438
        %s440 = scalar_lea.vmem %s323, 1 [#allocation5]
        %v441 = vld [vmem:[%s440] ss:$2 sm:$0xff]
        %s442 = scalar_lea.vmem %s323, 17 [#allocation5]
        %v443 = vld [vmem:[%s442] ss:$2 sm:$0xff]
        %s444 = scalar_lea.vmem %s323, 33 [#allocation5]
        %v445 = vld [vmem:[%s444] ss:$2 sm:$0xff]
        %s446 = scalar_lea.vmem %s323, 49 [#allocation5]
        %v447 = vld [vmem:[%s446] ss:$2 sm:$0xff]
        %s448 = scalar_lea.vmem %s323, 65 [#allocation5]
        %v449 = vld [vmem:[%s448] ss:$2 sm:$0xff]
        %s450 = scalar_lea.vmem %s323, 81 [#allocation5]
        %v451 = vld [vmem:[%s450] ss:$2 sm:$0xff]
        %s452 = scalar_lea.vmem %s323, 97 [#allocation5]
        %v453 = vld [vmem:[%s452] ss:$2 sm:$0xff]
        %s454 = scalar_lea.vmem %s323, 113 [#allocation5]
        %v455 = vld [vmem:[%s454] ss:$2 sm:$0xff]
        %s456 = scalar_lea.vmem %s323, 129 [#allocation5]
        %v457 = vld [vmem:[%s456] ss:$2 sm:$0xff]
        %s458 = scalar_lea.vmem %s323, 145 [#allocation5]
        %v459 = vld [vmem:[%s458] ss:$2 sm:$0xff]
        %s460 = scalar_lea.vmem %s323, 161 [#allocation5]
        %v461 = vld [vmem:[%s460] ss:$2 sm:$0xff]
        %s462 = scalar_lea.vmem %s323, 177 [#allocation5]
        %v463 = vld [vmem:[%s462] ss:$2 sm:$0xff]
        %s464 = scalar_lea.vmem %s323, 193 [#allocation5]
        %v465 = vld [vmem:[%s464] ss:$2 sm:$0xff]
        %s466 = scalar_lea.vmem %s323, 209 [#allocation5]
        %v467 = vld [vmem:[%s466] ss:$2 sm:$0xff]
        %s468 = scalar_lea.vmem %s323, 225 [#allocation5]
        %v469 = vld [vmem:[%s468] ss:$2 sm:$0xff]
        %s470 = scalar_lea.vmem %s323, 241 [#allocation5]
        %v471 = vld [vmem:[%s470] ss:$2 sm:$0xff]
        %v472 = vpack.c.bf16 %v441, %v441
        %v473 = vpack.c.bf16 %v443, %v443
        %v474 = vpack.c.bf16 %v445, %v445
        %v475 = vpack.c.bf16 %v447, %v447
        %v476 = vpack.c.bf16 %v449, %v449
        %v477 = vpack.c.bf16 %v451, %v451
        %v478 = vpack.c.bf16 %v453, %v453
        %v479 = vpack.c.bf16 %v455, %v455
        %v480 = vpack.c.bf16 %v457, %v457
        %v481 = vpack.c.bf16 %v459, %v459
        %v482 = vpack.c.bf16 %v461, %v461
        %v483 = vpack.c.bf16 %v463, %v463
        %v484 = vpack.c.bf16 %v465, %v465
        %v485 = vpack.c.bf16 %v467, %v467
        %v486 = vpack.c.bf16 %v469, %v469
        %v487 = vpack.c.bf16 %v471, %v471
        %v504 = vunpack.c.l.b16 %v472
        %v505 = vunpack.c.l.b16 %v473
        %v506 = vunpack.c.l.b16 %v474
        %v507 = vunpack.c.l.b16 %v475
        %v508 = vunpack.c.l.b16 %v476
        %v509 = vunpack.c.l.b16 %v477
        %v510 = vunpack.c.l.b16 %v478
        %v511 = vunpack.c.l.b16 %v479
        %v512 = vunpack.c.l.b16 %v480
        %v513 = vunpack.c.l.b16 %v481
        %v514 = vunpack.c.l.b16 %v482
        %v515 = vunpack.c.l.b16 %v483
        %v516 = vunpack.c.l.b16 %v484
        %v517 = vunpack.c.l.b16 %v485
        %v518 = vunpack.c.l.b16 %v486
        %v519 = vunpack.c.l.b16 %v487
        %v520 = vpack.c.b16 %v504, %v504
        %v521 = vpack.c.b16 %v505, %v505
        %v522 = vpack.c.b16 %v506, %v506
        %v523 = vpack.c.b16 %v507, %v507
        %v524 = vpack.c.b16 %v508, %v508
        %v525 = vpack.c.b16 %v509, %v509
        %v526 = vpack.c.b16 %v510, %v510
        %v527 = vpack.c.b16 %v511, %v511
        %v528 = vpack.c.b16 %v512, %v512
        %v529 = vpack.c.b16 %v513, %v513
        %v530 = vpack.c.b16 %v514, %v514
        %v531 = vpack.c.b16 %v515, %v515
        %v532 = vpack.c.b16 %v516, %v516
        %v533 = vpack.c.b16 %v517, %v517
        %v534 = vpack.c.b16 %v518, %v518
        %v535 = vpack.c.b16 %v519, %v519
        %v537 = vshrl.u32 %v520, 16
        %v539 = vrot.slane %v537, 7
        %v540 = vshll.u32 %v520, 16
        %v542 = vor.u32 %v539, %v540
        %v543 = vrot.slane %v539, 4
        %v545 = vshrl.u32 %v521, 16
        %v547 = vrot.slane %v545, 7
        %v548 = vshll.u32 %v521, 16
        %v550 = vor.u32 %v547, %v548
        %v551 = vrot.slane %v547, 4
        %v553 = vshrl.u32 %v522, 16
        %v555 = vrot.slane %v553, 7
        %v556 = vshll.u32 %v522, 16
        %v558 = vor.u32 %v555, %v556
        %v559 = vrot.slane %v555, 4
        %v561 = vshrl.u32 %v523, 16
        %v563 = vrot.slane %v561, 7
        %v564 = vshll.u32 %v523, 16
        %v566 = vor.u32 %v563, %v564
        %v567 = vrot.slane %v563, 4
        %v569 = vshrl.u32 %v524, 16
        %v571 = vrot.slane %v569, 7
        %v572 = vshll.u32 %v524, 16
        %v574 = vor.u32 %v571, %v572
        %v575 = vrot.slane %v571, 4
        %v577 = vshrl.u32 %v525, 16
        %v579 = vrot.slane %v577, 7
        %v580 = vshll.u32 %v525, 16
        %v582 = vor.u32 %v579, %v580
        %v583 = vrot.slane %v579, 4
        %v585 = vshrl.u32 %v526, 16
        %v587 = vrot.slane %v585, 7
        %v588 = vshll.u32 %v526, 16
        %v590 = vor.u32 %v587, %v588
        %v591 = vrot.slane %v587, 4
        %v593 = vshrl.u32 %v527, 16
        %v595 = vrot.slane %v593, 7
        %v596 = vshll.u32 %v527, 16
        %v598 = vor.u32 %v595, %v596
        %v599 = vrot.slane %v595, 4
        %v601 = vshrl.u32 %v528, 16
        %v603 = vrot.slane %v601, 7
        %v604 = vshll.u32 %v528, 16
        %v606 = vor.u32 %v603, %v604
        %v607 = vrot.slane %v603, 4
        %v609 = vshrl.u32 %v529, 16
        %v611 = vrot.slane %v609, 7
        %v612 = vshll.u32 %v529, 16
        %v614 = vor.u32 %v611, %v612
        %v615 = vrot.slane %v611, 4
        %v617 = vshrl.u32 %v530, 16
        %v619 = vrot.slane %v617, 7
        %v620 = vshll.u32 %v530, 16
        %v622 = vor.u32 %v619, %v620
        %v623 = vrot.slane %v619, 4
        %v625 = vshrl.u32 %v531, 16
        %v627 = vrot.slane %v625, 7
        %v628 = vshll.u32 %v531, 16
        %v630 = vor.u32 %v627, %v628
        %v631 = vrot.slane %v627, 4
        %v633 = vshrl.u32 %v532, 16
        %v635 = vrot.slane %v633, 7
        %v636 = vshll.u32 %v532, 16
        %v638 = vor.u32 %v635, %v636
        %v639 = vrot.slane %v635, 4
        %v641 = vshrl.u32 %v533, 16
        %v643 = vrot.slane %v641, 7
        %v644 = vshll.u32 %v533, 16
        %v646 = vor.u32 %v643, %v644
        %v647 = vrot.slane %v643, 4
        %v649 = vshrl.u32 %v534, 16
        %v651 = vrot.slane %v649, 7
        %v652 = vshll.u32 %v534, 16
        %v654 = vor.u32 %v651, %v652
        %v655 = vrot.slane %v651, 4
        %v657 = vshrl.u32 %v535, 16
        %v659 = vrot.slane %v657, 7
        %v660 = vshll.u32 %v535, 16
        %v662 = vor.u32 %v659, %v660
        %v663 = vrot.slane %v659, 4
        %vm696 = vcmask 1043456
        %vm697 = vsmask.f32 7938
        %vm698 = vmand %vm696, %vm697
        %v699 = vld [vmem:[%s391] sm:$0xf]
        %v700 = vsel %vm698, %v542, %v699
        %701 = vst [vmem:[%s391] sm:$0xf] %v700
        %v702 = vld [vmem:[%s391 + $0x4] sm:$0x1]
        %v703 = vsel %vm382, %v543, %v702
        %704 = vst [vmem:[%s391 + $0x4] sm:$0x1] %v703
        %v705 = vld [vmem:[%s391 + $0x8] sm:$0xf]
        %v706 = vsel %vm698, %v550, %v705
        %707 = vst [vmem:[%s391 + $0x8] sm:$0xf] %v706
        %v708 = vld [vmem:[%s391 + $0xc] sm:$0x1]
        %v709 = vsel %vm382, %v551, %v708
        %710 = vst [vmem:[%s391 + $0xc] sm:$0x1] %v709
        %v711 = vld [vmem:[%s391 + $0x10] sm:$0xf]
        %v712 = vsel %vm698, %v558, %v711
        %713 = vst [vmem:[%s391 + $0x10] sm:$0xf] %v712
        %v714 = vld [vmem:[%s391 + $0x14] sm:$0x1]
        %v715 = vsel %vm382, %v559, %v714
        %716 = vst [vmem:[%s391 + $0x14] sm:$0x1] %v715
        %v717 = vld [vmem:[%s391 + $0x18] sm:$0xf]
        %v718 = vsel %vm698, %v566, %v717
        %719 = vst [vmem:[%s391 + $0x18] sm:$0xf] %v718
        %v720 = vld [vmem:[%s391 + $0x1c] sm:$0x1]
        %v721 = vsel %vm382, %v567, %v720
        %722 = vst [vmem:[%s391 + $0x1c] sm:$0x1] %v721
        %v723 = vld [vmem:[%s391 + $0x20] sm:$0xf]
        %v724 = vsel %vm698, %v574, %v723
        %725 = vst [vmem:[%s391 + $0x20] sm:$0xf] %v724
        %v726 = vld [vmem:[%s391 + $0x24] sm:$0x1]
        %v727 = vsel %vm382, %v575, %v726
        %728 = vst [vmem:[%s391 + $0x24] sm:$0x1] %v727
        %v729 = vld [vmem:[%s391 + $0x28] sm:$0xf]
        %v730 = vsel %vm698, %v582, %v729
        %731 = vst [vmem:[%s391 + $0x28] sm:$0xf] %v730
        %v732 = vld [vmem:[%s391 + $0x2c] sm:$0x1]
        %v733 = vsel %vm382, %v583, %v732
        %734 = vst [vmem:[%s391 + $0x2c] sm:$0x1] %v733
        %v735 = vld [vmem:[%s391 + $0x30] sm:$0xf]
        %v736 = vsel %vm698, %v590, %v735
        %737 = vst [vmem:[%s391 + $0x30] sm:$0xf] %v736
        %v738 = vld [vmem:[%s391 + $0x34] sm:$0x1]
        %v739 = vsel %vm382, %v591, %v738
        %740 = vst [vmem:[%s391 + $0x34] sm:$0x1] %v739
        %v741 = vld [vmem:[%s391 + $0x38] sm:$0xf]
        %v742 = vsel %vm698, %v598, %v741
        %743 = vst [vmem:[%s391 + $0x38] sm:$0xf] %v742
        %v744 = vld [vmem:[%s391 + $0x3c] sm:$0x1]
        %v745 = vsel %vm382, %v599, %v744
        %746 = vst [vmem:[%s391 + $0x3c] sm:$0x1] %v745
        %v747 = vld [vmem:[%s391 + $0x40] sm:$0xf]
        %v748 = vsel %vm698, %v606, %v747
        %749 = vst [vmem:[%s391 + $0x40] sm:$0xf] %v748
        %v750 = vld [vmem:[%s391 + $0x44] sm:$0x1]
        %v751 = vsel %vm382, %v607, %v750
        %752 = vst [vmem:[%s391 + $0x44] sm:$0x1] %v751
        %v753 = vld [vmem:[%s391 + $0x48] sm:$0xf]
        %v754 = vsel %vm698, %v614, %v753
        %755 = vst [vmem:[%s391 + $0x48] sm:$0xf] %v754
        %v756 = vld [vmem:[%s391 + $0x4c] sm:$0x1]
        %v757 = vsel %vm382, %v615, %v756
        %758 = vst [vmem:[%s391 + $0x4c] sm:$0x1] %v757
        %v759 = vld [vmem:[%s391 + $0x50] sm:$0xf]
        %v760 = vsel %vm698, %v622, %v759
        %761 = vst [vmem:[%s391 + $0x50] sm:$0xf] %v760
        %v762 = vld [vmem:[%s391 + $0x54] sm:$0x1]
        %v763 = vsel %vm382, %v623, %v762
        %764 = vst [vmem:[%s391 + $0x54] sm:$0x1] %v763
        %v765 = vld [vmem:[%s391 + $0x58] sm:$0xf]
        %v766 = vsel %vm698, %v630, %v765
        %767 = vst [vmem:[%s391 + $0x58] sm:$0xf] %v766
        %v768 = vld [vmem:[%s391 + $0x5c] sm:$0x1]
        %v769 = vsel %vm382, %v631, %v768
        %770 = vst [vmem:[%s391 + $0x5c] sm:$0x1] %v769
        %v771 = vld [vmem:[%s391 + $0x60] sm:$0xf]
        %v772 = vsel %vm698, %v638, %v771
        %773 = vst [vmem:[%s391 + $0x60] sm:$0xf] %v772
        %v774 = vld [vmem:[%s391 + $0x64] sm:$0x1]
        %v775 = vsel %vm382, %v639, %v774
        %776 = vst [vmem:[%s391 + $0x64] sm:$0x1] %v775
        %v777 = vld [vmem:[%s391 + $0x68] sm:$0xf]
        %v778 = vsel %vm698, %v646, %v777
        %779 = vst [vmem:[%s391 + $0x68] sm:$0xf] %v778
        %v780 = vld [vmem:[%s391 + $0x6c] sm:$0x1]
        %v781 = vsel %vm382, %v647, %v780
        %782 = vst [vmem:[%s391 + $0x6c] sm:$0x1] %v781
        %v783 = vld [vmem:[%s391 + $0x70] sm:$0xf]
        %v784 = vsel %vm698, %v654, %v783
        %785 = vst [vmem:[%s391 + $0x70] sm:$0xf] %v784
        %v786 = vld [vmem:[%s391 + $0x74] sm:$0x1]
        %v787 = vsel %vm382, %v655, %v786
        %788 = vst [vmem:[%s391 + $0x74] sm:$0x1] %v787
        %v789 = vld [vmem:[%s391 + $0x78] sm:$0xf]
        %v790 = vsel %vm698, %v662, %v789
        %791 = vst [vmem:[%s391 + $0x78] sm:$0xf] %v790
        %v792 = vld [vmem:[%s391 + $0x7c] sm:$0x1]
        %v793 = vsel %vm382, %v663, %v792
        %794 = vst [vmem:[%s391 + $0x7c] sm:$0x1] %v793
        %795 = vst [vmem:[#allocation3] sm:$0xf] 0
        %s796 = scalar_lea.vmem [#allocation3], 68
        %797 = vst [vmem:[%s796] sm:$0xf] 0
        %v798 = vld [vmem:[%s323] ss:$2 sm:$0xff]
        %s799 = scalar_lea.vmem %s323, 16 [#allocation5]
        %v800 = vld [vmem:[%s799] ss:$2 sm:$0xff]
        %s801 = scalar_lea.vmem %s323, 32 [#allocation5]
        %v802 = vld [vmem:[%s801] ss:$2 sm:$0xff]
        %s803 = scalar_lea.vmem %s323, 48 [#allocation5]
        %v804 = vld [vmem:[%s803] ss:$2 sm:$0xff]
        %s805 = scalar_lea.vmem %s323, 64 [#allocation5]
        %v806 = vld [vmem:[%s805] ss:$2 sm:$0xff]
        %s807 = scalar_lea.vmem %s323, 80 [#allocation5]
        %v808 = vld [vmem:[%s807] ss:$2 sm:$0xff]
        %s809 = scalar_lea.vmem %s323, 96 [#allocation5]
        %v810 = vld [vmem:[%s809] ss:$2 sm:$0xff]
        %s811 = scalar_lea.vmem %s323, 112 [#allocation5]
        %v812 = vld [vmem:[%s811] ss:$2 sm:$0xff]
        %s813 = scalar_lea.vmem %s323, 128 [#allocation5]
        %v814 = vld [vmem:[%s813] ss:$2 sm:$0xff]
        %s815 = scalar_lea.vmem %s323, 144 [#allocation5]
        %v816 = vld [vmem:[%s815] ss:$2 sm:$0xff]
        %s817 = scalar_lea.vmem %s323, 160 [#allocation5]
        %v818 = vld [vmem:[%s817] ss:$2 sm:$0xff]
        %s819 = scalar_lea.vmem %s323, 176 [#allocation5]
        %v820 = vld [vmem:[%s819] ss:$2 sm:$0xff]
        %s821 = scalar_lea.vmem %s323, 192 [#allocation5]
        %v822 = vld [vmem:[%s821] ss:$2 sm:$0xff]
        %s823 = scalar_lea.vmem %s323, 208 [#allocation5]
        %v824 = vld [vmem:[%s823] ss:$2 sm:$0xff]
        %s825 = scalar_lea.vmem %s323, 224 [#allocation5]
        %v826 = vld [vmem:[%s825] ss:$2 sm:$0xff]
        %s827 = scalar_lea.vmem %s323, 240 [#allocation5]
        %v828 = vld [vmem:[%s827] ss:$2 sm:$0xff]
        %v829 = vpack.c.bf16 %v798, %v798
        %v830 = vpack.c.bf16 %v800, %v800
        %v831 = vpack.c.bf16 %v802, %v802
        %v832 = vpack.c.bf16 %v804, %v804
        %v833 = vpack.c.bf16 %v806, %v806
        %v834 = vpack.c.bf16 %v808, %v808
        %v835 = vpack.c.bf16 %v810, %v810
        %v836 = vpack.c.bf16 %v812, %v812
        %v837 = vpack.c.bf16 %v814, %v814
        %v838 = vpack.c.bf16 %v816, %v816
        %v839 = vpack.c.bf16 %v818, %v818
        %v840 = vpack.c.bf16 %v820, %v820
        %v841 = vpack.c.bf16 %v822, %v822
        %v842 = vpack.c.bf16 %v824, %v824
        %v843 = vpack.c.bf16 %v826, %v826
        %v844 = vpack.c.bf16 %v828, %v828
        %s845 = scalar_lea.vmem [#allocation3], 4
        %846 = vst [vmem:[%s845] sm:$0xf] %v829
        %847 = vst [vmem:[%s845 + $0x4] sm:$0xf] %v830
        %848 = vst [vmem:[%s845 + $0x8] sm:$0xf] %v831
        %849 = vst [vmem:[%s845 + $0xc] sm:$0xf] %v832
        %850 = vst [vmem:[%s845 + $0x10] sm:$0xf] %v833
        %851 = vst [vmem:[%s845 + $0x14] sm:$0xf] %v834
        %852 = vst [vmem:[%s845 + $0x18] sm:$0xf] %v835
        %853 = vst [vmem:[%s845 + $0x1c] sm:$0xf] %v836
        %854 = vst [vmem:[%s845 + $0x20] sm:$0xf] %v837
        %855 = vst [vmem:[%s845 + $0x24] sm:$0xf] %v838
        %856 = vst [vmem:[%s845 + $0x28] sm:$0xf] %v839
        %857 = vst [vmem:[%s845 + $0x2c] sm:$0xf] %v840
        %858 = vst [vmem:[%s845 + $0x30] sm:$0xf] %v841
        %859 = vst [vmem:[%s845 + $0x34] sm:$0xf] %v842
        %860 = vst [vmem:[%s845 + $0x38] sm:$0xf] %v843
        %861 = vst [vmem:[%s845 + $0x3c] sm:$0xf] %v844
        %v862 = vld [vmem:[#allocation2] sm:$0xf]
        %v863 = vld [vmem:[#allocation2 + $0x10] sm:$0xf]
        %v864 = vld [vmem:[#allocation2 + $0x20] sm:$0xf]
        %v865 = vld [vmem:[#allocation2 + $0x30] sm:$0xf]
        %v866 = vld [vmem:[#allocation2 + $0x40] sm:$0xf]
        %v867 = vld [vmem:[#allocation2 + $0x50] sm:$0xf]
        %v868 = vld [vmem:[#allocation2 + $0x60] sm:$0xf]
        %v869 = vld [vmem:[#allocation2 + $0x70] sm:$0xf]
        %v870 = vld [vmem:[#allocation3] sm:$0xf]
        %v871 = vld [vmem:[#allocation3 + $0x8] sm:$0xf]
        %v872 = vld [vmem:[#allocation3 + $0x10] sm:$0xf]
        %v873 = vld [vmem:[#allocation3 + $0x18] sm:$0xf]
        %v874 = vld [vmem:[#allocation3 + $0x20] sm:$0xf]
        %v875 = vld [vmem:[#allocation3 + $0x28] sm:$0xf]
        %v876 = vld [vmem:[#allocation3 + $0x30] sm:$0xf]
        %v877 = vld [vmem:[#allocation3 + $0x38] sm:$0xf]
        %v878 = vld [vmem:[#allocation2 + $0x4] sm:$0x1]
        %v879 = vld [vmem:[#allocation2 + $0x14] sm:$0x1]
        %v880 = vld [vmem:[#allocation2 + $0x24] sm:$0x1]
        %v881 = vld [vmem:[#allocation2 + $0x34] sm:$0x1]
        %v882 = vld [vmem:[#allocation2 + $0x44] sm:$0x1]
        %v883 = vld [vmem:[#allocation2 + $0x54] sm:$0x1]
        %v884 = vld [vmem:[#allocation2 + $0x64] sm:$0x1]
        %v885 = vld [vmem:[#allocation2 + $0x74] sm:$0x1]
        %v886 = vld [vmem:[%s391] sm:$0xf]
        %v887 = vld [vmem:[%s391 + $0x10] sm:$0xf]
        %v888 = vld [vmem:[%s391 + $0x20] sm:$0xf]
        %v889 = vld [vmem:[%s391 + $0x30] sm:$0xf]
        %v890 = vld [vmem:[%s391 + $0x40] sm:$0xf]
        %v891 = vld [vmem:[%s391 + $0x50] sm:$0xf]
        %v892 = vld [vmem:[%s391 + $0x60] sm:$0xf]
        %v893 = vld [vmem:[%s391 + $0x70] sm:$0xf]
        %v894 = vld [vmem:[%s845] sm:$0xf]
        %v895 = vld [vmem:[%s845 + $0x8] sm:$0xf]
        %v896 = vld [vmem:[%s845 + $0x10] sm:$0xf]
        %v897 = vld [vmem:[%s845 + $0x18] sm:$0xf]
        %v898 = vld [vmem:[%s845 + $0x20] sm:$0xf]
        %v899 = vld [vmem:[%s845 + $0x28] sm:$0xf]
        %v900 = vld [vmem:[%s845 + $0x30] sm:$0xf]
        %v901 = vld [vmem:[%s845 + $0x38] sm:$0xf]
        %v902 = vld [vmem:[%s391 + $0x4] sm:$0x1]
        %v903 = vld [vmem:[%s391 + $0x14] sm:$0x1]
        %v904 = vld [vmem:[%s391 + $0x24] sm:$0x1]
        %v905 = vld [vmem:[%s391 + $0x34] sm:$0x1]
        %v906 = vld [vmem:[%s391 + $0x44] sm:$0x1]
        %v907 = vld [vmem:[%s391 + $0x54] sm:$0x1]
        %v908 = vld [vmem:[%s391 + $0x64] sm:$0x1]
        %v909 = vld [vmem:[%s391 + $0x74] sm:$0x1]
        %s910 = scalar_lea.vmem [#allocation2], 16
        %v911 = vld [vmem:[%s910] sm:$0xf]
        %v912 = vld [vmem:[%s910 + $0x10] sm:$0xf]
        %v913 = vld [vmem:[%s910 + $0x20] sm:$0xf]
        %v914 = vld [vmem:[%s910 + $0x30] sm:$0xf]
        %v915 = vld [vmem:[%s910 + $0x40] sm:$0xf]
        %v916 = vld [vmem:[%s910 + $0x50] sm:$0xf]
        %v917 = vld [vmem:[%s910 + $0x60] sm:$0xf]
        %v918 = vld [vmem:[%s910 + $0x70] sm:$0xf]
        %s919 = scalar_lea.vmem [#allocation3], 8
        %v920 = vld [vmem:[%s919] sm:$0xf]
        %v921 = vld [vmem:[%s919 + $0x8] sm:$0xf]
        %v922 = vld [vmem:[%s919 + $0x10] sm:$0xf]
        %v923 = vld [vmem:[%s919 + $0x18] sm:$0xf]
        %v924 = vld [vmem:[%s919 + $0x20] sm:$0xf]
        %v925 = vld [vmem:[%s919 + $0x28] sm:$0xf]
        %v926 = vld [vmem:[%s919 + $0x30] sm:$0xf]
        %v927 = vld [vmem:[%s919 + $0x38] sm:$0xf]
        %v928 = vld [vmem:[%s910 + $0x4] sm:$0x1]
        %v929 = vld [vmem:[%s910 + $0x14] sm:$0x1]
        %v930 = vld [vmem:[%s910 + $0x24] sm:$0x1]
        %v931 = vld [vmem:[%s910 + $0x34] sm:$0x1]
        %v932 = vld [vmem:[%s910 + $0x44] sm:$0x1]
        %v933 = vld [vmem:[%s910 + $0x54] sm:$0x1]
        %v934 = vld [vmem:[%s910 + $0x64] sm:$0x1]
        %v935 = vld [vmem:[%s910 + $0x74] sm:$0x1]
        %v952 = vunpack.c.l.b16 %v862
        %v953 = vunpack.c.l.b16 %v878
        %v954 = vunpack.c.l.b16 %v863
        %v955 = vunpack.c.l.b16 %v879
        %v956 = vunpack.c.l.b16 %v864
        %v957 = vunpack.c.l.b16 %v880
        %v958 = vunpack.c.l.b16 %v865
        %v959 = vunpack.c.l.b16 %v881
        %v960 = vunpack.c.l.b16 %v866
        %v961 = vunpack.c.l.b16 %v882
        %v962 = vunpack.c.l.b16 %v867
        %v963 = vunpack.c.l.b16 %v883
        %v964 = vunpack.c.l.b16 %v868
        %v965 = vunpack.c.l.b16 %v884
        %v966 = vunpack.c.l.b16 %v869
        %v967 = vunpack.c.l.b16 %v885
        %v968 = vpack.c.b16 %v953, %v952
        %v969 = vpack.c.b16 %v955, %v954
        %v970 = vpack.c.b16 %v957, %v956
        %v971 = vpack.c.b16 %v959, %v958
        %v972 = vpack.c.b16 %v961, %v960
        %v973 = vpack.c.b16 %v963, %v962
        %v974 = vpack.c.b16 %v965, %v964
        %v975 = vpack.c.b16 %v967, %v966
        %v977 = vshrl.u32 %v968, 16
        %v979 = vshll.u32 %v968, 16
        %v981 = vrot.slane %v979, 1
        %v982 = vor.u32 %v977, %v981
        %v984 = vshrl.u32 %v969, 16
        %v986 = vshll.u32 %v969, 16
        %v988 = vrot.slane %v986, 1
        %v989 = vor.u32 %v984, %v988
        %v991 = vshrl.u32 %v970, 16
        %v993 = vshll.u32 %v970, 16
        %v995 = vrot.slane %v993, 1
        %v996 = vor.u32 %v991, %v995
        %v998 = vshrl.u32 %v971, 16
        %v1000 = vshll.u32 %v971, 16
        %v1002 = vrot.slane %v1000, 1
        %v1003 = vor.u32 %v998, %v1002
        %v1005 = vshrl.u32 %v972, 16
        %v1007 = vshll.u32 %v972, 16
        %v1009 = vrot.slane %v1007, 1
        %v1010 = vor.u32 %v1005, %v1009
        %v1012 = vshrl.u32 %v973, 16
        %v1014 = vshll.u32 %v973, 16
        %v1016 = vrot.slane %v1014, 1
        %v1017 = vor.u32 %v1012, %v1016
        %v1019 = vshrl.u32 %v974, 16
        %v1021 = vshll.u32 %v974, 16
        %v1023 = vrot.slane %v1021, 1
        %v1024 = vor.u32 %v1019, %v1023
        %v1026 = vshrl.u32 %v975, 16
        %v1028 = vshll.u32 %v975, 16
        %v1030 = vrot.slane %v1028, 1
        %v1031 = vor.u32 %v1026, %v1030
        %v1048 = vunpack.c.l.b16 %v886
        %v1049 = vunpack.c.l.b16 %v902
        %v1050 = vunpack.c.l.b16 %v887
        %v1051 = vunpack.c.l.b16 %v903
        %v1052 = vunpack.c.l.b16 %v888
        %v1053 = vunpack.c.l.b16 %v904
        %v1054 = vunpack.c.l.b16 %v889
        %v1055 = vunpack.c.l.b16 %v905
        %v1056 = vunpack.c.l.b16 %v890
        %v1057 = vunpack.c.l.b16 %v906
        %v1058 = vunpack.c.l.b16 %v891
        %v1059 = vunpack.c.l.b16 %v907
        %v1060 = vunpack.c.l.b16 %v892
        %v1061 = vunpack.c.l.b16 %v908
        %v1062 = vunpack.c.l.b16 %v893
        %v1063 = vunpack.c.l.b16 %v909
        %v1064 = vpack.c.b16 %v1049, %v1048
        %v1065 = vpack.c.b16 %v1051, %v1050
        %v1066 = vpack.c.b16 %v1053, %v1052
        %v1067 = vpack.c.b16 %v1055, %v1054
        %v1068 = vpack.c.b16 %v1057, %v1056
        %v1069 = vpack.c.b16 %v1059, %v1058
        %v1070 = vpack.c.b16 %v1061, %v1060
        %v1071 = vpack.c.b16 %v1063, %v1062
        %v1073 = vshrl.u32 %v1064, 16
        %v1075 = vshll.u32 %v1064, 16
        %v1077 = vrot.slane %v1075, 1
        %v1078 = vor.u32 %v1073, %v1077
        %v1080 = vshrl.u32 %v1065, 16
        %v1082 = vshll.u32 %v1065, 16
        %v1084 = vrot.slane %v1082, 1
        %v1085 = vor.u32 %v1080, %v1084
        %v1087 = vshrl.u32 %v1066, 16
        %v1089 = vshll.u32 %v1066, 16
        %v1091 = vrot.slane %v1089, 1
        %v1092 = vor.u32 %v1087, %v1091
        %v1094 = vshrl.u32 %v1067, 16
        %v1096 = vshll.u32 %v1067, 16
        %v1098 = vrot.slane %v1096, 1
        %v1099 = vor.u32 %v1094, %v1098
        %v1101 = vshrl.u32 %v1068, 16
        %v1103 = vshll.u32 %v1068, 16
        %v1105 = vrot.slane %v1103, 1
        %v1106 = vor.u32 %v1101, %v1105
        %v1108 = vshrl.u32 %v1069, 16
        %v1110 = vshll.u32 %v1069, 16
        %v1112 = vrot.slane %v1110, 1
        %v1113 = vor.u32 %v1108, %v1112
        %v1115 = vshrl.u32 %v1070, 16
        %v1117 = vshll.u32 %v1070, 16
        %v1119 = vrot.slane %v1117, 1
        %v1120 = vor.u32 %v1115, %v1119
        %v1122 = vshrl.u32 %v1071, 16
        %v1124 = vshll.u32 %v1071, 16
        %v1126 = vrot.slane %v1124, 1
        %v1127 = vor.u32 %v1122, %v1126
        %v1144 = vunpack.c.l.b16 %v911
        %v1145 = vunpack.c.l.b16 %v928
        %v1146 = vunpack.c.l.b16 %v912
        %v1147 = vunpack.c.l.b16 %v929
        %v1148 = vunpack.c.l.b16 %v913
        %v1149 = vunpack.c.l.b16 %v930
        %v1150 = vunpack.c.l.b16 %v914
        %v1151 = vunpack.c.l.b16 %v931
        %v1152 = vunpack.c.l.b16 %v915
        %v1153 = vunpack.c.l.b16 %v932
        %v1154 = vunpack.c.l.b16 %v916
        %v1155 = vunpack.c.l.b16 %v933
        %v1156 = vunpack.c.l.b16 %v917
        %v1157 = vunpack.c.l.b16 %v934
        %v1158 = vunpack.c.l.b16 %v918
        %v1159 = vunpack.c.l.b16 %v935
        %v1160 = vpack.c.b16 %v1145, %v1144
        %v1161 = vpack.c.b16 %v1147, %v1146
        %v1162 = vpack.c.b16 %v1149, %v1148
        %v1163 = vpack.c.b16 %v1151, %v1150
        %v1164 = vpack.c.b16 %v1153, %v1152
        %v1165 = vpack.c.b16 %v1155, %v1154
        %v1166 = vpack.c.b16 %v1157, %v1156
        %v1167 = vpack.c.b16 %v1159, %v1158
        %v1169 = vshrl.u32 %v1160, 16
        %v1171 = vshll.u32 %v1160, 16
        %v1173 = vrot.slane %v1171, 1
        %v1174 = vor.u32 %v1169, %v1173
        %v1176 = vshrl.u32 %v1161, 16
        %v1178 = vshll.u32 %v1161, 16
        %v1180 = vrot.slane %v1178, 1
        %v1181 = vor.u32 %v1176, %v1180
        %v1183 = vshrl.u32 %v1162, 16
        %v1185 = vshll.u32 %v1162, 16
        %v1187 = vrot.slane %v1185, 1
        %v1188 = vor.u32 %v1183, %v1187
        %v1190 = vshrl.u32 %v1163, 16
        %v1192 = vshll.u32 %v1163, 16
        %v1194 = vrot.slane %v1192, 1
        %v1195 = vor.u32 %v1190, %v1194
        %v1197 = vshrl.u32 %v1164, 16
        %v1199 = vshll.u32 %v1164, 16
        %v1201 = vrot.slane %v1199, 1
        %v1202 = vor.u32 %v1197, %v1201
        %v1204 = vshrl.u32 %v1165, 16
        %v1206 = vshll.u32 %v1165, 16
        %v1208 = vrot.slane %v1206, 1
        %v1209 = vor.u32 %v1204, %v1208
        %v1211 = vshrl.u32 %v1166, 16
        %v1213 = vshll.u32 %v1166, 16
        %v1215 = vrot.slane %v1213, 1
        %v1216 = vor.u32 %v1211, %v1215
        %v1218 = vshrl.u32 %v1167, 16
        %v1220 = vshll.u32 %v1167, 16
        %v1222 = vrot.slane %v1220, 1
        %v1223 = vor.u32 %v1218, %v1222
        %v1248 = vunpack.c.l.b16 %v870
        %v1249 = vunpack.c.l.b16 %v982
        %v1250 = vunpack.c.l.b16 %v894
        %v1251 = vunpack.c.l.b16 %v1078
        %v1252 = vunpack.c.l.b16 %v920
        %v1253 = vunpack.c.l.b16 %v1174
        %v1254 = vunpack.c.l.b16 %v871
        %v1255 = vunpack.c.l.b16 %v989
        %v1256 = vunpack.c.l.b16 %v895
        %v1257 = vunpack.c.l.b16 %v1085
        %v1258 = vunpack.c.l.b16 %v921
        %v1259 = vunpack.c.l.b16 %v1181
        %v1260 = vunpack.c.l.b16 %v872
        %v1261 = vunpack.c.l.b16 %v996
        %v1262 = vunpack.c.l.b16 %v896
        %v1263 = vunpack.c.l.b16 %v1092
        %v1264 = vunpack.c.l.b16 %v922
        %v1265 = vunpack.c.l.b16 %v1188
        %v1266 = vunpack.c.l.b16 %v873
        %v1267 = vunpack.c.l.b16 %v1003
        %v1268 = vunpack.c.l.b16 %v897
        %v1269 = vunpack.c.l.b16 %v1099
        %v1270 = vunpack.c.l.b16 %v923
        %v1271 = vunpack.c.l.b16 %v1195
        %v1272 = vunpack.c.l.b16 %v874
        %v1273 = vunpack.c.l.b16 %v1010
        %v1274 = vunpack.c.l.b16 %v898
        %v1275 = vunpack.c.l.b16 %v1106
        %v1276 = vunpack.c.l.b16 %v924
        %v1277 = vunpack.c.l.b16 %v1202
        %v1278 = vunpack.c.l.b16 %v875
        %v1279 = vunpack.c.l.b16 %v1017
        %v1280 = vunpack.c.l.b16 %v899
        %v1281 = vunpack.c.l.b16 %v1113
        %v1282 = vunpack.c.l.b16 %v925
        %v1283 = vunpack.c.l.b16 %v1209
        %v1284 = vunpack.c.l.b16 %v876
        %v1285 = vunpack.c.l.b16 %v1024
        %v1286 = vunpack.c.l.b16 %v900
        %v1287 = vunpack.c.l.b16 %v1120
        %v1288 = vunpack.c.l.b16 %v926
        %v1289 = vunpack.c.l.b16 %v1216
        %v1290 = vunpack.c.l.b16 %v877
        %v1291 = vunpack.c.l.b16 %v1031
        %v1292 = vunpack.c.l.b16 %v901
        %v1293 = vunpack.c.l.b16 %v1127
        %v1294 = vunpack.c.l.b16 %v927
        %v1295 = vunpack.c.l.b16 %v1223
        %v1296 = vld [vmem:[#allocation8] sm:$0xf]
        %v1297 = vld [vmem:[#allocation8 + $0x4] sm:$0xf]
        %v1298 = vld [vmem:[#allocation8 + $0x8] sm:$0xf]
        %v1299 = vld [vmem:[#allocation8 + $0xc] sm:$0xf]
        %v1300 = vld [vmem:[#allocation8 + $0x10] sm:$0xf]
        %v1301 = vld [vmem:[#allocation8 + $0x14] sm:$0xf]
        %v1302 = vld [vmem:[#allocation8 + $0x18] sm:$0xf]
        %v1303 = vld [vmem:[#allocation8 + $0x1c] sm:$0xf]
        %v1304 = vld [vmem:[#allocation8 + $0x20] sm:$0xf]
        %v1305 = vld [vmem:[#allocation8 + $0x24] sm:$0xf]
        %v1306 = vld [vmem:[#allocation8 + $0x28] sm:$0xf]
        %v1307 = vld [vmem:[#allocation8 + $0x2c] sm:$0xf]
        %v1308 = vld [vmem:[#allocation8 + $0x30] sm:$0xf]
        %v1309 = vld [vmem:[#allocation8 + $0x34] sm:$0xf]
        %v1310 = vld [vmem:[#allocation8 + $0x38] sm:$0xf]
        %v1311 = vld [vmem:[#allocation8 + $0x3c] sm:$0xf]
        %v1312 = vld [vmem:[#allocation8 + $0x40] sm:$0xf]
        %v1313 = vld [vmem:[#allocation8 + $0x44] sm:$0xf]
        %v1314 = vld [vmem:[#allocation8 + $0x48] sm:$0xf]
        %v1315 = vld [vmem:[#allocation8 + $0x4c] sm:$0xf]
        %v1316 = vld [vmem:[#allocation8 + $0x50] sm:$0xf]
        %v1317 = vld [vmem:[#allocation8 + $0x54] sm:$0xf]
        %v1318 = vld [vmem:[#allocation8 + $0x58] sm:$0xf]
        %v1319 = vld [vmem:[#allocation8 + $0x5c] sm:$0xf]
        %v1320 = vld [vmem:[#allocation8 + $0x60] sm:$0xf]
        %v1321 = vld [vmem:[#allocation8 + $0x64] sm:$0xf]
        %v1322 = vld [vmem:[#allocation8 + $0x68] sm:$0xf]
        %v1323 = vld [vmem:[#allocation8 + $0x6c] sm:$0xf]
        %v1324 = vld [vmem:[#allocation8 + $0x70] sm:$0xf]
        %v1325 = vld [vmem:[#allocation8 + $0x74] sm:$0xf]
        %v1326 = vld [vmem:[#allocation8 + $0x78] sm:$0xf]
        %v1327 = vld [vmem:[#allocation8 + $0x7c] sm:$0xf]
        %v1328 = vld [vmem:[#allocation8 + $0x80] sm:$0xf]
        %v1329 = vld [vmem:[#allocation8 + $0x84] sm:$0xf]
        %v1330 = vld [vmem:[#allocation8 + $0x88] sm:$0xf]
        %v1331 = vld [vmem:[#allocation8 + $0x8c] sm:$0xf]
        %v1332 = vld [vmem:[#allocation8 + $0x90] sm:$0xf]
        %v1333 = vld [vmem:[#allocation8 + $0x94] sm:$0xf]
        %v1334 = vld [vmem:[#allocation8 + $0x98] sm:$0xf]
        %v1335 = vld [vmem:[#allocation8 + $0x9c] sm:$0xf]
        %v1336 = vld [vmem:[#allocation8 + $0xa0] sm:$0xf]
        %v1337 = vld [vmem:[#allocation8 + $0xa4] sm:$0xf]
        %v1338 = vld [vmem:[#allocation8 + $0xa8] sm:$0xf]
        %v1339 = vld [vmem:[#allocation8 + $0xac] sm:$0xf]
        %v1340 = vld [vmem:[#allocation8 + $0xb0] sm:$0xf]
        %v1341 = vld [vmem:[#allocation8 + $0xb4] sm:$0xf]
        %v1342 = vld [vmem:[#allocation8 + $0xb8] sm:$0xf]
        %v1343 = vld [vmem:[#allocation8 + $0xbc] sm:$0xf]
        %v1344 = vld [vmem:[#allocation8 + $0xc0] sm:$0xf]
        %v1345 = vld [vmem:[#allocation8 + $0xc4] sm:$0xf]
        %v1346 = vld [vmem:[#allocation8 + $0xc8] sm:$0xf]
        %v1347 = vld [vmem:[#allocation8 + $0xcc] sm:$0xf]
        %v1348 = vld [vmem:[#allocation8 + $0xd0] sm:$0xf]
        %v1349 = vld [vmem:[#allocation8 + $0xd4] sm:$0xf]
        %v1350 = vld [vmem:[#allocation8 + $0xd8] sm:$0xf]
        %v1351 = vld [vmem:[#allocation8 + $0xdc] sm:$0xf]
        %v1352 = vld [vmem:[#allocation8 + $0xe0] sm:$0xf]
        %v1353 = vld [vmem:[#allocation8 + $0xe4] sm:$0xf]
        %v1354 = vld [vmem:[#allocation8 + $0xe8] sm:$0xf]
        %v1355 = vld [vmem:[#allocation8 + $0xec] sm:$0xf]
        %v1356 = vld [vmem:[#allocation8 + $0xf0] sm:$0xf]
        %v1357 = vld [vmem:[#allocation8 + $0xf4] sm:$0xf]
        %v1358 = vld [vmem:[#allocation8 + $0xf8] sm:$0xf]
        %v1359 = vld [vmem:[#allocation8 + $0xfc] sm:$0xf]
        %v1360 = vld [vmem:[#allocation8 + $0x100] sm:$0xf]
        %v1361 = vld [vmem:[#allocation8 + $0x104] sm:$0xf]
        %v1362 = vld [vmem:[#allocation8 + $0x108] sm:$0xf]
        %v1363 = vld [vmem:[#allocation8 + $0x10c] sm:$0xf]
        %v1364 = vld [vmem:[#allocation8 + $0x110] sm:$0xf]
        %v1365 = vld [vmem:[#allocation8 + $0x114] sm:$0xf]
        %v1366 = vld [vmem:[#allocation8 + $0x118] sm:$0xf]
        %v1367 = vld [vmem:[#allocation8 + $0x11c] sm:$0xf]
        %v1368 = vld [vmem:[#allocation8 + $0x120] sm:$0xf]
        %v1369 = vld [vmem:[#allocation8 + $0x124] sm:$0xf]
        %v1370 = vld [vmem:[#allocation8 + $0x128] sm:$0xf]
        %v1371 = vld [vmem:[#allocation8 + $0x12c] sm:$0xf]
        %v1372 = vld [vmem:[#allocation8 + $0x130] sm:$0xf]
        %v1373 = vld [vmem:[#allocation8 + $0x134] sm:$0xf]
        %v1374 = vld [vmem:[#allocation8 + $0x138] sm:$0xf]
        %v1375 = vld [vmem:[#allocation8 + $0x13c] sm:$0xf]
        %v1376 = vld [vmem:[#allocation8 + $0x140] sm:$0xf]
        %v1377 = vld [vmem:[#allocation8 + $0x144] sm:$0xf]
        %v1378 = vld [vmem:[#allocation8 + $0x148] sm:$0xf]
        %v1379 = vld [vmem:[#allocation8 + $0x14c] sm:$0xf]
        %v1380 = vld [vmem:[#allocation8 + $0x150] sm:$0xf]
        %v1381 = vld [vmem:[#allocation8 + $0x154] sm:$0xf]
        %v1382 = vld [vmem:[#allocation8 + $0x158] sm:$0xf]
        %v1383 = vld [vmem:[#allocation8 + $0x15c] sm:$0xf]
        %v1384 = vld [vmem:[#allocation8 + $0x160] sm:$0xf]
        %v1385 = vld [vmem:[#allocation8 + $0x164] sm:$0xf]
        %v1386 = vld [vmem:[#allocation8 + $0x168] sm:$0xf]
        %v1387 = vld [vmem:[#allocation8 + $0x16c] sm:$0xf]
        %v1388 = vld [vmem:[#allocation8 + $0x170] sm:$0xf]
        %v1389 = vld [vmem:[#allocation8 + $0x174] sm:$0xf]
        %v1390 = vld [vmem:[#allocation8 + $0x178] sm:$0xf]
        %v1391 = vld [vmem:[#allocation8 + $0x17c] sm:$0xf]
        %v1392 = vld [vmem:[#allocation8 + $0x180] sm:$0xf]
        %v1393 = vld [vmem:[#allocation8 + $0x184] sm:$0xf]
        %v1394 = vld [vmem:[#allocation8 + $0x188] sm:$0xf]
        %v1395 = vld [vmem:[#allocation8 + $0x18c] sm:$0xf]
        %v1396 = vld [vmem:[#allocation8 + $0x190] sm:$0xf]
        %v1397 = vld [vmem:[#allocation8 + $0x194] sm:$0xf]
        %v1398 = vld [vmem:[#allocation8 + $0x198] sm:$0xf]
        %v1399 = vld [vmem:[#allocation8 + $0x19c] sm:$0xf]
        %v1400 = vld [vmem:[#allocation8 + $0x1a0] sm:$0xf]
        %v1401 = vld [vmem:[#allocation8 + $0x1a4] sm:$0xf]
        %v1402 = vld [vmem:[#allocation8 + $0x1a8] sm:$0xf]
        %v1403 = vld [vmem:[#allocation8 + $0x1ac] sm:$0xf]
        %v1404 = vld [vmem:[#allocation8 + $0x1b0] sm:$0xf]
        %v1405 = vld [vmem:[#allocation8 + $0x1b4] sm:$0xf]
        %v1406 = vld [vmem:[#allocation8 + $0x1b8] sm:$0xf]
        %v1407 = vld [vmem:[#allocation8 + $0x1bc] sm:$0xf]
        %v1408 = vld [vmem:[#allocation8 + $0x1c0] sm:$0xf]
        %v1409 = vld [vmem:[#allocation8 + $0x1c4] sm:$0xf]
        %v1410 = vld [vmem:[#allocation8 + $0x1c8] sm:$0xf]
        %v1411 = vld [vmem:[#allocation8 + $0x1cc] sm:$0xf]
        %v1412 = vld [vmem:[#allocation8 + $0x1d0] sm:$0xf]
        %v1413 = vld [vmem:[#allocation8 + $0x1d4] sm:$0xf]
        %v1414 = vld [vmem:[#allocation8 + $0x1d8] sm:$0xf]
        %v1415 = vld [vmem:[#allocation8 + $0x1dc] sm:$0xf]
        %v1416 = vld [vmem:[#allocation8 + $0x1e0] sm:$0xf]
        %v1417 = vld [vmem:[#allocation8 + $0x1e4] sm:$0xf]
        %v1418 = vld [vmem:[#allocation8 + $0x1e8] sm:$0xf]
        %v1419 = vld [vmem:[#allocation8 + $0x1ec] sm:$0xf]
        %v1420 = vld [vmem:[#allocation8 + $0x1f0] sm:$0xf]
        %v1421 = vld [vmem:[#allocation8 + $0x1f4] sm:$0xf]
        %v1422 = vld [vmem:[#allocation8 + $0x1f8] sm:$0xf]
        %v1423 = vld [vmem:[#allocation8 + $0x1fc] sm:$0xf]
        %v1424 = vld [vmem:[#allocation8 + $0x200] sm:$0xf]
        %v1425 = vld [vmem:[#allocation8 + $0x204] sm:$0xf]
        %v1426 = vld [vmem:[#allocation8 + $0x208] sm:$0xf]
        %v1427 = vld [vmem:[#allocation8 + $0x20c] sm:$0xf]
        %v1428 = vld [vmem:[#allocation8 + $0x210] sm:$0xf]
        %v1429 = vld [vmem:[#allocation8 + $0x214] sm:$0xf]
        %v1430 = vld [vmem:[#allocation8 + $0x218] sm:$0xf]
        %v1431 = vld [vmem:[#allocation8 + $0x21c] sm:$0xf]
        %v1432 = vld [vmem:[#allocation8 + $0x220] sm:$0xf]
        %v1433 = vld [vmem:[#allocation8 + $0x224] sm:$0xf]
        %v1434 = vld [vmem:[#allocation8 + $0x228] sm:$0xf]
        %v1435 = vld [vmem:[#allocation8 + $0x22c] sm:$0xf]
        %v1436 = vld [vmem:[#allocation8 + $0x230] sm:$0xf]
        %v1437 = vld [vmem:[#allocation8 + $0x234] sm:$0xf]
        %v1438 = vld [vmem:[#allocation8 + $0x238] sm:$0xf]
        %v1439 = vld [vmem:[#allocation8 + $0x23c] sm:$0xf]
        %v1440 = vld [vmem:[#allocation10] sm:$0x1]
        %v1442 = vlaneseq
        %v1443 = vshrl.u32 %v1442, 7
        %v1444 = vsub.s32 0, %v1443
        %v1445 = vrot.slane %v1440, %v1444
        %v1447 = vpack.c.b16 %v954, %v952
        %v1448 = vpack.c.b16 %v1254, %v1248
        %v1449 = vpack.c.b16 %v1255, %v1249
        %v1450 = vpack.c.b16 %v1050, %v1048
        %v1451 = vpack.c.b16 %v1256, %v1250
        %v1452 = vpack.c.b16 %v1257, %v1251
        %v1453 = vpack.c.b16 %v1146, %v1144
        %v1454 = vpack.c.b16 %v1258, %v1252
        %v1455 = vpack.c.b16 %v1259, %v1253
        %v1456 = vpack.c.b16 %v958, %v956
        %v1457 = vpack.c.b16 %v1266, %v1260
        %v1458 = vpack.c.b16 %v1267, %v1261
        %v1459 = vpack.c.b16 %v1054, %v1052
        %v1460 = vpack.c.b16 %v1268, %v1262
        %v1461 = vpack.c.b16 %v1269, %v1263
        %v1462 = vpack.c.b16 %v1150, %v1148
        %v1463 = vpack.c.b16 %v1270, %v1264
        %v1464 = vpack.c.b16 %v1271, %v1265
        %v1465 = vpack.c.b16 %v962, %v960
        %v1466 = vpack.c.b16 %v1278, %v1272
        %v1467 = vpack.c.b16 %v1279, %v1273
        %v1468 = vpack.c.b16 %v1058, %v1056
        %v1469 = vpack.c.b16 %v1280, %v1274
        %v1470 = vpack.c.b16 %v1281, %v1275
        %v1471 = vpack.c.b16 %v1154, %v1152
        %v1472 = vpack.c.b16 %v1282, %v1276
        %v1473 = vpack.c.b16 %v1283, %v1277
        %v1474 = vpack.c.b16 %v966, %v964
        %v1475 = vpack.c.b16 %v1290, %v1284
        %v1476 = vpack.c.b16 %v1291, %v1285
        %v1477 = vpack.c.b16 %v1062, %v1060
        %v1478 = vpack.c.b16 %v1292, %v1286
        %v1479 = vpack.c.b16 %v1293, %v1287
        %v1480 = vpack.c.b16 %v1158, %v1156
        %v1481 = vpack.c.b16 %v1294, %v1288
        %v1482 = vpack.c.b16 %v1295, %v1289
        %v1663 = vunpack.c.l.b16 %v1296
        %v1664 = vunpack.c.l.b16 %v1297
        %v1665 = vunpack.c.l.b16 %v1298
        %v1666 = vunpack.c.l.b16 %v1299
        %v1667 = vunpack.c.l.b16 %v1300
        %v1668 = vunpack.c.l.b16 %v1301
        %v1669 = vunpack.c.l.b16 %v1302
        %v1670 = vunpack.c.l.b16 %v1303
        %v1671 = vunpack.c.l.b16 %v1304
        %v1672 = vunpack.c.l.b16 %v1305
        %v1673 = vunpack.c.l.b16 %v1306
        %v1674 = vunpack.c.l.b16 %v1307
        %v1675 = vunpack.c.l.b16 %v1308
        %v1676 = vunpack.c.l.b16 %v1309
        %v1677 = vunpack.c.l.b16 %v1310
        %v1678 = vunpack.c.l.b16 %v1311
        %v1679 = vunpack.c.l.b16 %v1312
        %v1680 = vunpack.c.l.b16 %v1313
        %v1681 = vunpack.c.l.b16 %v1314
        %v1682 = vunpack.c.l.b16 %v1315
        %v1683 = vunpack.c.l.b16 %v1316
        %v1684 = vunpack.c.l.b16 %v1317
        %v1685 = vunpack.c.l.b16 %v1318
        %v1686 = vunpack.c.l.b16 %v1319
        %v1687 = vunpack.c.l.b16 %v1320
        %v1688 = vunpack.c.l.b16 %v1321
        %v1689 = vunpack.c.l.b16 %v1322
        %v1690 = vunpack.c.l.b16 %v1323
        %v1691 = vunpack.c.l.b16 %v1324
        %v1692 = vunpack.c.l.b16 %v1325
        %v1693 = vunpack.c.l.b16 %v1326
        %v1694 = vunpack.c.l.b16 %v1327
        %v1695 = vunpack.c.l.b16 %v1328
        %v1696 = vunpack.c.l.b16 %v1329
        %v1697 = vunpack.c.l.b16 %v1330
        %v1698 = vunpack.c.l.b16 %v1331
        %v1699 = vunpack.c.l.b16 %v1332
        %v1700 = vunpack.c.l.b16 %v1333
        %v1701 = vunpack.c.l.b16 %v1334
        %v1702 = vunpack.c.l.b16 %v1335
        %v1703 = vunpack.c.l.b16 %v1336
        %v1704 = vunpack.c.l.b16 %v1337
        %v1705 = vunpack.c.l.b16 %v1338
        %v1706 = vunpack.c.l.b16 %v1339
        %v1707 = vunpack.c.l.b16 %v1340
        %v1708 = vunpack.c.l.b16 %v1341
        %v1709 = vunpack.c.l.b16 %v1342
        %v1710 = vunpack.c.l.b16 %v1343
        %v1711 = vunpack.c.l.b16 %v1344
        %v1712 = vunpack.c.l.b16 %v1345
        %v1713 = vunpack.c.l.b16 %v1346
        %v1714 = vunpack.c.l.b16 %v1347
        %v1715 = vunpack.c.l.b16 %v1348
        %v1716 = vunpack.c.l.b16 %v1349
        %v1717 = vunpack.c.l.b16 %v1350
        %v1718 = vunpack.c.l.b16 %v1351
        %v1719 = vunpack.c.l.b16 %v1352
        %v1720 = vunpack.c.l.b16 %v1353
        %v1721 = vunpack.c.l.b16 %v1354
        %v1722 = vunpack.c.l.b16 %v1355
        %v1723 = vunpack.c.l.b16 %v1356
        %v1724 = vunpack.c.l.b16 %v1357
        %v1725 = vunpack.c.l.b16 %v1358
        %v1726 = vunpack.c.l.b16 %v1359
        %v1727 = vunpack.c.l.b16 %v1360
        %v1728 = vunpack.c.l.b16 %v1361
        %v1729 = vunpack.c.l.b16 %v1362
        %v1730 = vunpack.c.l.b16 %v1363
        %v1731 = vunpack.c.l.b16 %v1364
        %v1732 = vunpack.c.l.b16 %v1365
        %v1733 = vunpack.c.l.b16 %v1366
        %v1734 = vunpack.c.l.b16 %v1367
        %v1735 = vunpack.c.l.b16 %v1368
        %v1736 = vunpack.c.l.b16 %v1369
        %v1737 = vunpack.c.l.b16 %v1370
        %v1738 = vunpack.c.l.b16 %v1371
        %v1739 = vunpack.c.l.b16 %v1372
        %v1740 = vunpack.c.l.b16 %v1373
        %v1741 = vunpack.c.l.b16 %v1374
        %v1742 = vunpack.c.l.b16 %v1375
        %v1743 = vunpack.c.l.b16 %v1376
        %v1744 = vunpack.c.l.b16 %v1377
        %v1745 = vunpack.c.l.b16 %v1378
        %v1746 = vunpack.c.l.b16 %v1379
        %v1747 = vunpack.c.l.b16 %v1380
        %v1748 = vunpack.c.l.b16 %v1381
        %v1749 = vunpack.c.l.b16 %v1382
        %v1750 = vunpack.c.l.b16 %v1383
        %v1751 = vunpack.c.l.b16 %v1384
        %v1752 = vunpack.c.l.b16 %v1385
        %v1753 = vunpack.c.l.b16 %v1386
        %v1754 = vunpack.c.l.b16 %v1387
        %v1755 = vunpack.c.l.b16 %v1388
        %v1756 = vunpack.c.l.b16 %v1389
        %v1757 = vunpack.c.l.b16 %v1390
        %v1758 = vunpack.c.l.b16 %v1391
        %v1759 = vunpack.c.l.b16 %v1392
        %v1760 = vunpack.c.l.b16 %v1393
        %v1761 = vunpack.c.l.b16 %v1394
        %v1762 = vunpack.c.l.b16 %v1395
        %v1763 = vunpack.c.l.b16 %v1396
        %v1764 = vunpack.c.l.b16 %v1397
        %v1765 = vunpack.c.l.b16 %v1398
        %v1766 = vunpack.c.l.b16 %v1399
        %v1767 = vunpack.c.l.b16 %v1400
        %v1768 = vunpack.c.l.b16 %v1401
        %v1769 = vunpack.c.l.b16 %v1402
        %v1770 = vunpack.c.l.b16 %v1403
        %v1771 = vunpack.c.l.b16 %v1404
        %v1772 = vunpack.c.l.b16 %v1405
        %v1773 = vunpack.c.l.b16 %v1406
        %v1774 = vunpack.c.l.b16 %v1407
        %v1775 = vunpack.c.l.b16 %v1408
        %v1776 = vunpack.c.l.b16 %v1409
        %v1777 = vunpack.c.l.b16 %v1410
        %v1778 = vunpack.c.l.b16 %v1411
        %v1779 = vunpack.c.l.b16 %v1412
        %v1780 = vunpack.c.l.b16 %v1413
        %v1781 = vunpack.c.l.b16 %v1414
        %v1782 = vunpack.c.l.b16 %v1415
        %v1783 = vunpack.c.l.b16 %v1416
        %v1784 = vunpack.c.l.b16 %v1417
        %v1785 = vunpack.c.l.b16 %v1418
        %v1786 = vunpack.c.l.b16 %v1419
        %v1787 = vunpack.c.l.b16 %v1420
        %v1788 = vunpack.c.l.b16 %v1421
        %v1789 = vunpack.c.l.b16 %v1422
        %v1790 = vunpack.c.l.b16 %v1423
        %v1791 = vunpack.c.l.b16 %v1424
        %v1792 = vunpack.c.l.b16 %v1425
        %v1793 = vunpack.c.l.b16 %v1426
        %v1794 = vunpack.c.l.b16 %v1427
        %v1795 = vunpack.c.l.b16 %v1428
        %v1796 = vunpack.c.l.b16 %v1429
        %v1797 = vunpack.c.l.b16 %v1430
        %v1798 = vunpack.c.l.b16 %v1431
        %v1799 = vunpack.c.l.b16 %v1432
        %v1800 = vunpack.c.l.b16 %v1433
        %v1801 = vunpack.c.l.b16 %v1434
        %v1802 = vunpack.c.l.b16 %v1435
        %v1803 = vunpack.c.l.b16 %v1436
        %v1804 = vunpack.c.l.b16 %v1437
        %v1805 = vunpack.c.l.b16 %v1438
        %v1806 = vunpack.c.l.b16 %v1439
        %v1807 = vpack.c.b16 %v1664, %v1663
        %v1808 = vpack.c.b16 %v1666, %v1665
        %v1809 = vpack.c.b16 %v1668, %v1667
        %v1810 = vpack.c.b16 %v1670, %v1669
        %v1811 = vpack.c.b16 %v1672, %v1671
        %v1812 = vpack.c.b16 %v1674, %v1673
        %v1813 = vpack.c.b16 %v1676, %v1675
        %v1814 = vpack.c.b16 %v1678, %v1677
        %v1815 = vpack.c.b16 %v1680, %v1679
        %v1816 = vpack.c.b16 %v1682, %v1681
        %v1817 = vpack.c.b16 %v1684, %v1683
        %v1818 = vpack.c.b16 %v1686, %v1685
        %v1819 = vpack.c.b16 %v1688, %v1687
        %v1820 = vpack.c.b16 %v1690, %v1689
        %v1821 = vpack.c.b16 %v1692, %v1691
        %v1822 = vpack.c.b16 %v1694, %v1693
        %v1823 = vpack.c.b16 %v1696, %v1695
        %v1824 = vpack.c.b16 %v1698, %v1697
        %v1825 = vpack.c.b16 %v1700, %v1699
        %v1826 = vpack.c.b16 %v1702, %v1701
        %v1827 = vpack.c.b16 %v1704, %v1703
        %v1828 = vpack.c.b16 %v1706, %v1705
        %v1829 = vpack.c.b16 %v1708, %v1707
        %v1830 = vpack.c.b16 %v1710, %v1709
        %v1831 = vpack.c.b16 %v1712, %v1711
        %v1832 = vpack.c.b16 %v1714, %v1713
        %v1833 = vpack.c.b16 %v1716, %v1715
        %v1834 = vpack.c.b16 %v1718, %v1717
        %v1835 = vpack.c.b16 %v1720, %v1719
        %v1836 = vpack.c.b16 %v1722, %v1721
        %v1837 = vpack.c.b16 %v1724, %v1723
        %v1838 = vpack.c.b16 %v1726, %v1725
        %v1839 = vpack.c.b16 %v1728, %v1727
        %v1840 = vpack.c.b16 %v1730, %v1729
        %v1841 = vpack.c.b16 %v1732, %v1731
        %v1842 = vpack.c.b16 %v1734, %v1733
        %v1843 = vpack.c.b16 %v1736, %v1735
        %v1844 = vpack.c.b16 %v1738, %v1737
        %v1845 = vpack.c.b16 %v1740, %v1739
        %v1846 = vpack.c.b16 %v1742, %v1741
        %v1847 = vpack.c.b16 %v1744, %v1743
        %v1848 = vpack.c.b16 %v1746, %v1745
        %v1849 = vpack.c.b16 %v1748, %v1747
        %v1850 = vpack.c.b16 %v1750, %v1749
        %v1851 = vpack.c.b16 %v1752, %v1751
        %v1852 = vpack.c.b16 %v1754, %v1753
        %v1853 = vpack.c.b16 %v1756, %v1755
        %v1854 = vpack.c.b16 %v1758, %v1757
        %v1855 = vpack.c.b16 %v1760, %v1759
        %v1856 = vpack.c.b16 %v1762, %v1761
        %v1857 = vpack.c.b16 %v1764, %v1763
        %v1858 = vpack.c.b16 %v1766, %v1765
        %v1859 = vpack.c.b16 %v1768, %v1767
        %v1860 = vpack.c.b16 %v1770, %v1769
        %v1861 = vpack.c.b16 %v1772, %v1771
        %v1862 = vpack.c.b16 %v1774, %v1773
        %v1863 = vpack.c.b16 %v1776, %v1775
        %v1864 = vpack.c.b16 %v1778, %v1777
        %v1865 = vpack.c.b16 %v1780, %v1779
        %v1866 = vpack.c.b16 %v1782, %v1781
        %v1867 = vpack.c.b16 %v1784, %v1783
        %v1868 = vpack.c.b16 %v1786, %v1785
        %v1869 = vpack.c.b16 %v1788, %v1787
        %v1870 = vpack.c.b16 %v1790, %v1789
        %v1871 = vpack.c.b16 %v1792, %v1791
        %v1872 = vpack.c.b16 %v1794, %v1793
        %v1873 = vpack.c.b16 %v1796, %v1795
        %v1874 = vpack.c.b16 %v1798, %v1797
        %v1875 = vpack.c.b16 %v1800, %v1799
        %v1876 = vpack.c.b16 %v1802, %v1801
        %v1877 = vpack.c.b16 %v1804, %v1803
        %v1878 = vpack.c.b16 %v1806, %v1805
        %1951 = vmatprep.subr.bf16.mxu0 0
        %1952 = vmatpush1.bf16.msra.mxu0 %v1807
        %1953 = vmatprep.subr.bf16.mxu0 0
        %1954 = vmatpush1.bf16.msra.mxu0 %v1808
        %1955 = vmatprep.subr.bf16.mxu0 0
        %1956 = vmatpush1.bf16.msra.mxu0 %v1809
        %1957 = vmatprep.subr.bf16.mxu0 0
        %1958 = vmatpush1.bf16.msra.mxu0 %v1810
        %1959 = vmatprep.subr.bf16.mxu0 0
        %1960 = vmatpush1.bf16.msra.mxu0 %v1811
        %1961 = vmatprep.subr.bf16.mxu0 0
        %1962 = vmatpush1.bf16.msra.mxu0 %v1812
        %1963 = vmatprep.subr.bf16.mxu0 0
        %1964 = vmatpush1.bf16.msra.mxu0 %v1813
        %1965 = vmatprep.subr.bf16.mxu0 0
        %1966 = vmatpush1.bf16.msra.mxu0 %v1814
        %1967 = vmatprep.subr.bf16.mxu0 0
        %1968 = vmatpush1.bf16.msra.mxu0 %v1815
        %1969 = vmatprep.subr.bf16.mxu0 0
        %1970 = vmatpush1.bf16.msra.mxu0 %v1816
        %1971 = vmatprep.subr.bf16.mxu0 0
        %1972 = vmatpush1.bf16.msra.mxu0 %v1817
        %1973 = vmatprep.subr.bf16.mxu0 0
        %1974 = vmatpush1.bf16.msra.mxu0 %v1818
        %1975 = vmatprep.subr.bf16.mxu0 0
        %1976 = vmatpush1.bf16.msra.mxu0 %v1819
        %1977 = vmatprep.subr.bf16.mxu0 0
        %1978 = vmatpush1.bf16.msra.mxu0 %v1820
        %1979 = vmatprep.subr.bf16.mxu0 0
        %1980 = vmatpush1.bf16.msra.mxu0 %v1821
        %1981 = vmatprep.subr.bf16.mxu0 0
        %1982 = vmatpush1.bf16.msra.mxu0 %v1822
        %1983 = vmatprep.mubr.bf16.mxu0 %v1448
        %1984 = vmatmul.mubr.bf16.gmra.mrb[0].mxu0 %v1447
        %v1985 = vpop.f32.mrb[0].mxu0
        %v1986 = vadd.f32 %v1445, %v1985
        %v1987 = vpop.f32.mrb[0].mxu0
        %v1988 = vpop.f32.mrb[0].mxu0
        %v1989 = vadd.f32 %v1445, %v1988
        %v1990 = vpop.f32.mrb[0].mxu0
        %1991 = vmatprep.mubr.bf16.mxu0 %v1457
        %1992 = vmatmul.mubr.bf16.gmra.mrb[0].mxu0 %v1456
        %v1993 = vpop.f32.mrb[0].mxu0
        %v1994 = vadd.f32 %v1445, %v1993
        %v1995 = vpop.f32.mrb[0].mxu0
        %v1996 = vpop.f32.mrb[0].mxu0
        %v1997 = vadd.f32 %v1445, %v1996
        %v1998 = vpop.f32.mrb[0].mxu0
        %1999 = vmatprep.mubr.bf16.mxu0 %v1466
        %2000 = vmatmul.mubr.bf16.gmra.mrb[0].mxu0 %v1465
        %v2001 = vpop.f32.mrb[0].mxu0
        %v2002 = vadd.f32 %v1445, %v2001
        %v2003 = vpop.f32.mrb[0].mxu0
        %v2004 = vpop.f32.mrb[0].mxu0
        %v2005 = vadd.f32 %v1445, %v2004
        %v2006 = vpop.f32.mrb[0].mxu0
        %2007 = vmatprep.mubr.bf16.mxu0 %v1475
        %2008 = vmatmul.mubr.bf16.gmra.mrb[0].mxu0 %v1474
        %v2009 = vpop.f32.mrb[0].mxu0
        %v2010 = vadd.f32 %v1445, %v2009
        %v2011 = vpop.f32.mrb[0].mxu0
        %v2012 = vpop.f32.mrb[0].mxu0
        %v2013 = vadd.f32 %v1445, %v2012
        %v2014 = vpop.f32.mrb[0].mxu0
        %2015 = vdwg.mxu0
        %2016 = vmatprep.subr.bf16.mxu0 0
        %2017 = vmatpush1.bf16.msra.mxu0 %v1823
        %2018 = vmatprep.subr.bf16.mxu0 0
        %2019 = vmatpush1.bf16.msra.mxu0 %v1824
        %2020 = vmatprep.subr.bf16.mxu0 0
        %2021 = vmatpush1.bf16.msra.mxu0 %v1825
        %2022 = vmatprep.subr.bf16.mxu0 0
        %2023 = vmatpush1.bf16.msra.mxu0 %v1826
        %2024 = vmatprep.subr.bf16.mxu0 0
        %2025 = vmatpush1.bf16.msra.mxu0 %v1827
        %2026 = vmatprep.subr.bf16.mxu0 0
        %2027 = vmatpush1.bf16.msra.mxu0 %v1828
        %2028 = vmatprep.subr.bf16.mxu0 0
        %2029 = vmatpush1.bf16.msra.mxu0 %v1829
        %2030 = vmatprep.subr.bf16.mxu0 0
        %2031 = vmatpush1.bf16.msra.mxu0 %v1830
        %2032 = vmatprep.subr.bf16.mxu0 0
        %2033 = vmatpush1.bf16.msra.mxu0 %v1831
        %2034 = vmatprep.subr.bf16.mxu0 0
        %2035 = vmatpush1.bf16.msra.mxu0 %v1832
        %2036 = vmatprep.subr.bf16.mxu0 0
        %2037 = vmatpush1.bf16.msra.mxu0 %v1833
        %2038 = vmatprep.subr.bf16.mxu0 0
        %2039 = vmatpush1.bf16.msra.mxu0 %v1834
        %2040 = vmatprep.subr.bf16.mxu0 0
        %2041 = vmatpush1.bf16.msra.mxu0 %v1835
        %2042 = vmatprep.subr.bf16.mxu0 0
        %2043 = vmatpush1.bf16.msra.mxu0 %v1836
        %2044 = vmatprep.subr.bf16.mxu0 0
        %2045 = vmatpush1.bf16.msra.mxu0 %v1837
        %2046 = vmatprep.subr.bf16.mxu0 0
        %2047 = vmatpush1.bf16.msra.mxu0 %v1838
        %2048 = vmatprep.mubr.bf16.mxu0 %v1450
        %2049 = vmatmul.mubr.bf16.gmra.mrb[0].mxu0 %v1449
        %v2050 = vpop.f32.mrb[0].mxu0
        %v2051 = vadd.f32 %v1986, %v2050
        %v2052 = vpop.f32.mrb[0].mxu0
        %v2053 = vpop.f32.mrb[0].mxu0
        %v2054 = vadd.f32 %v1989, %v2053
        %v2055 = vpop.f32.mrb[0].mxu0
        %2056 = vmatprep.mubr.bf16.mxu0 %v1459
        %2057 = vmatmul.mubr.bf16.gmra.mrb[0].mxu0 %v1458
        %v2058 = vpop.f32.mrb[0].mxu0
        %v2059 = vadd.f32 %v1994, %v2058
        %v2060 = vpop.f32.mrb[0].mxu0
        %v2061 = vpop.f32.mrb[0].mxu0
        %v2062 = vadd.f32 %v1997, %v2061
        %v2063 = vpop.f32.mrb[0].mxu0
        %2064 = vmatprep.mubr.bf16.mxu0 %v1468
        %2065 = vmatmul.mubr.bf16.gmra.mrb[0].mxu0 %v1467
        %v2066 = vpop.f32.mrb[0].mxu0
        %v2067 = vadd.f32 %v2002, %v2066
        %v2068 = vpop.f32.mrb[0].mxu0
        %v2069 = vpop.f32.mrb[0].mxu0
        %v2070 = vadd.f32 %v2005, %v2069
        %v2071 = vpop.f32.mrb[0].mxu0
        %2072 = vmatprep.mubr.bf16.mxu0 %v1477
        %2073 = vmatmul.mubr.bf16.gmra.mrb[0].mxu0 %v1476
        %v2074 = vpop.f32.mrb[0].mxu0
        %v2075 = vadd.f32 %v2010, %v2074
        %v2076 = vpop.f32.mrb[0].mxu0
        %v2077 = vpop.f32.mrb[0].mxu0
        %v2078 = vadd.f32 %v2013, %v2077
        %v2079 = vpop.f32.mrb[0].mxu0
        %2080 = vdwg.mxu0
        %2081 = vmatprep.subr.bf16.mxu0 0
        %2082 = vmatpush1.bf16.msra.mxu0 %v1839
        %2083 = vmatprep.subr.bf16.mxu0 0
        %2084 = vmatpush1.bf16.msra.mxu0 %v1840
        %2085 = vmatprep.subr.bf16.mxu0 0
        %2086 = vmatpush1.bf16.msra.mxu0 %v1841
        %2087 = vmatprep.subr.bf16.mxu0 0
        %2088 = vmatpush1.bf16.msra.mxu0 %v1842
        %2089 = vmatprep.subr.bf16.mxu0 0
        %2090 = vmatpush1.bf16.msra.mxu0 %v1843
        %2091 = vmatprep.subr.bf16.mxu0 0
        %2092 = vmatpush1.bf16.msra.mxu0 %v1844
        %2093 = vmatprep.subr.bf16.mxu0 0
        %2094 = vmatpush1.bf16.msra.mxu0 %v1845
        %2095 = vmatprep.subr.bf16.mxu0 0
        %2096 = vmatpush1.bf16.msra.mxu0 %v1846
        %2097 = vmatprep.subr.bf16.mxu0 0
        %2098 = vmatpush1.bf16.msra.mxu0 %v1847
        %2099 = vmatprep.subr.bf16.mxu0 0
        %2100 = vmatpush1.bf16.msra.mxu0 %v1848
        %2101 = vmatprep.subr.bf16.mxu0 0
        %2102 = vmatpush1.bf16.msra.mxu0 %v1849
        %2103 = vmatprep.subr.bf16.mxu0 0
        %2104 = vmatpush1.bf16.msra.mxu0 %v1850
        %2105 = vmatprep.subr.bf16.mxu0 0
        %2106 = vmatpush1.bf16.msra.mxu0 %v1851
        %2107 = vmatprep.subr.bf16.mxu0 0
        %2108 = vmatpush1.bf16.msra.mxu0 %v1852
        %2109 = vmatprep.subr.bf16.mxu0 0
        %2110 = vmatpush1.bf16.msra.mxu0 %v1853
        %2111 = vmatprep.subr.bf16.mxu0 0
        %2112 = vmatpush1.bf16.msra.mxu0 %v1854
        %2113 = vmatprep.mubr.bf16.mxu0 %v1452
        %2114 = vmatmul.mubr.bf16.gmra.mrb[0].mxu0 %v1451
        %v2115 = vpop.f32.mrb[0].mxu0
        %v2116 = vadd.f32 %v2051, %v2115
        %v2117 = vpop.f32.mrb[0].mxu0
        %v2118 = vpop.f32.mrb[0].mxu0
        %v2119 = vadd.f32 %v2054, %v2118
        %v2120 = vpop.f32.mrb[0].mxu0
        %2121 = vmatprep.mubr.bf16.mxu0 %v1461
        %2122 = vmatmul.mubr.bf16.gmra.mrb[0].mxu0 %v1460
        %v2123 = vpop.f32.mrb[0].mxu0
        %v2124 = vadd.f32 %v2059, %v2123
        %v2125 = vpop.f32.mrb[0].mxu0
        %v2126 = vpop.f32.mrb[0].mxu0
        %v2127 = vadd.f32 %v2062, %v2126
        %v2128 = vpop.f32.mrb[0].mxu0
        %2129 = vmatprep.mubr.bf16.mxu0 %v1470
        %2130 = vmatmul.mubr.bf16.gmra.mrb[0].mxu0 %v1469
        %v2131 = vpop.f32.mrb[0].mxu0
        %v2132 = vadd.f32 %v2067, %v2131
        %v2133 = vpop.f32.mrb[0].mxu0
        %v2134 = vpop.f32.mrb[0].mxu0
        %v2135 = vadd.f32 %v2070, %v2134
        %v2136 = vpop.f32.mrb[0].mxu0
        %2137 = vmatprep.mubr.bf16.mxu0 %v1479
        %2138 = vmatmul.mubr.bf16.gmra.mrb[0].mxu0 %v1478
        %v2139 = vpop.f32.mrb[0].mxu0
        %v2140 = vadd.f32 %v2075, %v2139
        %v2141 = vpop.f32.mrb[0].mxu0
        %v2142 = vpop.f32.mrb[0].mxu0
        %v2143 = vadd.f32 %v2078, %v2142
        %v2144 = vpop.f32.mrb[0].mxu0
        %2145 = vdwg.mxu0
        %2146 = vmatprep.subr.bf16.mxu0 0
        %2147 = vmatpush1.bf16.msra.mxu0 %v1855
        %2148 = vmatprep.subr.bf16.mxu0 0
        %2149 = vmatpush1.bf16.msra.mxu0 %v1856
        %2150 = vmatprep.subr.bf16.mxu0 0
        %2151 = vmatpush1.bf16.msra.mxu0 %v1857
        %2152 = vmatprep.subr.bf16.mxu0 0
        %2153 = vmatpush1.bf16.msra.mxu0 %v1858
        %2154 = vmatprep.subr.bf16.mxu0 0
        %2155 = vmatpush1.bf16.msra.mxu0 %v1859
        %2156 = vmatprep.subr.bf16.mxu0 0
        %2157 = vmatpush1.bf16.msra.mxu0 %v1860
        %2158 = vmatprep.subr.bf16.mxu0 0
        %2159 = vmatpush1.bf16.msra.mxu0 %v1861
        %2160 = vmatprep.subr.bf16.mxu0 0
        %2161 = vmatpush1.bf16.msra.mxu0 %v1862
        %2162 = vmatprep.subr.bf16.mxu0 0
        %2163 = vmatpush1.bf16.msra.mxu0 %v1863
        %2164 = vmatprep.subr.bf16.mxu0 0
        %2165 = vmatpush1.bf16.msra.mxu0 %v1864
        %2166 = vmatprep.subr.bf16.mxu0 0
        %2167 = vmatpush1.bf16.msra.mxu0 %v1865
        %2168 = vmatprep.subr.bf16.mxu0 0
        %2169 = vmatpush1.bf16.msra.mxu0 %v1866
        %2170 = vmatprep.subr.bf16.mxu0 0
        %2171 = vmatpush1.bf16.msra.mxu0 %v1867
        %2172 = vmatprep.subr.bf16.mxu0 0
        %2173 = vmatpush1.bf16.msra.mxu0 %v1868
        %2174 = vmatprep.subr.bf16.mxu0 0
        %2175 = vmatpush1.bf16.msra.mxu0 %v1869
        %2176 = vmatprep.subr.bf16.mxu0 0
        %2177 = vmatpush1.bf16.msra.mxu0 %v1870
        %2178 = vmatprep.mubr.bf16.mxu0 %v1454
        %2179 = vmatmul.mubr.bf16.gmra.mrb[0].mxu0 %v1453
        %v2180 = vpop.f32.mrb[0].mxu0
        %v2181 = vadd.f32 %v2116, %v2180
        %v2182 = vpop.f32.mrb[0].mxu0
        %v2183 = vpop.f32.mrb[0].mxu0
        %v2184 = vadd.f32 %v2119, %v2183
        %v2185 = vpop.f32.mrb[0].mxu0
        %2186 = vmatprep.mubr.bf16.mxu0 %v1463
        %2187 = vmatmul.mubr.bf16.gmra.mrb[0].mxu0 %v1462
        %v2188 = vpop.f32.mrb[0].mxu0
        %v2189 = vadd.f32 %v2124, %v2188
        %v2190 = vpop.f32.mrb[0].mxu0
        %v2191 = vpop.f32.mrb[0].mxu0
        %v2192 = vadd.f32 %v2127, %v2191
        %v2193 = vpop.f32.mrb[0].mxu0
        %2194 = vmatprep.mubr.bf16.mxu0 %v1472
        %2195 = vmatmul.mubr.bf16.gmra.mrb[0].mxu0 %v1471
        %v2196 = vpop.f32.mrb[0].mxu0
        %v2197 = vadd.f32 %v2132, %v2196
        %v2198 = vpop.f32.mrb[0].mxu0
        %v2199 = vpop.f32.mrb[0].mxu0
        %v2200 = vadd.f32 %v2135, %v2199
        %v2201 = vpop.f32.mrb[0].mxu0
        %2202 = vmatprep.mubr.bf16.mxu0 %v1481
        %2203 = vmatmul.mubr.bf16.gmra.mrb[0].mxu0 %v1480
        %v2204 = vpop.f32.mrb[0].mxu0
        %v2205 = vadd.f32 %v2140, %v2204
        %v2206 = vpop.f32.mrb[0].mxu0
        %v2207 = vpop.f32.mrb[0].mxu0
        %v2208 = vadd.f32 %v2143, %v2207
        %v2209 = vpop.f32.mrb[0].mxu0
        %2210 = vdwg.mxu0
        %2211 = vmatprep.subr.bf16.mxu0 0
        %2212 = vmatpush1.bf16.msra.mxu0 %v1871
        %2213 = vmatprep.subr.bf16.mxu0 0
        %2214 = vmatpush1.bf16.msra.mxu0 %v1872
        %2215 = vmatprep.subr.bf16.mxu0 0
        %2216 = vmatpush1.bf16.msra.mxu0 %v1873
        %2217 = vmatprep.subr.bf16.mxu0 0
        %2218 = vmatpush1.bf16.msra.mxu0 %v1874
        %2219 = vmatprep.subr.bf16.mxu0 0
        %2220 = vmatpush1.bf16.msra.mxu0 %v1875
        %2221 = vmatprep.subr.bf16.mxu0 0
        %2222 = vmatpush1.bf16.msra.mxu0 %v1876
        %2223 = vmatprep.subr.bf16.mxu0 0
        %2224 = vmatpush1.bf16.msra.mxu0 %v1877
        %2225 = vmatprep.subr.bf16.mxu0 0
        %2226 = vmatpush1.bf16.msra.mxu0 %v1878
        %2227 = vmatprep.subr.bf16.mxu0 0
        %2228 = vmatpush1.bf16.msra.mxu0 0
        %2229 = vmatprep.subr.bf16.mxu0 0
        %2230 = vmatpush1.bf16.msra.mxu0 0
        %2231 = vmatprep.subr.bf16.mxu0 0
        %2232 = vmatpush1.bf16.msra.mxu0 0
        %2233 = vmatprep.subr.bf16.mxu0 0
        %2234 = vmatpush1.bf16.msra.mxu0 0
        %2235 = vmatprep.subr.bf16.mxu0 0
        %2236 = vmatpush1.bf16.msra.mxu0 0
        %2237 = vmatprep.subr.bf16.mxu0 0
        %2238 = vmatpush1.bf16.msra.mxu0 0
        %2239 = vmatprep.subr.bf16.mxu0 0
        %2240 = vmatpush1.bf16.msra.mxu0 0
        %2241 = vmatprep.subr.bf16.mxu0 0
        %2242 = vmatpush1.bf16.msra.mxu0 0
        %2243 = vmatprep.mubr.bf16.mxu0 0
        %2244 = vmatmul.mubr.bf16.gmra.mrb[0].mxu0 %v1455
        %v2245 = vpop.f32.mrb[0].mxu0
        %v2246 = vadd.f32 %v2181, %v2245
        %v2247 = vpop.f32.mrb[0].mxu0
        %v2248 = vpop.f32.mrb[0].mxu0
        %v2249 = vadd.f32 %v2184, %v2248
        %v2250 = vpop.f32.mrb[0].mxu0
        %2251 = vmatprep.mubr.bf16.mxu0 0
        %2252 = vmatmul.mubr.bf16.gmra.mrb[0].mxu0 %v1464
        %v2253 = vpop.f32.mrb[0].mxu0
        %v2254 = vadd.f32 %v2189, %v2253
        %v2255 = vpop.f32.mrb[0].mxu0
        %v2256 = vpop.f32.mrb[0].mxu0
        %v2257 = vadd.f32 %v2192, %v2256
        %v2258 = vpop.f32.mrb[0].mxu0
        %2259 = vmatprep.mubr.bf16.mxu0 0
        %2260 = vmatmul.mubr.bf16.gmra.mrb[0].mxu0 %v1473
        %v2261 = vpop.f32.mrb[0].mxu0
        %v2262 = vadd.f32 %v2197, %v2261
        %v2263 = vpop.f32.mrb[0].mxu0
        %v2264 = vpop.f32.mrb[0].mxu0
        %v2265 = vadd.f32 %v2200, %v2264
        %v2266 = vpop.f32.mrb[0].mxu0
        %2267 = vmatprep.mubr.bf16.mxu0 0
        %2268 = vmatmul.mubr.bf16.gmra.mrb[0].mxu0 %v1482
        %v2269 = vpop.f32.mrb[0].mxu0
        %v2270 = vadd.f32 %v2205, %v2269
        %v2271 = vpop.f32.mrb[0].mxu0
        %v2272 = vpop.f32.mrb[0].mxu0
        %v2273 = vadd.f32 %v2208, %v2272
        %v2274 = vpop.f32.mrb[0].mxu0
        %2275 = vdwg.mxu0
        %v2276 = vmax.f32 %v2246, 0.0
        %v2277 = vmax.f32 %v2249, 0.0
        %v2278 = vmax.f32 %v2254, 0.0
        %v2279 = vmax.f32 %v2257, 0.0
        %v2280 = vmax.f32 %v2262, 0.0
        %v2281 = vmax.f32 %v2265, 0.0
        %v2282 = vmax.f32 %v2270, 0.0
        %v2283 = vmax.f32 %v2273, 0.0
        %2284 = vst [vmem:[#allocation4] sm:$0xf] 0
        %2285 = vst [vmem:[#allocation4 + $0x4] sm:$0x1] 0
        %s2286 = scalar_lea.vmem [#allocation4], 72
        %2287 = vst [vmem:[%s2286] sm:$0xf] 0
        %2288 = vst [vmem:[%s2286 + $0x4] sm:$0x1] 0
        %s2289 = scalar_lea.vmem [#allocation4], 8
        %v2290 = vld [vmem:[%s2289] sm:$0x1]
        %v2291 = vsel %vm382, 0, %v2290
        %2292 = vst [vmem:[%s2289] sm:$0x1] %v2291
        %v2293 = vld [vmem:[%s2289 + $0x8] sm:$0x1]
        %v2294 = vsel %vm382, 0, %v2293
        %2295 = vst [vmem:[%s2289 + $0x8] sm:$0x1] %v2294
        %v2296 = vld [vmem:[%s2289 + $0x10] sm:$0x1]
        %v2297 = vsel %vm382, 0, %v2296
        %2298 = vst [vmem:[%s2289 + $0x10] sm:$0x1] %v2297
        %v2299 = vld [vmem:[%s2289 + $0x18] sm:$0x1]
        %v2300 = vsel %vm382, 0, %v2299
        %2301 = vst [vmem:[%s2289 + $0x18] sm:$0x1] %v2300
        %v2302 = vld [vmem:[%s2289 + $0x20] sm:$0x1]
        %v2303 = vsel %vm382, 0, %v2302
        %2304 = vst [vmem:[%s2289 + $0x20] sm:$0x1] %v2303
        %v2305 = vld [vmem:[%s2289 + $0x28] sm:$0x1]
        %v2306 = vsel %vm382, 0, %v2305
        %2307 = vst [vmem:[%s2289 + $0x28] sm:$0x1] %v2306
        %v2308 = vld [vmem:[%s2289 + $0x30] sm:$0x1]
        %v2309 = vsel %vm382, 0, %v2308
        %2310 = vst [vmem:[%s2289 + $0x30] sm:$0x1] %v2309
        %v2311 = vld [vmem:[%s2289 + $0x38] sm:$0x1]
        %v2312 = vsel %vm382, 0, %v2311
        %2313 = vst [vmem:[%s2289 + $0x38] sm:$0x1] %v2312
        %vm2314 = vmand %vm380, %vm697
        %v2315 = vld [vmem:[%s2289 + $0x4] sm:$0x1]
        %v2316 = vsel %vm2314, 0, %v2315
        %2317 = vst [vmem:[%s2289 + $0x4] sm:$0x1] %v2316
        %v2318 = vld [vmem:[%s2289 + $0xc] sm:$0x1]
        %v2319 = vsel %vm2314, 0, %v2318
        %2320 = vst [vmem:[%s2289 + $0xc] sm:$0x1] %v2319
        %v2321 = vld [vmem:[%s2289 + $0x14] sm:$0x1]
        %v2322 = vsel %vm2314, 0, %v2321
        %2323 = vst [vmem:[%s2289 + $0x14] sm:$0x1] %v2322
        %v2324 = vld [vmem:[%s2289 + $0x1c] sm:$0x1]
        %v2325 = vsel %vm2314, 0, %v2324
        %2326 = vst [vmem:[%s2289 + $0x1c] sm:$0x1] %v2325
        %v2327 = vld [vmem:[%s2289 + $0x24] sm:$0x1]
        %v2328 = vsel %vm2314, 0, %v2327
        %2329 = vst [vmem:[%s2289 + $0x24] sm:$0x1] %v2328
        %v2330 = vld [vmem:[%s2289 + $0x2c] sm:$0x1]
        %v2331 = vsel %vm2314, 0, %v2330
        %2332 = vst [vmem:[%s2289 + $0x2c] sm:$0x1] %v2331
        %v2333 = vld [vmem:[%s2289 + $0x34] sm:$0x1]
        %v2334 = vsel %vm2314, 0, %v2333
        %2335 = vst [vmem:[%s2289 + $0x34] sm:$0x1] %v2334
        %v2336 = vld [vmem:[%s2289 + $0x3c] sm:$0x1]
        %v2337 = vsel %vm2314, 0, %v2336
        %2338 = vst [vmem:[%s2289 + $0x3c] sm:$0x1] %v2337
        %v2339 = vpack.c.bf16 %v2277, %v2276
        %v2340 = vpack.c.bf16 %v2279, %v2278
        %v2341 = vpack.c.bf16 %v2281, %v2280
        %v2342 = vpack.c.bf16 %v2283, %v2282
        %v2347 = vunpack.c.l.b16 %v2339
        %v2348 = vunpack.c.h.b16 %v2339
        %v2349 = vunpack.c.l.b16 %v2340
        %v2350 = vunpack.c.h.b16 %v2340
        %v2351 = vunpack.c.l.b16 %v2341
        %v2352 = vunpack.c.h.b16 %v2341
        %v2353 = vunpack.c.l.b16 %v2342
        %v2354 = vunpack.c.h.b16 %v2342
        %v2355 = vpack.c.b16 %v2347, %v2347
        %v2356 = vpack.c.b16 %v2348, %v2348
        %v2357 = vpack.c.b16 %v2349, %v2349
        %v2358 = vpack.c.b16 %v2350, %v2350
        %v2359 = vpack.c.b16 %v2351, %v2351
        %v2360 = vpack.c.b16 %v2352, %v2352
        %v2361 = vpack.c.b16 %v2353, %v2353
        %v2362 = vpack.c.b16 %v2354, %v2354
        %v2364 = vshrl.u32 %v2355, 16
        %v2366 = vrot.slane %v2364, 7
        %v2367 = vshll.u32 %v2355, 16
        %v2369 = vor.u32 %v2366, %v2367
        %v2370 = vrot.slane %v2366, 4
        %v2372 = vshrl.u32 %v2356, 16
        %v2374 = vrot.slane %v2372, 7
        %v2375 = vshll.u32 %v2356, 16
        %v2377 = vor.u32 %v2374, %v2375
        %v2378 = vrot.slane %v2374, 4
        %v2380 = vshrl.u32 %v2357, 16
        %v2382 = vrot.slane %v2380, 7
        %v2383 = vshll.u32 %v2357, 16
        %v2385 = vor.u32 %v2382, %v2383
        %v2386 = vrot.slane %v2382, 4
        %v2388 = vshrl.u32 %v2358, 16
        %v2390 = vrot.slane %v2388, 7
        %v2391 = vshll.u32 %v2358, 16
        %v2393 = vor.u32 %v2390, %v2391
        %v2394 = vrot.slane %v2390, 4
        %v2396 = vshrl.u32 %v2359, 16
        %v2398 = vrot.slane %v2396, 7
        %v2399 = vshll.u32 %v2359, 16
        %v2401 = vor.u32 %v2398, %v2399
        %v2402 = vrot.slane %v2398, 4
        %v2404 = vshrl.u32 %v2360, 16
        %v2406 = vrot.slane %v2404, 7
        %v2407 = vshll.u32 %v2360, 16
        %v2409 = vor.u32 %v2406, %v2407
        %v2410 = vrot.slane %v2406, 4
        %v2412 = vshrl.u32 %v2361, 16
        %v2414 = vrot.slane %v2412, 7
        %v2415 = vshll.u32 %v2361, 16
        %v2417 = vor.u32 %v2414, %v2415
        %v2418 = vrot.slane %v2414, 4
        %v2420 = vshrl.u32 %v2362, 16
        %v2422 = vrot.slane %v2420, 7
        %v2423 = vshll.u32 %v2362, 16
        %v2425 = vor.u32 %v2422, %v2423
        %v2426 = vrot.slane %v2422, 4
        %v2443 = vld [vmem:[%s2289] sm:$0xf]
        %v2444 = vsel %vm698, %v2369, %v2443
        %2445 = vst [vmem:[%s2289] sm:$0xf] %v2444
        %v2446 = vld [vmem:[%s2289 + $0x4] sm:$0x1]
        %v2447 = vsel %vm382, %v2370, %v2446
        %2448 = vst [vmem:[%s2289 + $0x4] sm:$0x1] %v2447
        %v2449 = vld [vmem:[%s2289 + $0x8] sm:$0xf]
        %v2450 = vsel %vm698, %v2377, %v2449
        %2451 = vst [vmem:[%s2289 + $0x8] sm:$0xf] %v2450
        %v2452 = vld [vmem:[%s2289 + $0xc] sm:$0x1]
        %v2453 = vsel %vm382, %v2378, %v2452
        %2454 = vst [vmem:[%s2289 + $0xc] sm:$0x1] %v2453
        %v2455 = vld [vmem:[%s2289 + $0x10] sm:$0xf]
        %v2456 = vsel %vm698, %v2385, %v2455
        %2457 = vst [vmem:[%s2289 + $0x10] sm:$0xf] %v2456
        %v2458 = vld [vmem:[%s2289 + $0x14] sm:$0x1]
        %v2459 = vsel %vm382, %v2386, %v2458
        %2460 = vst [vmem:[%s2289 + $0x14] sm:$0x1] %v2459
        %v2461 = vld [vmem:[%s2289 + $0x18] sm:$0xf]
        %v2462 = vsel %vm698, %v2393, %v2461
        %2463 = vst [vmem:[%s2289 + $0x18] sm:$0xf] %v2462
        %v2464 = vld [vmem:[%s2289 + $0x1c] sm:$0x1]
        %v2465 = vsel %vm382, %v2394, %v2464
        %2466 = vst [vmem:[%s2289 + $0x1c] sm:$0x1] %v2465
        %v2467 = vld [vmem:[%s2289 + $0x20] sm:$0xf]
        %v2468 = vsel %vm698, %v2401, %v2467
        %2469 = vst [vmem:[%s2289 + $0x20] sm:$0xf] %v2468
        %v2470 = vld [vmem:[%s2289 + $0x24] sm:$0x1]
        %v2471 = vsel %vm382, %v2402, %v2470
        %2472 = vst [vmem:[%s2289 + $0x24] sm:$0x1] %v2471
        %v2473 = vld [vmem:[%s2289 + $0x28] sm:$0xf]
        %v2474 = vsel %vm698, %v2409, %v2473
        %2475 = vst [vmem:[%s2289 + $0x28] sm:$0xf] %v2474
        %v2476 = vld [vmem:[%s2289 + $0x2c] sm:$0x1]
        %v2477 = vsel %vm382, %v2410, %v2476
        %2478 = vst [vmem:[%s2289 + $0x2c] sm:$0x1] %v2477
        %v2479 = vld [vmem:[%s2289 + $0x30] sm:$0xf]
        %v2480 = vsel %vm698, %v2417, %v2479
        %2481 = vst [vmem:[%s2289 + $0x30] sm:$0xf] %v2480
        %v2482 = vld [vmem:[%s2289 + $0x34] sm:$0x1]
        %v2483 = vsel %vm382, %v2418, %v2482
        %2484 = vst [vmem:[%s2289 + $0x34] sm:$0x1] %v2483
        %v2485 = vld [vmem:[%s2289 + $0x38] sm:$0xf]
        %v2486 = vsel %vm698, %v2425, %v2485
        %2487 = vst [vmem:[%s2289 + $0x38] sm:$0xf] %v2486
        %v2488 = vld [vmem:[%s2289 + $0x3c] sm:$0x1]
        %v2489 = vsel %vm382, %v2426, %v2488
        %2490 = vst [vmem:[%s2289 + $0x3c] sm:$0x1] %v2489
        %v2491 = vld [vmem:[#allocation4] sm:$0xf]
        %v2492 = vld [vmem:[#allocation4 + $0x8] sm:$0xf]
        %v2493 = vld [vmem:[#allocation4 + $0x10] sm:$0xf]
        %v2494 = vld [vmem:[#allocation4 + $0x18] sm:$0xf]
        %v2495 = vld [vmem:[#allocation4 + $0x20] sm:$0xf]
        %v2496 = vld [vmem:[#allocation4 + $0x28] sm:$0xf]
        %v2497 = vld [vmem:[#allocation4 + $0x30] sm:$0xf]
        %v2498 = vld [vmem:[#allocation4 + $0x38] sm:$0xf]
        %v2499 = vld [vmem:[#allocation4 + $0x4] sm:$0x1]
        %v2500 = vld [vmem:[#allocation4 + $0xc] sm:$0x1]
        %v2501 = vld [vmem:[#allocation4 + $0x14] sm:$0x1]
        %v2502 = vld [vmem:[#allocation4 + $0x1c] sm:$0x1]
        %v2503 = vld [vmem:[#allocation4 + $0x24] sm:$0x1]
        %v2504 = vld [vmem:[#allocation4 + $0x2c] sm:$0x1]
        %v2505 = vld [vmem:[#allocation4 + $0x34] sm:$0x1]
        %v2506 = vld [vmem:[#allocation4 + $0x3c] sm:$0x1]
        %v2507 = vld [vmem:[#allocation4] sm:$0xe]
        %v2508 = vld [vmem:[#allocation4 + $0x8] sm:$0xe]
        %v2509 = vld [vmem:[#allocation4 + $0x10] sm:$0xe]
        %v2510 = vld [vmem:[#allocation4 + $0x18] sm:$0xe]
        %v2511 = vld [vmem:[#allocation4 + $0x20] sm:$0xe]
        %v2512 = vld [vmem:[#allocation4 + $0x28] sm:$0xe]
        %v2513 = vld [vmem:[#allocation4 + $0x30] sm:$0xe]
        %v2514 = vld [vmem:[#allocation4 + $0x38] sm:$0xe]
        %v2515 = vld [vmem:[%s2289] sm:$0xf]
        %v2516 = vld [vmem:[%s2289 + $0x8] sm:$0xf]
        %v2517 = vld [vmem:[%s2289 + $0x10] sm:$0xf]
        %v2518 = vld [vmem:[%s2289 + $0x18] sm:$0xf]
        %v2519 = vld [vmem:[%s2289 + $0x20] sm:$0xf]
        %v2520 = vld [vmem:[%s2289 + $0x28] sm:$0xf]
        %v2521 = vld [vmem:[%s2289 + $0x30] sm:$0xf]
        %v2522 = vld [vmem:[%s2289 + $0x38] sm:$0xf]
        %v2523 = vld [vmem:[%s2289 + $0x4] sm:$0x1]
        %v2524 = vld [vmem:[%s2289 + $0xc] sm:$0x1]
        %v2525 = vld [vmem:[%s2289 + $0x14] sm:$0x1]
        %v2526 = vld [vmem:[%s2289 + $0x1c] sm:$0x1]
        %v2527 = vld [vmem:[%s2289 + $0x24] sm:$0x1]
        %v2528 = vld [vmem:[%s2289 + $0x2c] sm:$0x1]
        %v2529 = vld [vmem:[%s2289 + $0x34] sm:$0x1]
        %v2530 = vld [vmem:[%s2289 + $0x3c] sm:$0x1]
        %v2531 = vld [vmem:[%s2289] sm:$0xe]
        %v2532 = vld [vmem:[%s2289 + $0x8] sm:$0xe]
        %v2533 = vld [vmem:[%s2289 + $0x10] sm:$0xe]
        %v2534 = vld [vmem:[%s2289 + $0x18] sm:$0xe]
        %v2535 = vld [vmem:[%s2289 + $0x20] sm:$0xe]
        %v2536 = vld [vmem:[%s2289 + $0x28] sm:$0xe]
        %v2537 = vld [vmem:[%s2289 + $0x30] sm:$0xe]
        %v2538 = vld [vmem:[%s2289 + $0x38] sm:$0xe]
        %s2539 = scalar_lea.vmem [#allocation4], 16
        %v2540 = vld [vmem:[%s2539] sm:$0xf]
        %v2541 = vld [vmem:[%s2539 + $0x8] sm:$0xf]
        %v2542 = vld [vmem:[%s2539 + $0x10] sm:$0xf]
        %v2543 = vld [vmem:[%s2539 + $0x18] sm:$0xf]
        %v2544 = vld [vmem:[%s2539 + $0x20] sm:$0xf]
        %v2545 = vld [vmem:[%s2539 + $0x28] sm:$0xf]
        %v2546 = vld [vmem:[%s2539 + $0x30] sm:$0xf]
        %v2547 = vld [vmem:[%s2539 + $0x38] sm:$0xf]
        %v2548 = vld [vmem:[%s2539 + $0x4] sm:$0x1]
        %v2549 = vld [vmem:[%s2539 + $0xc] sm:$0x1]
        %v2550 = vld [vmem:[%s2539 + $0x14] sm:$0x1]
        %v2551 = vld [vmem:[%s2539 + $0x1c] sm:$0x1]
        %v2552 = vld [vmem:[%s2539 + $0x24] sm:$0x1]
        %v2553 = vld [vmem:[%s2539 + $0x2c] sm:$0x1]
        %v2554 = vld [vmem:[%s2539 + $0x34] sm:$0x1]
        %v2555 = vld [vmem:[%s2539 + $0x3c] sm:$0x1]
        %v2556 = vld [vmem:[%s2539] sm:$0xe]
        %v2557 = vld [vmem:[%s2539 + $0x8] sm:$0xe]
        %v2558 = vld [vmem:[%s2539 + $0x10] sm:$0xe]
        %v2559 = vld [vmem:[%s2539 + $0x18] sm:$0xe]
        %v2560 = vld [vmem:[%s2539 + $0x20] sm:$0xe]
        %v2561 = vld [vmem:[%s2539 + $0x28] sm:$0xe]
        %v2562 = vld [vmem:[%s2539 + $0x30] sm:$0xe]
        %v2563 = vld [vmem:[%s2539 + $0x38] sm:$0xe]
        %v2580 = vunpack.c.l.b16 %v2491
        %v2581 = vunpack.c.l.b16 %v2499
        %v2582 = vunpack.c.l.b16 %v2492
        %v2583 = vunpack.c.l.b16 %v2500
        %v2584 = vunpack.c.l.b16 %v2493
        %v2585 = vunpack.c.l.b16 %v2501
        %v2586 = vunpack.c.l.b16 %v2494
        %v2587 = vunpack.c.l.b16 %v2502
        %v2588 = vunpack.c.l.b16 %v2495
        %v2589 = vunpack.c.l.b16 %v2503
        %v2590 = vunpack.c.l.b16 %v2496
        %v2591 = vunpack.c.l.b16 %v2504
        %v2592 = vunpack.c.l.b16 %v2497
        %v2593 = vunpack.c.l.b16 %v2505
        %v2594 = vunpack.c.l.b16 %v2498
        %v2595 = vunpack.c.l.b16 %v2506
        %v2596 = vpack.c.b16 %v2581, %v2580
        %v2597 = vpack.c.b16 %v2583, %v2582
        %v2598 = vpack.c.b16 %v2585, %v2584
        %v2599 = vpack.c.b16 %v2587, %v2586
        %v2600 = vpack.c.b16 %v2589, %v2588
        %v2601 = vpack.c.b16 %v2591, %v2590
        %v2602 = vpack.c.b16 %v2593, %v2592
        %v2603 = vpack.c.b16 %v2595, %v2594
        %v2605 = vshrl.u32 %v2596, 16
        %v2607 = vshll.u32 %v2596, 16
        %v2609 = vrot.slane %v2607, 1
        %v2610 = vor.u32 %v2605, %v2609
        %v2612 = vshrl.u32 %v2597, 16
        %v2614 = vshll.u32 %v2597, 16
        %v2616 = vrot.slane %v2614, 1
        %v2617 = vor.u32 %v2612, %v2616
        %v2619 = vshrl.u32 %v2598, 16
        %v2621 = vshll.u32 %v2598, 16
        %v2623 = vrot.slane %v2621, 1
        %v2624 = vor.u32 %v2619, %v2623
        %v2626 = vshrl.u32 %v2599, 16
        %v2628 = vshll.u32 %v2599, 16
        %v2630 = vrot.slane %v2628, 1
        %v2631 = vor.u32 %v2626, %v2630
        %v2633 = vshrl.u32 %v2600, 16
        %v2635 = vshll.u32 %v2600, 16
        %v2637 = vrot.slane %v2635, 1
        %v2638 = vor.u32 %v2633, %v2637
        %v2640 = vshrl.u32 %v2601, 16
        %v2642 = vshll.u32 %v2601, 16
        %v2644 = vrot.slane %v2642, 1
        %v2645 = vor.u32 %v2640, %v2644
        %v2647 = vshrl.u32 %v2602, 16
        %v2649 = vshll.u32 %v2602, 16
        %v2651 = vrot.slane %v2649, 1
        %v2652 = vor.u32 %v2647, %v2651
        %v2654 = vshrl.u32 %v2603, 16
        %v2656 = vshll.u32 %v2603, 16
        %v2658 = vrot.slane %v2656, 1
        %v2659 = vor.u32 %v2654, %v2658
        %v2668 = vunpack.c.l.b16 %v2507
        %v2669 = vunpack.c.l.b16 %v2508
        %v2670 = vunpack.c.l.b16 %v2509
        %v2671 = vunpack.c.l.b16 %v2510
        %v2672 = vunpack.c.l.b16 %v2511
        %v2673 = vunpack.c.l.b16 %v2512
        %v2674 = vunpack.c.l.b16 %v2513
        %v2675 = vunpack.c.l.b16 %v2514
        %v2676 = vpack.c.b16 %v2581, %v2668
        %v2677 = vpack.c.b16 %v2583, %v2669
        %v2678 = vpack.c.b16 %v2585, %v2670
        %v2679 = vpack.c.b16 %v2587, %v2671
        %v2680 = vpack.c.b16 %v2589, %v2672
        %v2681 = vpack.c.b16 %v2591, %v2673
        %v2682 = vpack.c.b16 %v2593, %v2674
        %v2683 = vpack.c.b16 %v2595, %v2675
        %v2684 = vrot.slane %v2676, 1
        %v2685 = vrot.slane %v2677, 1
        %v2686 = vrot.slane %v2678, 1
        %v2687 = vrot.slane %v2679, 1
        %v2688 = vrot.slane %v2680, 1
        %v2689 = vrot.slane %v2681, 1
        %v2690 = vrot.slane %v2682, 1
        %v2691 = vrot.slane %v2683, 1
        %v2708 = vunpack.c.l.b16 %v2515
        %v2709 = vunpack.c.l.b16 %v2523
        %v2710 = vunpack.c.l.b16 %v2516
        %v2711 = vunpack.c.l.b16 %v2524
        %v2712 = vunpack.c.l.b16 %v2517
        %v2713 = vunpack.c.l.b16 %v2525
        %v2714 = vunpack.c.l.b16 %v2518
        %v2715 = vunpack.c.l.b16 %v2526
        %v2716 = vunpack.c.l.b16 %v2519
        %v2717 = vunpack.c.l.b16 %v2527
        %v2718 = vunpack.c.l.b16 %v2520
        %v2719 = vunpack.c.l.b16 %v2528
        %v2720 = vunpack.c.l.b16 %v2521
        %v2721 = vunpack.c.l.b16 %v2529
        %v2722 = vunpack.c.l.b16 %v2522
        %v2723 = vunpack.c.l.b16 %v2530
        %v2724 = vpack.c.b16 %v2709, %v2708
        %v2725 = vpack.c.b16 %v2711, %v2710
        %v2726 = vpack.c.b16 %v2713, %v2712
        %v2727 = vpack.c.b16 %v2715, %v2714
        %v2728 = vpack.c.b16 %v2717, %v2716
        %v2729 = vpack.c.b16 %v2719, %v2718
        %v2730 = vpack.c.b16 %v2721, %v2720
        %v2731 = vpack.c.b16 %v2723, %v2722
        %v2733 = vshrl.u32 %v2724, 16
        %v2735 = vshll.u32 %v2724, 16
        %v2737 = vrot.slane %v2735, 1
        %v2738 = vor.u32 %v2733, %v2737
        %v2740 = vshrl.u32 %v2725, 16
        %v2742 = vshll.u32 %v2725, 16
        %v2744 = vrot.slane %v2742, 1
        %v2745 = vor.u32 %v2740, %v2744
        %v2747 = vshrl.u32 %v2726, 16
        %v2749 = vshll.u32 %v2726, 16
        %v2751 = vrot.slane %v2749, 1
        %v2752 = vor.u32 %v2747, %v2751
        %v2754 = vshrl.u32 %v2727, 16
        %v2756 = vshll.u32 %v2727, 16
        %v2758 = vrot.slane %v2756, 1
        %v2759 = vor.u32 %v2754, %v2758
        %v2761 = vshrl.u32 %v2728, 16
        %v2763 = vshll.u32 %v2728, 16
        %v2765 = vrot.slane %v2763, 1
        %v2766 = vor.u32 %v2761, %v2765
        %v2768 = vshrl.u32 %v2729, 16
        %v2770 = vshll.u32 %v2729, 16
        %v2772 = vrot.slane %v2770, 1
        %v2773 = vor.u32 %v2768, %v2772
        %v2775 = vshrl.u32 %v2730, 16
        %v2777 = vshll.u32 %v2730, 16
        %v2779 = vrot.slane %v2777, 1
        %v2780 = vor.u32 %v2775, %v2779
        %v2782 = vshrl.u32 %v2731, 16
        %v2784 = vshll.u32 %v2731, 16
        %v2786 = vrot.slane %v2784, 1
        %v2787 = vor.u32 %v2782, %v2786
        %v2796 = vunpack.c.l.b16 %v2531
        %v2797 = vunpack.c.l.b16 %v2532
        %v2798 = vunpack.c.l.b16 %v2533
        %v2799 = vunpack.c.l.b16 %v2534
        %v2800 = vunpack.c.l.b16 %v2535
        %v2801 = vunpack.c.l.b16 %v2536
        %v2802 = vunpack.c.l.b16 %v2537
        %v2803 = vunpack.c.l.b16 %v2538
        %v2804 = vpack.c.b16 %v2709, %v2796
        %v2805 = vpack.c.b16 %v2711, %v2797
        %v2806 = vpack.c.b16 %v2713, %v2798
        %v2807 = vpack.c.b16 %v2715, %v2799
        %v2808 = vpack.c.b16 %v2717, %v2800
        %v2809 = vpack.c.b16 %v2719, %v2801
        %v2810 = vpack.c.b16 %v2721, %v2802
        %v2811 = vpack.c.b16 %v2723, %v2803
        %v2812 = vrot.slane %v2804, 1
        %v2813 = vrot.slane %v2805, 1
        %v2814 = vrot.slane %v2806, 1
        %v2815 = vrot.slane %v2807, 1
        %v2816 = vrot.slane %v2808, 1
        %v2817 = vrot.slane %v2809, 1
        %v2818 = vrot.slane %v2810, 1
        %v2819 = vrot.slane %v2811, 1
        %v2836 = vunpack.c.l.b16 %v2540
        %v2837 = vunpack.c.l.b16 %v2548
        %v2838 = vunpack.c.l.b16 %v2541
        %v2839 = vunpack.c.l.b16 %v2549
        %v2840 = vunpack.c.l.b16 %v2542
        %v2841 = vunpack.c.l.b16 %v2550
        %v2842 = vunpack.c.l.b16 %v2543
        %v2843 = vunpack.c.l.b16 %v2551
        %v2844 = vunpack.c.l.b16 %v2544
        %v2845 = vunpack.c.l.b16 %v2552
        %v2846 = vunpack.c.l.b16 %v2545
        %v2847 = vunpack.c.l.b16 %v2553
        %v2848 = vunpack.c.l.b16 %v2546
        %v2849 = vunpack.c.l.b16 %v2554
        %v2850 = vunpack.c.l.b16 %v2547
        %v2851 = vunpack.c.l.b16 %v2555
        %v2852 = vpack.c.b16 %v2837, %v2836
        %v2853 = vpack.c.b16 %v2839, %v2838
        %v2854 = vpack.c.b16 %v2841, %v2840
        %v2855 = vpack.c.b16 %v2843, %v2842
        %v2856 = vpack.c.b16 %v2845, %v2844
        %v2857 = vpack.c.b16 %v2847, %v2846
        %v2858 = vpack.c.b16 %v2849, %v2848
        %v2859 = vpack.c.b16 %v2851, %v2850
        %v2861 = vshrl.u32 %v2852, 16
        %v2863 = vshll.u32 %v2852, 16
        %v2865 = vrot.slane %v2863, 1
        %v2866 = vor.u32 %v2861, %v2865
        %v2868 = vshrl.u32 %v2853, 16
        %v2870 = vshll.u32 %v2853, 16
        %v2872 = vrot.slane %v2870, 1
        %v2873 = vor.u32 %v2868, %v2872
        %v2875 = vshrl.u32 %v2854, 16
        %v2877 = vshll.u32 %v2854, 16
        %v2879 = vrot.slane %v2877, 1
        %v2880 = vor.u32 %v2875, %v2879
        %v2882 = vshrl.u32 %v2855, 16
        %v2884 = vshll.u32 %v2855, 16
        %v2886 = vrot.slane %v2884, 1
        %v2887 = vor.u32 %v2882, %v2886
        %v2889 = vshrl.u32 %v2856, 16
        %v2891 = vshll.u32 %v2856, 16
        %v2893 = vrot.slane %v2891, 1
        %v2894 = vor.u32 %v2889, %v2893
        %v2896 = vshrl.u32 %v2857, 16
        %v2898 = vshll.u32 %v2857, 16
        %v2900 = vrot.slane %v2898, 1
        %v2901 = vor.u32 %v2896, %v2900
        %v2903 = vshrl.u32 %v2858, 16
        %v2905 = vshll.u32 %v2858, 16
        %v2907 = vrot.slane %v2905, 1
        %v2908 = vor.u32 %v2903, %v2907
        %v2910 = vshrl.u32 %v2859, 16
        %v2912 = vshll.u32 %v2859, 16
        %v2914 = vrot.slane %v2912, 1
        %v2915 = vor.u32 %v2910, %v2914
        %v2924 = vunpack.c.l.b16 %v2556
        %v2925 = vunpack.c.l.b16 %v2557
        %v2926 = vunpack.c.l.b16 %v2558
        %v2927 = vunpack.c.l.b16 %v2559
        %v2928 = vunpack.c.l.b16 %v2560
        %v2929 = vunpack.c.l.b16 %v2561
        %v2930 = vunpack.c.l.b16 %v2562
        %v2931 = vunpack.c.l.b16 %v2563
        %v2932 = vpack.c.b16 %v2837, %v2924
        %v2933 = vpack.c.b16 %v2839, %v2925
        %v2934 = vpack.c.b16 %v2841, %v2926
        %v2935 = vpack.c.b16 %v2843, %v2927
        %v2936 = vpack.c.b16 %v2845, %v2928
        %v2937 = vpack.c.b16 %v2847, %v2929
        %v2938 = vpack.c.b16 %v2849, %v2930
        %v2939 = vpack.c.b16 %v2851, %v2931
        %v2940 = vrot.slane %v2932, 1
        %v2941 = vrot.slane %v2933, 1
        %v2942 = vrot.slane %v2934, 1
        %v2943 = vrot.slane %v2935, 1
        %v2944 = vrot.slane %v2936, 1
        %v2945 = vrot.slane %v2937, 1
        %v2946 = vrot.slane %v2938, 1
        %v2947 = vrot.slane %v2939, 1
        %v2948 = vunpack.c.l.b16 %v2610
        %v2949 = vunpack.c.l.b16 %v2684
        %v2950 = vunpack.c.l.b16 %v2738
        %v2951 = vunpack.c.l.b16 %v2812
        %v2952 = vunpack.c.l.b16 %v2866
        %v2953 = vunpack.c.l.b16 %v2940
        %v2954 = vunpack.c.l.b16 %v2617
        %v2955 = vunpack.c.l.b16 %v2685
        %v2956 = vunpack.c.l.b16 %v2745
        %v2957 = vunpack.c.l.b16 %v2813
        %v2958 = vunpack.c.l.b16 %v2873
        %v2959 = vunpack.c.l.b16 %v2941
        %v2960 = vunpack.c.l.b16 %v2624
        %v2961 = vunpack.c.l.b16 %v2686
        %v2962 = vunpack.c.l.b16 %v2752
        %v2963 = vunpack.c.l.b16 %v2814
        %v2964 = vunpack.c.l.b16 %v2880
        %v2965 = vunpack.c.l.b16 %v2942
        %v2966 = vunpack.c.l.b16 %v2631
        %v2967 = vunpack.c.l.b16 %v2687
        %v2968 = vunpack.c.l.b16 %v2759
        %v2969 = vunpack.c.l.b16 %v2815
        %v2970 = vunpack.c.l.b16 %v2887
        %v2971 = vunpack.c.l.b16 %v2943
        %v2972 = vunpack.c.l.b16 %v2638
        %v2973 = vunpack.c.l.b16 %v2688
        %v2974 = vunpack.c.l.b16 %v2766
        %v2975 = vunpack.c.l.b16 %v2816
        %v2976 = vunpack.c.l.b16 %v2894
        %v2977 = vunpack.c.l.b16 %v2944
        %v2978 = vunpack.c.l.b16 %v2645
        %v2979 = vunpack.c.l.b16 %v2689
        %v2980 = vunpack.c.l.b16 %v2773
        %v2981 = vunpack.c.l.b16 %v2817
        %v2982 = vunpack.c.l.b16 %v2901
        %v2983 = vunpack.c.l.b16 %v2945
        %v2984 = vunpack.c.l.b16 %v2652
        %v2985 = vunpack.c.l.b16 %v2690
        %v2986 = vunpack.c.l.b16 %v2780
        %v2987 = vunpack.c.l.b16 %v2818
        %v2988 = vunpack.c.l.b16 %v2908
        %v2989 = vunpack.c.l.b16 %v2946
        %v2990 = vunpack.c.l.b16 %v2659
        %v2991 = vunpack.c.l.b16 %v2691
        %v2992 = vunpack.c.l.b16 %v2787
        %v2993 = vunpack.c.l.b16 %v2819
        %v2994 = vunpack.c.l.b16 %v2915
        %v2995 = vunpack.c.l.b16 %v2947
        %v2996 = vld [vmem:[#allocation11] sm:$0xf]
        %v2997 = vld [vmem:[#allocation11 + $0x4] sm:$0xf]
        %v2998 = vld [vmem:[#allocation11 + $0x8] sm:$0xf]
        %v2999 = vld [vmem:[#allocation11 + $0xc] sm:$0xf]
        %v3000 = vld [vmem:[#allocation11 + $0x10] sm:$0xf]
        %v3001 = vld [vmem:[#allocation11 + $0x14] sm:$0xf]
        %v3002 = vld [vmem:[#allocation11 + $0x18] sm:$0xf]
        %v3003 = vld [vmem:[#allocation11 + $0x1c] sm:$0xf]
        %v3004 = vld [vmem:[#allocation11 + $0x20] sm:$0xf]
        %v3005 = vld [vmem:[#allocation11 + $0x24] sm:$0xf]
        %v3006 = vld [vmem:[#allocation11 + $0x28] sm:$0xf]
        %v3007 = vld [vmem:[#allocation11 + $0x2c] sm:$0xf]
        %v3008 = vld [vmem:[#allocation11 + $0x30] sm:$0xf]
        %v3009 = vld [vmem:[#allocation11 + $0x34] sm:$0xf]
        %v3010 = vld [vmem:[#allocation11 + $0x38] sm:$0xf]
        %v3011 = vld [vmem:[#allocation11 + $0x3c] sm:$0xf]
        %v3012 = vld [vmem:[#allocation11 + $0x40] sm:$0xf]
        %v3013 = vld [vmem:[#allocation11 + $0x44] sm:$0xf]
        %v3014 = vld [vmem:[#allocation11 + $0x48] sm:$0xf]
        %v3015 = vld [vmem:[#allocation11 + $0x4c] sm:$0xf]
        %v3016 = vld [vmem:[#allocation11 + $0x50] sm:$0xf]
        %v3017 = vld [vmem:[#allocation11 + $0x54] sm:$0xf]
        %v3018 = vld [vmem:[#allocation11 + $0x58] sm:$0xf]
        %v3019 = vld [vmem:[#allocation11 + $0x5c] sm:$0xf]
        %v3020 = vld [vmem:[#allocation11 + $0x60] sm:$0xf]
        %v3021 = vld [vmem:[#allocation11 + $0x64] sm:$0xf]
        %v3022 = vld [vmem:[#allocation11 + $0x68] sm:$0xf]
        %v3023 = vld [vmem:[#allocation11 + $0x6c] sm:$0xf]
        %v3024 = vld [vmem:[#allocation11 + $0x70] sm:$0xf]
        %v3025 = vld [vmem:[#allocation11 + $0x74] sm:$0xf]
        %v3026 = vld [vmem:[#allocation11 + $0x78] sm:$0xf]
        %v3027 = vld [vmem:[#allocation11 + $0x7c] sm:$0xf]
        %v3028 = vld [vmem:[#allocation11 + $0x80] sm:$0xf]
        %v3029 = vld [vmem:[#allocation11 + $0x84] sm:$0xf]
        %v3030 = vld [vmem:[#allocation11 + $0x88] sm:$0xf]
        %v3031 = vld [vmem:[#allocation11 + $0x8c] sm:$0xf]
        %v3032 = vld [vmem:[#allocation11 + $0x90] sm:$0xf]
        %v3033 = vld [vmem:[#allocation11 + $0x94] sm:$0xf]
        %v3034 = vld [vmem:[#allocation11 + $0x98] sm:$0xf]
        %v3035 = vld [vmem:[#allocation11 + $0x9c] sm:$0xf]
        %v3036 = vld [vmem:[#allocation11 + $0xa0] sm:$0xf]
        %v3037 = vld [vmem:[#allocation11 + $0xa4] sm:$0xf]
        %v3038 = vld [vmem:[#allocation11 + $0xa8] sm:$0xf]
        %v3039 = vld [vmem:[#allocation11 + $0xac] sm:$0xf]
        %v3040 = vld [vmem:[#allocation11 + $0xb0] sm:$0xf]
        %v3041 = vld [vmem:[#allocation11 + $0xb4] sm:$0xf]
        %v3042 = vld [vmem:[#allocation11 + $0xb8] sm:$0xf]
        %v3043 = vld [vmem:[#allocation11 + $0xbc] sm:$0xf]
        %v3044 = vld [vmem:[#allocation11 + $0xc0] sm:$0xf]
        %v3045 = vld [vmem:[#allocation11 + $0xc4] sm:$0xf]
        %v3046 = vld [vmem:[#allocation11 + $0xc8] sm:$0xf]
        %v3047 = vld [vmem:[#allocation11 + $0xcc] sm:$0xf]
        %v3048 = vld [vmem:[#allocation11 + $0xd0] sm:$0xf]
        %v3049 = vld [vmem:[#allocation11 + $0xd4] sm:$0xf]
        %v3050 = vld [vmem:[#allocation11 + $0xd8] sm:$0xf]
        %v3051 = vld [vmem:[#allocation11 + $0xdc] sm:$0xf]
        %v3052 = vld [vmem:[#allocation11 + $0xe0] sm:$0xf]
        %v3053 = vld [vmem:[#allocation11 + $0xe4] sm:$0xf]
        %v3054 = vld [vmem:[#allocation11 + $0xe8] sm:$0xf]
        %v3055 = vld [vmem:[#allocation11 + $0xec] sm:$0xf]
        %v3056 = vld [vmem:[#allocation11 + $0xf0] sm:$0xf]
        %v3057 = vld [vmem:[#allocation11 + $0xf4] sm:$0xf]
        %v3058 = vld [vmem:[#allocation11 + $0xf8] sm:$0xf]
        %v3059 = vld [vmem:[#allocation11 + $0xfc] sm:$0xf]
        %v3060 = vld [vmem:[#allocation11 + $0x100] sm:$0xf]
        %v3061 = vld [vmem:[#allocation11 + $0x104] sm:$0xf]
        %v3062 = vld [vmem:[#allocation11 + $0x108] sm:$0xf]
        %v3063 = vld [vmem:[#allocation11 + $0x10c] sm:$0xf]
        %v3064 = vld [vmem:[#allocation11 + $0x110] sm:$0xf]
        %v3065 = vld [vmem:[#allocation11 + $0x114] sm:$0xf]
        %v3066 = vld [vmem:[#allocation11 + $0x118] sm:$0xf]
        %v3067 = vld [vmem:[#allocation11 + $0x11c] sm:$0xf]
        %v3068 = vld [vmem:[#allocation11 + $0x120] sm:$0xf]
        %v3069 = vld [vmem:[#allocation11 + $0x124] sm:$0xf]
        %v3070 = vld [vmem:[#allocation11 + $0x128] sm:$0xf]
        %v3071 = vld [vmem:[#allocation11 + $0x12c] sm:$0xf]
        %v3072 = vld [vmem:[#allocation11 + $0x130] sm:$0xf]
        %v3073 = vld [vmem:[#allocation11 + $0x134] sm:$0xf]
        %v3074 = vld [vmem:[#allocation11 + $0x138] sm:$0xf]
        %v3075 = vld [vmem:[#allocation11 + $0x13c] sm:$0xf]
        %v3076 = vld [vmem:[#allocation11 + $0x140] sm:$0xf]
        %v3077 = vld [vmem:[#allocation11 + $0x144] sm:$0xf]
        %v3078 = vld [vmem:[#allocation11 + $0x148] sm:$0xf]
        %v3079 = vld [vmem:[#allocation11 + $0x14c] sm:$0xf]
        %v3080 = vld [vmem:[#allocation11 + $0x150] sm:$0xf]
        %v3081 = vld [vmem:[#allocation11 + $0x154] sm:$0xf]
        %v3082 = vld [vmem:[#allocation11 + $0x158] sm:$0xf]
        %v3083 = vld [vmem:[#allocation11 + $0x15c] sm:$0xf]
        %v3084 = vld [vmem:[#allocation11 + $0x160] sm:$0xf]
        %v3085 = vld [vmem:[#allocation11 + $0x164] sm:$0xf]
        %v3086 = vld [vmem:[#allocation11 + $0x168] sm:$0xf]
        %v3087 = vld [vmem:[#allocation11 + $0x16c] sm:$0xf]
        %v3088 = vld [vmem:[#allocation11 + $0x170] sm:$0xf]
        %v3089 = vld [vmem:[#allocation11 + $0x174] sm:$0xf]
        %v3090 = vld [vmem:[#allocation11 + $0x178] sm:$0xf]
        %v3091 = vld [vmem:[#allocation11 + $0x17c] sm:$0xf]
        %v3092 = vld [vmem:[#allocation11 + $0x180] sm:$0xf]
        %v3093 = vld [vmem:[#allocation11 + $0x184] sm:$0xf]
        %v3094 = vld [vmem:[#allocation11 + $0x188] sm:$0xf]
        %v3095 = vld [vmem:[#allocation11 + $0x18c] sm:$0xf]
        %v3096 = vld [vmem:[#allocation11 + $0x190] sm:$0xf]
        %v3097 = vld [vmem:[#allocation11 + $0x194] sm:$0xf]
        %v3098 = vld [vmem:[#allocation11 + $0x198] sm:$0xf]
        %v3099 = vld [vmem:[#allocation11 + $0x19c] sm:$0xf]
        %v3100 = vld [vmem:[#allocation11 + $0x1a0] sm:$0xf]
        %v3101 = vld [vmem:[#allocation11 + $0x1a4] sm:$0xf]
        %v3102 = vld [vmem:[#allocation11 + $0x1a8] sm:$0xf]
        %v3103 = vld [vmem:[#allocation11 + $0x1ac] sm:$0xf]
        %v3104 = vld [vmem:[#allocation11 + $0x1b0] sm:$0xf]
        %v3105 = vld [vmem:[#allocation11 + $0x1b4] sm:$0xf]
        %v3106 = vld [vmem:[#allocation11 + $0x1b8] sm:$0xf]
        %v3107 = vld [vmem:[#allocation11 + $0x1bc] sm:$0xf]
        %v3108 = vld [vmem:[#allocation11 + $0x1c0] sm:$0xf]
        %v3109 = vld [vmem:[#allocation11 + $0x1c4] sm:$0xf]
        %v3110 = vld [vmem:[#allocation11 + $0x1c8] sm:$0xf]
        %v3111 = vld [vmem:[#allocation11 + $0x1cc] sm:$0xf]
        %v3112 = vld [vmem:[#allocation11 + $0x1d0] sm:$0xf]
        %v3113 = vld [vmem:[#allocation11 + $0x1d4] sm:$0xf]
        %v3114 = vld [vmem:[#allocation11 + $0x1d8] sm:$0xf]
        %v3115 = vld [vmem:[#allocation11 + $0x1dc] sm:$0xf]
        %v3116 = vld [vmem:[#allocation11 + $0x1e0] sm:$0xf]
        %v3117 = vld [vmem:[#allocation11 + $0x1e4] sm:$0xf]
        %v3118 = vld [vmem:[#allocation11 + $0x1e8] sm:$0xf]
        %v3119 = vld [vmem:[#allocation11 + $0x1ec] sm:$0xf]
        %v3120 = vld [vmem:[#allocation11 + $0x1f0] sm:$0xf]
        %v3121 = vld [vmem:[#allocation11 + $0x1f4] sm:$0xf]
        %v3122 = vld [vmem:[#allocation11 + $0x1f8] sm:$0xf]
        %v3123 = vld [vmem:[#allocation11 + $0x1fc] sm:$0xf]
        %v3124 = vld [vmem:[#allocation11 + $0x200] sm:$0xf]
        %v3125 = vld [vmem:[#allocation11 + $0x204] sm:$0xf]
        %v3126 = vld [vmem:[#allocation11 + $0x208] sm:$0xf]
        %v3127 = vld [vmem:[#allocation11 + $0x20c] sm:$0xf]
        %v3128 = vld [vmem:[#allocation11 + $0x210] sm:$0xf]
        %v3129 = vld [vmem:[#allocation11 + $0x214] sm:$0xf]
        %v3130 = vld [vmem:[#allocation11 + $0x218] sm:$0xf]
        %v3131 = vld [vmem:[#allocation11 + $0x21c] sm:$0xf]
        %v3132 = vld [vmem:[#allocation11 + $0x220] sm:$0xf]
        %v3133 = vld [vmem:[#allocation11 + $0x224] sm:$0xf]
        %v3134 = vld [vmem:[#allocation11 + $0x228] sm:$0xf]
        %v3135 = vld [vmem:[#allocation11 + $0x22c] sm:$0xf]
        %v3136 = vld [vmem:[#allocation11 + $0x230] sm:$0xf]
        %v3137 = vld [vmem:[#allocation11 + $0x234] sm:$0xf]
        %v3138 = vld [vmem:[#allocation11 + $0x238] sm:$0xf]
        %v3139 = vld [vmem:[#allocation11 + $0x23c] sm:$0xf]
        %v3140 = vld [vmem:[#allocation13] sm:$0x1]
        %v3142 = vlaneseq
        %v3143 = vshrl.u32 %v3142, 7
        %v3144 = vsub.s32 0, %v3143
        %v3145 = vrot.slane %v3140, %v3144
        %v3147 = vpack.c.b16 %v2582, %v2580
        %v3148 = vpack.c.b16 %v2954, %v2948
        %v3149 = vpack.c.b16 %v2955, %v2949
        %v3150 = vpack.c.b16 %v2710, %v2708
        %v3151 = vpack.c.b16 %v2956, %v2950
        %v3152 = vpack.c.b16 %v2957, %v2951
        %v3153 = vpack.c.b16 %v2838, %v2836
        %v3154 = vpack.c.b16 %v2958, %v2952
        %v3155 = vpack.c.b16 %v2959, %v2953
        %v3156 = vpack.c.b16 %v2586, %v2584
        %v3157 = vpack.c.b16 %v2966, %v2960
        %v3158 = vpack.c.b16 %v2967, %v2961
        %v3159 = vpack.c.b16 %v2714, %v2712
        %v3160 = vpack.c.b16 %v2968, %v2962
        %v3161 = vpack.c.b16 %v2969, %v2963
        %v3162 = vpack.c.b16 %v2842, %v2840
        %v3163 = vpack.c.b16 %v2970, %v2964
        %v3164 = vpack.c.b16 %v2971, %v2965
        %v3165 = vpack.c.b16 %v2590, %v2588
        %v3166 = vpack.c.b16 %v2978, %v2972
        %v3167 = vpack.c.b16 %v2979, %v2973
        %v3168 = vpack.c.b16 %v2718, %v2716
        %v3169 = vpack.c.b16 %v2980, %v2974
        %v3170 = vpack.c.b16 %v2981, %v2975
        %v3171 = vpack.c.b16 %v2846, %v2844
        %v3172 = vpack.c.b16 %v2982, %v2976
        %v3173 = vpack.c.b16 %v2983, %v2977
        %v3174 = vpack.c.b16 %v2594, %v2592
        %v3175 = vpack.c.b16 %v2990, %v2984
        %v3176 = vpack.c.b16 %v2991, %v2985
        %v3177 = vpack.c.b16 %v2722, %v2720
        %v3178 = vpack.c.b16 %v2992, %v2986
        %v3179 = vpack.c.b16 %v2993, %v2987
        %v3180 = vpack.c.b16 %v2850, %v2848
        %v3181 = vpack.c.b16 %v2994, %v2988
        %v3182 = vpack.c.b16 %v2995, %v2989
        %v3363 = vunpack.c.l.b16 %v2996
        %v3364 = vunpack.c.l.b16 %v2997
        %v3365 = vunpack.c.l.b16 %v2998
        %v3366 = vunpack.c.l.b16 %v2999
        %v3367 = vunpack.c.l.b16 %v3000
        %v3368 = vunpack.c.l.b16 %v3001
        %v3369 = vunpack.c.l.b16 %v3002
        %v3370 = vunpack.c.l.b16 %v3003
        %v3371 = vunpack.c.l.b16 %v3004
        %v3372 = vunpack.c.l.b16 %v3005
        %v3373 = vunpack.c.l.b16 %v3006
        %v3374 = vunpack.c.l.b16 %v3007
        %v3375 = vunpack.c.l.b16 %v3008
        %v3376 = vunpack.c.l.b16 %v3009
        %v3377 = vunpack.c.l.b16 %v3010
        %v3378 = vunpack.c.l.b16 %v3011
        %v3379 = vunpack.c.l.b16 %v3012
        %v3380 = vunpack.c.l.b16 %v3013
        %v3381 = vunpack.c.l.b16 %v3014
        %v3382 = vunpack.c.l.b16 %v3015
        %v3383 = vunpack.c.l.b16 %v3016
        %v3384 = vunpack.c.l.b16 %v3017
        %v3385 = vunpack.c.l.b16 %v3018
        %v3386 = vunpack.c.l.b16 %v3019
        %v3387 = vunpack.c.l.b16 %v3020
        %v3388 = vunpack.c.l.b16 %v3021
        %v3389 = vunpack.c.l.b16 %v3022
        %v3390 = vunpack.c.l.b16 %v3023
        %v3391 = vunpack.c.l.b16 %v3024
        %v3392 = vunpack.c.l.b16 %v3025
        %v3393 = vunpack.c.l.b16 %v3026
        %v3394 = vunpack.c.l.b16 %v3027
        %v3395 = vunpack.c.l.b16 %v3028
        %v3396 = vunpack.c.l.b16 %v3029
        %v3397 = vunpack.c.l.b16 %v3030
        %v3398 = vunpack.c.l.b16 %v3031
        %v3399 = vunpack.c.l.b16 %v3032
        %v3400 = vunpack.c.l.b16 %v3033
        %v3401 = vunpack.c.l.b16 %v3034
        %v3402 = vunpack.c.l.b16 %v3035
        %v3403 = vunpack.c.l.b16 %v3036
        %v3404 = vunpack.c.l.b16 %v3037
        %v3405 = vunpack.c.l.b16 %v3038
        %v3406 = vunpack.c.l.b16 %v3039
        %v3407 = vunpack.c.l.b16 %v3040
        %v3408 = vunpack.c.l.b16 %v3041
        %v3409 = vunpack.c.l.b16 %v3042
        %v3410 = vunpack.c.l.b16 %v3043
        %v3411 = vunpack.c.l.b16 %v3044
        %v3412 = vunpack.c.l.b16 %v3045
        %v3413 = vunpack.c.l.b16 %v3046
        %v3414 = vunpack.c.l.b16 %v3047
        %v3415 = vunpack.c.l.b16 %v3048
        %v3416 = vunpack.c.l.b16 %v3049
        %v3417 = vunpack.c.l.b16 %v3050
        %v3418 = vunpack.c.l.b16 %v3051
        %v3419 = vunpack.c.l.b16 %v3052
        %v3420 = vunpack.c.l.b16 %v3053
        %v3421 = vunpack.c.l.b16 %v3054
        %v3422 = vunpack.c.l.b16 %v3055
        %v3423 = vunpack.c.l.b16 %v3056
        %v3424 = vunpack.c.l.b16 %v3057
        %v3425 = vunpack.c.l.b16 %v3058
        %v3426 = vunpack.c.l.b16 %v3059
        %v3427 = vunpack.c.l.b16 %v3060
        %v3428 = vunpack.c.l.b16 %v3061
        %v3429 = vunpack.c.l.b16 %v3062
        %v3430 = vunpack.c.l.b16 %v3063
        %v3431 = vunpack.c.l.b16 %v3064
        %v3432 = vunpack.c.l.b16 %v3065
        %v3433 = vunpack.c.l.b16 %v3066
        %v3434 = vunpack.c.l.b16 %v3067
        %v3435 = vunpack.c.l.b16 %v3068
        %v3436 = vunpack.c.l.b16 %v3069
        %v3437 = vunpack.c.l.b16 %v3070
        %v3438 = vunpack.c.l.b16 %v3071
        %v3439 = vunpack.c.l.b16 %v3072
        %v3440 = vunpack.c.l.b16 %v3073
        %v3441 = vunpack.c.l.b16 %v3074
        %v3442 = vunpack.c.l.b16 %v3075
        %v3443 = vunpack.c.l.b16 %v3076
        %v3444 = vunpack.c.l.b16 %v3077
        %v3445 = vunpack.c.l.b16 %v3078
        %v3446 = vunpack.c.l.b16 %v3079
        %v3447 = vunpack.c.l.b16 %v3080
        %v3448 = vunpack.c.l.b16 %v3081
        %v3449 = vunpack.c.l.b16 %v3082
        %v3450 = vunpack.c.l.b16 %v3083
        %v3451 = vunpack.c.l.b16 %v3084
        %v3452 = vunpack.c.l.b16 %v3085
        %v3453 = vunpack.c.l.b16 %v3086
        %v3454 = vunpack.c.l.b16 %v3087
        %v3455 = vunpack.c.l.b16 %v3088
        %v3456 = vunpack.c.l.b16 %v3089
        %v3457 = vunpack.c.l.b16 %v3090
        %v3458 = vunpack.c.l.b16 %v3091
        %v3459 = vunpack.c.l.b16 %v3092
        %v3460 = vunpack.c.l.b16 %v3093
        %v3461 = vunpack.c.l.b16 %v3094
        %v3462 = vunpack.c.l.b16 %v3095
        %v3463 = vunpack.c.l.b16 %v3096
        %v3464 = vunpack.c.l.b16 %v3097
        %v3465 = vunpack.c.l.b16 %v3098
        %v3466 = vunpack.c.l.b16 %v3099
        %v3467 = vunpack.c.l.b16 %v3100
        %v3468 = vunpack.c.l.b16 %v3101
        %v3469 = vunpack.c.l.b16 %v3102
        %v3470 = vunpack.c.l.b16 %v3103
        %v3471 = vunpack.c.l.b16 %v3104
        %v3472 = vunpack.c.l.b16 %v3105
        %v3473 = vunpack.c.l.b16 %v3106
        %v3474 = vunpack.c.l.b16 %v3107
        %v3475 = vunpack.c.l.b16 %v3108
        %v3476 = vunpack.c.l.b16 %v3109
        %v3477 = vunpack.c.l.b16 %v3110
        %v3478 = vunpack.c.l.b16 %v3111
        %v3479 = vunpack.c.l.b16 %v3112
        %v3480 = vunpack.c.l.b16 %v3113
        %v3481 = vunpack.c.l.b16 %v3114
        %v3482 = vunpack.c.l.b16 %v3115
        %v3483 = vunpack.c.l.b16 %v3116
        %v3484 = vunpack.c.l.b16 %v3117
        %v3485 = vunpack.c.l.b16 %v3118
        %v3486 = vunpack.c.l.b16 %v3119
        %v3487 = vunpack.c.l.b16 %v3120
        %v3488 = vunpack.c.l.b16 %v3121
        %v3489 = vunpack.c.l.b16 %v3122
        %v3490 = vunpack.c.l.b16 %v3123
        %v3491 = vunpack.c.l.b16 %v3124
        %v3492 = vunpack.c.l.b16 %v3125
        %v3493 = vunpack.c.l.b16 %v3126
        %v3494 = vunpack.c.l.b16 %v3127
        %v3495 = vunpack.c.l.b16 %v3128
        %v3496 = vunpack.c.l.b16 %v3129
        %v3497 = vunpack.c.l.b16 %v3130
        %v3498 = vunpack.c.l.b16 %v3131
        %v3499 = vunpack.c.l.b16 %v3132
        %v3500 = vunpack.c.l.b16 %v3133
        %v3501 = vunpack.c.l.b16 %v3134
        %v3502 = vunpack.c.l.b16 %v3135
        %v3503 = vunpack.c.l.b16 %v3136
        %v3504 = vunpack.c.l.b16 %v3137
        %v3505 = vunpack.c.l.b16 %v3138
        %v3506 = vunpack.c.l.b16 %v3139
        %v3507 = vpack.c.b16 %v3364, %v3363
        %v3508 = vpack.c.b16 %v3366, %v3365
        %v3509 = vpack.c.b16 %v3368, %v3367
        %v3510 = vpack.c.b16 %v3370, %v3369
        %v3511 = vpack.c.b16 %v3372, %v3371
        %v3512 = vpack.c.b16 %v3374, %v3373
        %v3513 = vpack.c.b16 %v3376, %v3375
        %v3514 = vpack.c.b16 %v3378, %v3377
        %v3515 = vpack.c.b16 %v3380, %v3379
        %v3516 = vpack.c.b16 %v3382, %v3381
        %v3517 = vpack.c.b16 %v3384, %v3383
        %v3518 = vpack.c.b16 %v3386, %v3385
        %v3519 = vpack.c.b16 %v3388, %v3387
        %v3520 = vpack.c.b16 %v3390, %v3389
        %v3521 = vpack.c.b16 %v3392, %v3391
        %v3522 = vpack.c.b16 %v3394, %v3393
        %v3523 = vpack.c.b16 %v3396, %v3395
        %v3524 = vpack.c.b16 %v3398, %v3397
        %v3525 = vpack.c.b16 %v3400, %v3399
        %v3526 = vpack.c.b16 %v3402, %v3401
        %v3527 = vpack.c.b16 %v3404, %v3403
        %v3528 = vpack.c.b16 %v3406, %v3405
        %v3529 = vpack.c.b16 %v3408, %v3407
        %v3530 = vpack.c.b16 %v3410, %v3409
        %v3531 = vpack.c.b16 %v3412, %v3411
        %v3532 = vpack.c.b16 %v3414, %v3413
        %v3533 = vpack.c.b16 %v3416, %v3415
        %v3534 = vpack.c.b16 %v3418, %v3417
        %v3535 = vpack.c.b16 %v3420, %v3419
        %v3536 = vpack.c.b16 %v3422, %v3421
        %v3537 = vpack.c.b16 %v3424, %v3423
        %v3538 = vpack.c.b16 %v3426, %v3425
        %v3539 = vpack.c.b16 %v3428, %v3427
        %v3540 = vpack.c.b16 %v3430, %v3429
        %v3541 = vpack.c.b16 %v3432, %v3431
        %v3542 = vpack.c.b16 %v3434, %v3433
        %v3543 = vpack.c.b16 %v3436, %v3435
        %v3544 = vpack.c.b16 %v3438, %v3437
        %v3545 = vpack.c.b16 %v3440, %v3439
        %v3546 = vpack.c.b16 %v3442, %v3441
        %v3547 = vpack.c.b16 %v3444, %v3443
        %v3548 = vpack.c.b16 %v3446, %v3445
        %v3549 = vpack.c.b16 %v3448, %v3447
        %v3550 = vpack.c.b16 %v3450, %v3449
        %v3551 = vpack.c.b16 %v3452, %v3451
        %v3552 = vpack.c.b16 %v3454, %v3453
        %v3553 = vpack.c.b16 %v3456, %v3455
        %v3554 = vpack.c.b16 %v3458, %v3457
        %v3555 = vpack.c.b16 %v3460, %v3459
        %v3556 = vpack.c.b16 %v3462, %v3461
        %v3557 = vpack.c.b16 %v3464, %v3463
        %v3558 = vpack.c.b16 %v3466, %v3465
        %v3559 = vpack.c.b16 %v3468, %v3467
        %v3560 = vpack.c.b16 %v3470, %v3469
        %v3561 = vpack.c.b16 %v3472, %v3471
        %v3562 = vpack.c.b16 %v3474, %v3473
        %v3563 = vpack.c.b16 %v3476, %v3475
        %v3564 = vpack.c.b16 %v3478, %v3477
        %v3565 = vpack.c.b16 %v3480, %v3479
        %v3566 = vpack.c.b16 %v3482, %v3481
        %v3567 = vpack.c.b16 %v3484, %v3483
        %v3568 = vpack.c.b16 %v3486, %v3485
        %v3569 = vpack.c.b16 %v3488, %v3487
        %v3570 = vpack.c.b16 %v3490, %v3489
        %v3571 = vpack.c.b16 %v3492, %v3491
        %v3572 = vpack.c.b16 %v3494, %v3493
        %v3573 = vpack.c.b16 %v3496, %v3495
        %v3574 = vpack.c.b16 %v3498, %v3497
        %v3575 = vpack.c.b16 %v3500, %v3499
        %v3576 = vpack.c.b16 %v3502, %v3501
        %v3577 = vpack.c.b16 %v3504, %v3503
        %v3578 = vpack.c.b16 %v3506, %v3505
        %3651 = vmatprep.subr.bf16.mxu0 0
        %3652 = vmatpush1.bf16.msra.mxu0 %v3507
        %3653 = vmatprep.subr.bf16.mxu0 0
        %3654 = vmatpush1.bf16.msra.mxu0 %v3508
        %3655 = vmatprep.subr.bf16.mxu0 0
        %3656 = vmatpush1.bf16.msra.mxu0 %v3509
        %3657 = vmatprep.subr.bf16.mxu0 0
        %3658 = vmatpush1.bf16.msra.mxu0 %v3510
        %3659 = vmatprep.subr.bf16.mxu0 0
        %3660 = vmatpush1.bf16.msra.mxu0 %v3511
        %3661 = vmatprep.subr.bf16.mxu0 0
        %3662 = vmatpush1.bf16.msra.mxu0 %v3512
        %3663 = vmatprep.subr.bf16.mxu0 0
        %3664 = vmatpush1.bf16.msra.mxu0 %v3513
        %3665 = vmatprep.subr.bf16.mxu0 0
        %3666 = vmatpush1.bf16.msra.mxu0 %v3514
        %3667 = vmatprep.subr.bf16.mxu0 0
        %3668 = vmatpush1.bf16.msra.mxu0 %v3515
        %3669 = vmatprep.subr.bf16.mxu0 0
        %3670 = vmatpush1.bf16.msra.mxu0 %v3516
        %3671 = vmatprep.subr.bf16.mxu0 0
        %3672 = vmatpush1.bf16.msra.mxu0 %v3517
        %3673 = vmatprep.subr.bf16.mxu0 0
        %3674 = vmatpush1.bf16.msra.mxu0 %v3518
        %3675 = vmatprep.subr.bf16.mxu0 0
        %3676 = vmatpush1.bf16.msra.mxu0 %v3519
        %3677 = vmatprep.subr.bf16.mxu0 0
        %3678 = vmatpush1.bf16.msra.mxu0 %v3520
        %3679 = vmatprep.subr.bf16.mxu0 0
        %3680 = vmatpush1.bf16.msra.mxu0 %v3521
        %3681 = vmatprep.subr.bf16.mxu0 0
        %3682 = vmatpush1.bf16.msra.mxu0 %v3522
        %3683 = vmatprep.mubr.bf16.mxu0 %v3148
        %3684 = vmatmul.mubr.bf16.gmra.mrb[0].mxu0 %v3147
        %v3685 = vpop.f32.mrb[0].mxu0
        %v3686 = vadd.f32 %v3145, %v3685
        %v3687 = vpop.f32.mrb[0].mxu0
        %v3688 = vpop.f32.mrb[0].mxu0
        %v3689 = vadd.f32 %v3145, %v3688
        %v3690 = vpop.f32.mrb[0].mxu0
        %3691 = vmatprep.mubr.bf16.mxu0 %v3157
        %3692 = vmatmul.mubr.bf16.gmra.mrb[0].mxu0 %v3156
        %v3693 = vpop.f32.mrb[0].mxu0
        %v3694 = vadd.f32 %v3145, %v3693
        %v3695 = vpop.f32.mrb[0].mxu0
        %v3696 = vpop.f32.mrb[0].mxu0
        %v3697 = vadd.f32 %v3145, %v3696
        %v3698 = vpop.f32.mrb[0].mxu0
        %3699 = vmatprep.mubr.bf16.mxu0 %v3166
        %3700 = vmatmul.mubr.bf16.gmra.mrb[0].mxu0 %v3165
        %v3701 = vpop.f32.mrb[0].mxu0
        %v3702 = vadd.f32 %v3145, %v3701
        %v3703 = vpop.f32.mrb[0].mxu0
        %v3704 = vpop.f32.mrb[0].mxu0
        %v3705 = vadd.f32 %v3145, %v3704
        %v3706 = vpop.f32.mrb[0].mxu0
        %3707 = vmatprep.mubr.bf16.mxu0 %v3175
        %3708 = vmatmul.mubr.bf16.gmra.mrb[0].mxu0 %v3174
        %v3709 = vpop.f32.mrb[0].mxu0
        %v3710 = vadd.f32 %v3145, %v3709
        %v3711 = vpop.f32.mrb[0].mxu0
        %v3712 = vpop.f32.mrb[0].mxu0
        %v3713 = vadd.f32 %v3145, %v3712
        %v3714 = vpop.f32.mrb[0].mxu0
        %3715 = vdwg.mxu0
        %3716 = vmatprep.subr.bf16.mxu0 0
        %3717 = vmatpush1.bf16.msra.mxu0 %v3523
        %3718 = vmatprep.subr.bf16.mxu0 0
        %3719 = vmatpush1.bf16.msra.mxu0 %v3524
        %3720 = vmatprep.subr.bf16.mxu0 0
        %3721 = vmatpush1.bf16.msra.mxu0 %v3525
        %3722 = vmatprep.subr.bf16.mxu0 0
        %3723 = vmatpush1.bf16.msra.mxu0 %v3526
        %3724 = vmatprep.subr.bf16.mxu0 0
        %3725 = vmatpush1.bf16.msra.mxu0 %v3527
        %3726 = vmatprep.subr.bf16.mxu0 0
        %3727 = vmatpush1.bf16.msra.mxu0 %v3528
        %3728 = vmatprep.subr.bf16.mxu0 0
        %3729 = vmatpush1.bf16.msra.mxu0 %v3529
        %3730 = vmatprep.subr.bf16.mxu0 0
        %3731 = vmatpush1.bf16.msra.mxu0 %v3530
        %3732 = vmatprep.subr.bf16.mxu0 0
        %3733 = vmatpush1.bf16.msra.mxu0 %v3531
        %3734 = vmatprep.subr.bf16.mxu0 0
        %3735 = vmatpush1.bf16.msra.mxu0 %v3532
        %3736 = vmatprep.subr.bf16.mxu0 0
        %3737 = vmatpush1.bf16.msra.mxu0 %v3533
        %3738 = vmatprep.subr.bf16.mxu0 0
        %3739 = vmatpush1.bf16.msra.mxu0 %v3534
        %3740 = vmatprep.subr.bf16.mxu0 0
        %3741 = vmatpush1.bf16.msra.mxu0 %v3535
        %3742 = vmatprep.subr.bf16.mxu0 0
        %3743 = vmatpush1.bf16.msra.mxu0 %v3536
        %3744 = vmatprep.subr.bf16.mxu0 0
        %3745 = vmatpush1.bf16.msra.mxu0 %v3537
        %3746 = vmatprep.subr.bf16.mxu0 0
        %3747 = vmatpush1.bf16.msra.mxu0 %v3538
        %3748 = vmatprep.mubr.bf16.mxu0 %v3150
        %3749 = vmatmul.mubr.bf16.gmra.mrb[0].mxu0 %v3149
        %v3750 = vpop.f32.mrb[0].mxu0
        %v3751 = vadd.f32 %v3686, %v3750
        %v3752 = vpop.f32.mrb[0].mxu0
        %v3753 = vpop.f32.mrb[0].mxu0
        %v3754 = vadd.f32 %v3689, %v3753
        %v3755 = vpop.f32.mrb[0].mxu0
        %3756 = vmatprep.mubr.bf16.mxu0 %v3159
        %3757 = vmatmul.mubr.bf16.gmra.mrb[0].mxu0 %v3158
        %v3758 = vpop.f32.mrb[0].mxu0
        %v3759 = vadd.f32 %v3694, %v3758
        %v3760 = vpop.f32.mrb[0].mxu0
        %v3761 = vpop.f32.mrb[0].mxu0
        %v3762 = vadd.f32 %v3697, %v3761
        %v3763 = vpop.f32.mrb[0].mxu0
        %3764 = vmatprep.mubr.bf16.mxu0 %v3168
        %3765 = vmatmul.mubr.bf16.gmra.mrb[0].mxu0 %v3167
        %v3766 = vpop.f32.mrb[0].mxu0
        %v3767 = vadd.f32 %v3702, %v3766
        %v3768 = vpop.f32.mrb[0].mxu0
        %v3769 = vpop.f32.mrb[0].mxu0
        %v3770 = vadd.f32 %v3705, %v3769
        %v3771 = vpop.f32.mrb[0].mxu0
        %3772 = vmatprep.mubr.bf16.mxu0 %v3177
        %3773 = vmatmul.mubr.bf16.gmra.mrb[0].mxu0 %v3176
        %v3774 = vpop.f32.mrb[0].mxu0
        %v3775 = vadd.f32 %v3710, %v3774
        %v3776 = vpop.f32.mrb[0].mxu0
        %v3777 = vpop.f32.mrb[0].mxu0
        %v3778 = vadd.f32 %v3713, %v3777
        %v3779 = vpop.f32.mrb[0].mxu0
        %3780 = vdwg.mxu0
        %3781 = vmatprep.subr.bf16.mxu0 0
        %3782 = vmatpush1.bf16.msra.mxu0 %v3539
        %3783 = vmatprep.subr.bf16.mxu0 0
        %3784 = vmatpush1.bf16.msra.mxu0 %v3540
        %3785 = vmatprep.subr.bf16.mxu0 0
        %3786 = vmatpush1.bf16.msra.mxu0 %v3541
        %3787 = vmatprep.subr.bf16.mxu0 0
        %3788 = vmatpush1.bf16.msra.mxu0 %v3542
        %3789 = vmatprep.subr.bf16.mxu0 0
        %3790 = vmatpush1.bf16.msra.mxu0 %v3543
        %3791 = vmatprep.subr.bf16.mxu0 0
        %3792 = vmatpush1.bf16.msra.mxu0 %v3544
        %3793 = vmatprep.subr.bf16.mxu0 0
        %3794 = vmatpush1.bf16.msra.mxu0 %v3545
        %3795 = vmatprep.subr.bf16.mxu0 0
        %3796 = vmatpush1.bf16.msra.mxu0 %v3546
        %3797 = vmatprep.subr.bf16.mxu0 0
        %3798 = vmatpush1.bf16.msra.mxu0 %v3547
        %3799 = vmatprep.subr.bf16.mxu0 0
        %3800 = vmatpush1.bf16.msra.mxu0 %v3548
        %3801 = vmatprep.subr.bf16.mxu0 0
        %3802 = vmatpush1.bf16.msra.mxu0 %v3549
        %3803 = vmatprep.subr.bf16.mxu0 0
        %3804 = vmatpush1.bf16.msra.mxu0 %v3550
        %3805 = vmatprep.subr.bf16.mxu0 0
        %3806 = vmatpush1.bf16.msra.mxu0 %v3551
        %3807 = vmatprep.subr.bf16.mxu0 0
        %3808 = vmatpush1.bf16.msra.mxu0 %v3552
        %3809 = vmatprep.subr.bf16.mxu0 0
        %3810 = vmatpush1.bf16.msra.mxu0 %v3553
        %3811 = vmatprep.subr.bf16.mxu0 0
        %3812 = vmatpush1.bf16.msra.mxu0 %v3554
        %3813 = vmatprep.mubr.bf16.mxu0 %v3152
        %3814 = vmatmul.mubr.bf16.gmra.mrb[0].mxu0 %v3151
        %v3815 = vpop.f32.mrb[0].mxu0
        %v3816 = vadd.f32 %v3751, %v3815
        %v3817 = vpop.f32.mrb[0].mxu0
        %v3818 = vpop.f32.mrb[0].mxu0
        %v3819 = vadd.f32 %v3754, %v3818
        %v3820 = vpop.f32.mrb[0].mxu0
        %3821 = vmatprep.mubr.bf16.mxu0 %v3161
        %3822 = vmatmul.mubr.bf16.gmra.mrb[0].mxu0 %v3160
        %v3823 = vpop.f32.mrb[0].mxu0
        %v3824 = vadd.f32 %v3759, %v3823
        %v3825 = vpop.f32.mrb[0].mxu0
        %v3826 = vpop.f32.mrb[0].mxu0
        %v3827 = vadd.f32 %v3762, %v3826
        %v3828 = vpop.f32.mrb[0].mxu0
        %3829 = vmatprep.mubr.bf16.mxu0 %v3170
        %3830 = vmatmul.mubr.bf16.gmra.mrb[0].mxu0 %v3169
        %v3831 = vpop.f32.mrb[0].mxu0
        %v3832 = vadd.f32 %v3767, %v3831
        %v3833 = vpop.f32.mrb[0].mxu0
        %v3834 = vpop.f32.mrb[0].mxu0
        %v3835 = vadd.f32 %v3770, %v3834
        %v3836 = vpop.f32.mrb[0].mxu0
        %3837 = vmatprep.mubr.bf16.mxu0 %v3179
        %3838 = vmatmul.mubr.bf16.gmra.mrb[0].mxu0 %v3178
        %v3839 = vpop.f32.mrb[0].mxu0
        %v3840 = vadd.f32 %v3775, %v3839
        %v3841 = vpop.f32.mrb[0].mxu0
        %v3842 = vpop.f32.mrb[0].mxu0
        %v3843 = vadd.f32 %v3778, %v3842
        %v3844 = vpop.f32.mrb[0].mxu0
        %3845 = vdwg.mxu0
        %3846 = vmatprep.subr.bf16.mxu0 0
        %3847 = vmatpush1.bf16.msra.mxu0 %v3555
        %3848 = vmatprep.subr.bf16.mxu0 0
        %3849 = vmatpush1.bf16.msra.mxu0 %v3556
        %3850 = vmatprep.subr.bf16.mxu0 0
        %3851 = vmatpush1.bf16.msra.mxu0 %v3557
        %3852 = vmatprep.subr.bf16.mxu0 0
        %3853 = vmatpush1.bf16.msra.mxu0 %v3558
        %3854 = vmatprep.subr.bf16.mxu0 0
        %3855 = vmatpush1.bf16.msra.mxu0 %v3559
        %3856 = vmatprep.subr.bf16.mxu0 0
        %3857 = vmatpush1.bf16.msra.mxu0 %v3560
        %3858 = vmatprep.subr.bf16.mxu0 0
        %3859 = vmatpush1.bf16.msra.mxu0 %v3561
        %3860 = vmatprep.subr.bf16.mxu0 0
        %3861 = vmatpush1.bf16.msra.mxu0 %v3562
        %3862 = vmatprep.subr.bf16.mxu0 0
        %3863 = vmatpush1.bf16.msra.mxu0 %v3563
        %3864 = vmatprep.subr.bf16.mxu0 0
        %3865 = vmatpush1.bf16.msra.mxu0 %v3564
        %3866 = vmatprep.subr.bf16.mxu0 0
        %3867 = vmatpush1.bf16.msra.mxu0 %v3565
        %3868 = vmatprep.subr.bf16.mxu0 0
        %3869 = vmatpush1.bf16.msra.mxu0 %v3566
        %3870 = vmatprep.subr.bf16.mxu0 0
        %3871 = vmatpush1.bf16.msra.mxu0 %v3567
        %3872 = vmatprep.subr.bf16.mxu0 0
        %3873 = vmatpush1.bf16.msra.mxu0 %v3568
        %3874 = vmatprep.subr.bf16.mxu0 0
        %3875 = vmatpush1.bf16.msra.mxu0 %v3569
        %3876 = vmatprep.subr.bf16.mxu0 0
        %3877 = vmatpush1.bf16.msra.mxu0 %v3570
        %3878 = vmatprep.mubr.bf16.mxu0 %v3154
        %3879 = vmatmul.mubr.bf16.gmra.mrb[0].mxu0 %v3153
        %v3880 = vpop.f32.mrb[0].mxu0
        %v3881 = vadd.f32 %v3816, %v3880
        %v3882 = vpop.f32.mrb[0].mxu0
        %v3883 = vpop.f32.mrb[0].mxu0
        %v3884 = vadd.f32 %v3819, %v3883
        %v3885 = vpop.f32.mrb[0].mxu0
        %3886 = vmatprep.mubr.bf16.mxu0 %v3163
        %3887 = vmatmul.mubr.bf16.gmra.mrb[0].mxu0 %v3162
        %v3888 = vpop.f32.mrb[0].mxu0
        %v3889 = vadd.f32 %v3824, %v3888
        %v3890 = vpop.f32.mrb[0].mxu0
        %v3891 = vpop.f32.mrb[0].mxu0
        %v3892 = vadd.f32 %v3827, %v3891
        %v3893 = vpop.f32.mrb[0].mxu0
        %3894 = vmatprep.mubr.bf16.mxu0 %v3172
        %3895 = vmatmul.mubr.bf16.gmra.mrb[0].mxu0 %v3171
        %v3896 = vpop.f32.mrb[0].mxu0
        %v3897 = vadd.f32 %v3832, %v3896
        %v3898 = vpop.f32.mrb[0].mxu0
        %v3899 = vpop.f32.mrb[0].mxu0
        %v3900 = vadd.f32 %v3835, %v3899
        %v3901 = vpop.f32.mrb[0].mxu0
        %3902 = vmatprep.mubr.bf16.mxu0 %v3181
        %3903 = vmatmul.mubr.bf16.gmra.mrb[0].mxu0 %v3180
        %v3904 = vpop.f32.mrb[0].mxu0
        %v3905 = vadd.f32 %v3840, %v3904
        %v3906 = vpop.f32.mrb[0].mxu0
        %v3907 = vpop.f32.mrb[0].mxu0
        %v3908 = vadd.f32 %v3843, %v3907
        %v3909 = vpop.f32.mrb[0].mxu0
        %3910 = vdwg.mxu0
        %3911 = vmatprep.subr.bf16.mxu0 0
        %3912 = vmatpush1.bf16.msra.mxu0 %v3571
        %3913 = vmatprep.subr.bf16.mxu0 0
        %3914 = vmatpush1.bf16.msra.mxu0 %v3572
        %3915 = vmatprep.subr.bf16.mxu0 0
        %3916 = vmatpush1.bf16.msra.mxu0 %v3573
        %3917 = vmatprep.subr.bf16.mxu0 0
        %3918 = vmatpush1.bf16.msra.mxu0 %v3574
        %3919 = vmatprep.subr.bf16.mxu0 0
        %3920 = vmatpush1.bf16.msra.mxu0 %v3575
        %3921 = vmatprep.subr.bf16.mxu0 0
        %3922 = vmatpush1.bf16.msra.mxu0 %v3576
        %3923 = vmatprep.subr.bf16.mxu0 0
        %3924 = vmatpush1.bf16.msra.mxu0 %v3577
        %3925 = vmatprep.subr.bf16.mxu0 0
        %3926 = vmatpush1.bf16.msra.mxu0 %v3578
        %3927 = vmatprep.subr.bf16.mxu0 0
        %3928 = vmatpush1.bf16.msra.mxu0 0
        %3929 = vmatprep.subr.bf16.mxu0 0
        %3930 = vmatpush1.bf16.msra.mxu0 0
        %3931 = vmatprep.subr.bf16.mxu0 0
        %3932 = vmatpush1.bf16.msra.mxu0 0
        %3933 = vmatprep.subr.bf16.mxu0 0
        %3934 = vmatpush1.bf16.msra.mxu0 0
        %3935 = vmatprep.subr.bf16.mxu0 0
        %3936 = vmatpush1.bf16.msra.mxu0 0
        %3937 = vmatprep.subr.bf16.mxu0 0
        %3938 = vmatpush1.bf16.msra.mxu0 0
        %3939 = vmatprep.subr.bf16.mxu0 0
        %3940 = vmatpush1.bf16.msra.mxu0 0
        %3941 = vmatprep.subr.bf16.mxu0 0
        %3942 = vmatpush1.bf16.msra.mxu0 0
        %3943 = vmatprep.mubr.bf16.mxu0 0
        %3944 = vmatmul.mubr.bf16.gmra.mrb[0].mxu0 %v3155
        %v3945 = vpop.f32.mrb[0].mxu0
        %v3946 = vadd.f32 %v3881, %v3945
        %v3947 = vpop.f32.mrb[0].mxu0
        %v3948 = vpop.f32.mrb[0].mxu0
        %v3949 = vadd.f32 %v3884, %v3948
        %v3950 = vpop.f32.mrb[0].mxu0
        %3951 = vmatprep.mubr.bf16.mxu0 0
        %3952 = vmatmul.mubr.bf16.gmra.mrb[0].mxu0 %v3164
        %v3953 = vpop.f32.mrb[0].mxu0
        %v3954 = vadd.f32 %v3889, %v3953
        %v3955 = vpop.f32.mrb[0].mxu0
        %v3956 = vpop.f32.mrb[0].mxu0
        %v3957 = vadd.f32 %v3892, %v3956
        %v3958 = vpop.f32.mrb[0].mxu0
        %3959 = vmatprep.mubr.bf16.mxu0 0
        %3960 = vmatmul.mubr.bf16.gmra.mrb[0].mxu0 %v3173
        %v3961 = vpop.f32.mrb[0].mxu0
        %v3962 = vadd.f32 %v3897, %v3961
        %v3963 = vpop.f32.mrb[0].mxu0
        %v3964 = vpop.f32.mrb[0].mxu0
        %v3965 = vadd.f32 %v3900, %v3964
        %v3966 = vpop.f32.mrb[0].mxu0
        %3967 = vmatprep.mubr.bf16.mxu0 0
        %3968 = vmatmul.mubr.bf16.gmra.mrb[0].mxu0 %v3182
        %v3969 = vpop.f32.mrb[0].mxu0
        %v3970 = vadd.f32 %v3905, %v3969
        %v3971 = vpop.f32.mrb[0].mxu0
        %v3972 = vpop.f32.mrb[0].mxu0
        %v3973 = vadd.f32 %v3908, %v3972
        %v3974 = vpop.f32.mrb[0].mxu0
        %3975 = vdwg.mxu0
        %v3976 = vld [vmem:[%s845] sm:$0xf]
        %v3977 = vld [vmem:[%s845 + $0x8] sm:$0xf]
        %v3978 = vld [vmem:[%s845 + $0x10] sm:$0xf]
        %v3979 = vld [vmem:[%s845 + $0x18] sm:$0xf]
        %v3980 = vld [vmem:[%s845 + $0x20] sm:$0xf]
        %v3981 = vld [vmem:[%s845 + $0x28] sm:$0xf]
        %v3982 = vld [vmem:[%s845 + $0x30] sm:$0xf]
        %v3983 = vld [vmem:[%s845 + $0x38] sm:$0xf]
        %v3984 = vld [vmem:[#allocation14] sm:$0xf]
        %v3985 = vld [vmem:[#allocation14 + $0x4] sm:$0xf]
        %v3986 = vld [vmem:[#allocation14 + $0x8] sm:$0xf]
        %v3987 = vld [vmem:[#allocation14 + $0xc] sm:$0xf]
        %v3988 = vld [vmem:[#allocation14 + $0x10] sm:$0xf]
        %v3989 = vld [vmem:[#allocation14 + $0x14] sm:$0xf]
        %v3990 = vld [vmem:[#allocation14 + $0x18] sm:$0xf]
        %v3991 = vld [vmem:[#allocation14 + $0x1c] sm:$0xf]
        %v3992 = vld [vmem:[#allocation14 + $0x20] sm:$0xf]
        %v3993 = vld [vmem:[#allocation14 + $0x24] sm:$0xf]
        %v3994 = vld [vmem:[#allocation14 + $0x28] sm:$0xf]
        %v3995 = vld [vmem:[#allocation14 + $0x2c] sm:$0xf]
        %v3996 = vld [vmem:[#allocation14 + $0x30] sm:$0xf]
        %v3997 = vld [vmem:[#allocation14 + $0x34] sm:$0xf]
        %v3998 = vld [vmem:[#allocation14 + $0x38] sm:$0xf]
        %v3999 = vld [vmem:[#allocation14 + $0x3c] sm:$0xf]
        %v4000 = vld [vmem:[#allocation16] sm:$0x1]
        %v4002 = vlaneseq
        %v4003 = vshrl.u32 %v4002, 7
        %v4004 = vsub.s32 0, %v4003
        %v4005 = vrot.slane %v4000, %v4004
        %v4015 = vunpack.c.l.b16 %v3976
        %v4016 = vunpack.c.l.b16 %v3977
        %v4017 = vunpack.c.l.b16 %v3978
        %v4018 = vunpack.c.l.b16 %v3979
        %v4019 = vunpack.c.l.b16 %v3980
        %v4020 = vunpack.c.l.b16 %v3981
        %v4021 = vunpack.c.l.b16 %v3982
        %v4022 = vunpack.c.l.b16 %v3983
        %v4023 = vpack.c.b16 %v4016, %v4015
        %v4024 = vpack.c.b16 %v4018, %v4017
        %v4025 = vpack.c.b16 %v4020, %v4019
        %v4026 = vpack.c.b16 %v4022, %v4021
        %v4047 = vunpack.c.l.b16 %v3984
        %v4048 = vunpack.c.l.b16 %v3985
        %v4049 = vunpack.c.l.b16 %v3986
        %v4050 = vunpack.c.l.b16 %v3987
        %v4051 = vunpack.c.l.b16 %v3988
        %v4052 = vunpack.c.l.b16 %v3989
        %v4053 = vunpack.c.l.b16 %v3990
        %v4054 = vunpack.c.l.b16 %v3991
        %v4055 = vunpack.c.l.b16 %v3992
        %v4056 = vunpack.c.l.b16 %v3993
        %v4057 = vunpack.c.l.b16 %v3994
        %v4058 = vunpack.c.l.b16 %v3995
        %v4059 = vunpack.c.l.b16 %v3996
        %v4060 = vunpack.c.l.b16 %v3997
        %v4061 = vunpack.c.l.b16 %v3998
        %v4062 = vunpack.c.l.b16 %v3999
        %v4063 = vpack.c.b16 %v4048, %v4047
        %v4064 = vpack.c.b16 %v4050, %v4049
        %v4065 = vpack.c.b16 %v4052, %v4051
        %v4066 = vpack.c.b16 %v4054, %v4053
        %v4067 = vpack.c.b16 %v4056, %v4055
        %v4068 = vpack.c.b16 %v4058, %v4057
        %v4069 = vpack.c.b16 %v4060, %v4059
        %v4070 = vpack.c.b16 %v4062, %v4061
        %4079 = vmatprep.subr.bf16.mxu0 0
        %4080 = vmatpush1.bf16.msra.mxu0 %v4063
        %4081 = vmatprep.subr.bf16.mxu0 0
        %4082 = vmatpush1.bf16.msra.mxu0 %v4064
        %4083 = vmatprep.subr.bf16.mxu0 0
        %4084 = vmatpush1.bf16.msra.mxu0 %v4065
        %4085 = vmatprep.subr.bf16.mxu0 0
        %4086 = vmatpush1.bf16.msra.mxu0 %v4066
        %4087 = vmatprep.subr.bf16.mxu0 0
        %4088 = vmatpush1.bf16.msra.mxu0 %v4067
        %4089 = vmatprep.subr.bf16.mxu0 0
        %4090 = vmatpush1.bf16.msra.mxu0 %v4068
        %4091 = vmatprep.subr.bf16.mxu0 0
        %4092 = vmatpush1.bf16.msra.mxu0 %v4069
        %4093 = vmatprep.subr.bf16.mxu0 0
        %4094 = vmatpush1.bf16.msra.mxu0 %v4070
        %4095 = vmatprep.subr.bf16.mxu0 0
        %4096 = vmatpush1.bf16.msra.mxu0 0
        %4097 = vmatprep.subr.bf16.mxu0 0
        %4098 = vmatpush1.bf16.msra.mxu0 0
        %4099 = vmatprep.subr.bf16.mxu0 0
        %4100 = vmatpush1.bf16.msra.mxu0 0
        %4101 = vmatprep.subr.bf16.mxu0 0
        %4102 = vmatpush1.bf16.msra.mxu0 0
        %4103 = vmatprep.subr.bf16.mxu0 0
        %4104 = vmatpush1.bf16.msra.mxu0 0
        %4105 = vmatprep.subr.bf16.mxu0 0
        %4106 = vmatpush1.bf16.msra.mxu0 0
        %4107 = vmatprep.subr.bf16.mxu0 0
        %4108 = vmatpush1.bf16.msra.mxu0 0
        %4109 = vmatprep.subr.bf16.mxu0 0
        %4110 = vmatpush1.bf16.msra.mxu0 0
        %4111 = vmatprep.mubr.bf16.mxu0 0
        %4112 = vmatmul.mubr.bf16.gmra.mrb[0].mxu0 %v4023
        %v4113 = vpop.f32.mrb[0].mxu0
        %v4114 = vadd.f32 %v4005, %v4113
        %v4115 = vpop.f32.mrb[0].mxu0
        %v4116 = vpop.f32.mrb[0].mxu0
        %v4117 = vadd.f32 %v4005, %v4116
        %v4118 = vpop.f32.mrb[0].mxu0
        %4119 = vmatprep.mubr.bf16.mxu0 0
        %4120 = vmatmul.mubr.bf16.gmra.mrb[0].mxu0 %v4024
        %v4121 = vpop.f32.mrb[0].mxu0
        %v4122 = vadd.f32 %v4005, %v4121
        %v4123 = vpop.f32.mrb[0].mxu0
        %v4124 = vpop.f32.mrb[0].mxu0
        %v4125 = vadd.f32 %v4005, %v4124
        %v4126 = vpop.f32.mrb[0].mxu0
        %4127 = vmatprep.mubr.bf16.mxu0 0
        %4128 = vmatmul.mubr.bf16.gmra.mrb[0].mxu0 %v4025
        %v4129 = vpop.f32.mrb[0].mxu0
        %v4130 = vadd.f32 %v4005, %v4129
        %v4131 = vpop.f32.mrb[0].mxu0
        %v4132 = vpop.f32.mrb[0].mxu0
        %v4133 = vadd.f32 %v4005, %v4132
        %v4134 = vpop.f32.mrb[0].mxu0
        %4135 = vmatprep.mubr.bf16.mxu0 0
        %4136 = vmatmul.mubr.bf16.gmra.mrb[0].mxu0 %v4026
        %v4137 = vpop.f32.mrb[0].mxu0
        %v4138 = vadd.f32 %v4005, %v4137
        %v4139 = vpop.f32.mrb[0].mxu0
        %v4140 = vpop.f32.mrb[0].mxu0
        %v4141 = vadd.f32 %v4005, %v4140
        %v4142 = vpop.f32.mrb[0].mxu0
        %4143 = vdwg.mxu0
        %v4144 = vadd.f32 %v3946, %v4114
        %v4145 = vadd.f32 %v3949, %v4117
        %v4146 = vadd.f32 %v3954, %v4122
        %v4147 = vadd.f32 %v3957, %v4125
        %v4148 = vadd.f32 %v3962, %v4130
        %v4149 = vadd.f32 %v3965, %v4133
        %v4150 = vadd.f32 %v3970, %v4138
        %v4151 = vadd.f32 %v3973, %v4141
        %v4152 = vmax.f32 %v4144, 0.0
        %v4153 = vmax.f32 %v4145, 0.0
        %v4154 = vmax.f32 %v4146, 0.0
        %v4155 = vmax.f32 %v4147, 0.0
        %v4156 = vmax.f32 %v4148, 0.0
        %v4157 = vmax.f32 %v4149, 0.0
        %v4158 = vmax.f32 %v4150, 0.0
        %v4159 = vmax.f32 %v4151, 0.0
        %4160 = vst [vmem:[%s377] sm:$0xff] %v4152
        %4161 = vst [vmem:[%s377 + $0x8] sm:$0xff] %v4153
        %4162 = vst [vmem:[%s377 + $0x10] sm:$0xff] %v4154
        %4163 = vst [vmem:[%s377 + $0x18] sm:$0xff] %v4155
        %4164 = vst [vmem:[%s377 + $0x20] sm:$0xff] %v4156
        %4165 = vst [vmem:[%s377 + $0x28] sm:$0xff] %v4157
        %4166 = vst [vmem:[%s377 + $0x30] sm:$0xff] %v4158
        %4167 = vst [vmem:[%s377 + $0x38] sm:$0xff] %v4159
        %s4168 = sand.u32 %s187, 1
        %s4169 = scalar_lea.sflag [#allocation7], %s4168
        %s4170 = sand.u32 %s187, 1
        %s4171 = smul.addr %s4170, 64
        %s4172 = scalar_lea.vmem [#allocation17], %s4171
        // Predicated region
        $region77: #{tpu_custom_call.1} parent=47 // pred_check
          %p4173 = pneg %p197
        $region78: #{tpu_custom_call.1} parent=47 // pred_check_branch
          %4175 = sbr.rel (%p4173) target = $region80
        $region79: #{tpu_custom_call.1} parent=47 // pred_region
          %s4177 = ssub.s32 1024, 1024
          %4178 = vsyncadd %s4169, %s4177
          %s4179 = smul.addr %s27, 8
          %s4180 = smul.addr %s4179, 128
          %s4181 = scalar_lea.hbm %s7, %s4180
          %s4182 = sshll.u32 %s4172, 4
          %s4183 = int_to_ptr.vmem [resolvable:$true] %s4182
          %4188 = dma.vmem_to_hbm [thread:$0]  %s4183, 1024, %s4181, %s4169, 128, 128, 8
        $region80: #{tpu_custom_call.1} parent=47 // pred_fallthru
          _
      $region48: #{tpu_custom_call.1} parent=5 // pred_fallthru
        _
      %p4189 = scmp.le.s32.totalorder 2, %s22
      // Predicated region
      $region81: #{tpu_custom_call.1} parent=5 // pred_check
        %p4190 = pneg %p4189
      $region82: #{tpu_custom_call.1} parent=5 // pred_check_branch
        %4192 = sbr.rel (%p4190) target = $region84
      $region83: #{tpu_custom_call.1} parent=5 // pred_region
        %s4193 = ssub.s32 %s22, 2
        // Predicated region
        $region85: #{tpu_custom_call.1} parent=83 // pred_check
          %p4194 = pneg %p203
        $region86: #{tpu_custom_call.1} parent=83 // pred_check_branch
          %4196 = sbr.rel (%p4194) target = $region88
        $region87: #{tpu_custom_call.1} parent=83 // pred_region
          %s4197 = sand.u32 %s188, 1
          %s4198 = scalar_lea.sflag [#allocation7], %s4197
          %s4199 = sand.u32 %s188, 1
          %s4200 = smul.addr %s4199, 64
          %s4201 = scalar_lea.vmem [#allocation17], %s4200
          %4202 = dma.done %s4198, 1024
        $region88: #{tpu_custom_call.1} parent=83 // pred_fallthru
          _
      $region84: #{tpu_custom_call.1} parent=5 // pred_fallthru
        _
    $region6: #{tpu_custom_call.1} parent=1 // loop_footer
      %s26 = sadd.s32 1, %s22
    $region7: #{tpu_custom_call.1} parent=1 // loop_footer_branch
      %21 = sbr.rel target = $region3
    $region8: #{tpu_custom_call.1} parent=1 // loop_exit
      _
    %4203 = vsyncpa [#allocation6], 1
    %s4204 = scalar_lea.sflag [#allocation6], 1
    %4205 = vsyncpa %s4204, 1
    %4206 = vsyncpa [#allocation9], 1
    %4207 = vsyncpa [#allocation12], 1
    %4208 = vsyncpa [#allocation15], 1
    %4209 = vsyncpa [#allocation7], 1
    %s4210 = scalar_lea.sflag [#allocation7], 1
    %4211 = vsyncpa %s4210, 1

</llo_original>
